<compile_context>
chip_gen: v5e
topology: v5e:2x2
jax: 0.10.0
libtpu: 0.0.40
codegen_flags: <defaults>
</compile_context>

<pallas_src>
import functools
import numpy as np
import jax
import jax.numpy as jnp
from jax.experimental import pallas as pl
from jax.experimental.pallas import tpu as pltpu

_HALF_PI = float(np.pi / 2.0)


def _ffmlp_kernel(num_fourier_layers, use_bf16, dot_precision, x_ref, *refs):
    """Whole net on one (features, tile_m) column block.

    refs = (w_0, b_0), (w_1, b_1), ..., (w_final, b_final), o_ref
    Fourier-layer weights are (width, K) with rows duplicated [W; W]; biases are
    (width, 1) = [b; b + pi/2], so one dot + one sin produces [sin(z); cos(z)].
    All columns are independent (no reduction over tile_m) -> ragged last block
    is safe.
    """
    o_ref = refs[-1]
    prm = refs[:-1]

    act = x_ref[...]                                   # (in_features, tm) f32

    for layer in range(num_fourier_layers):
        w = prm[2 * layer][...]                        # (width, K)
        b = prm[2 * layer + 1][...]                    # (width, 1)
        rhs = act
        if use_bf16 and layer > 0:                     # keep layer-0 phases in f32
            rhs = rhs.astype(jnp.bfloat16)
        z = jnp.dot(w, rhs, preferred_element_type=jnp.float32,
                    precision=dot_precision) + b       # (width, tm) f32
        # rows [:half] hold z, rows [half:] hold z + pi/2 -> one sin pass gives
        # the concatenated [sin(z); cos(z)] activation directly.
        act = jnp.sin(z)

    wf = prm[-2][...]                                  # (out_features, width)
    bf = prm[-1][...]                                  # (out_features, 1)
    if use_bf16:
        act = act.astype(jnp.bfloat16)
    out = jnp.dot(wf, act, preferred_element_type=jnp.float32,
                  precision=dot_precision) + bf        # (out_features, tm)
    o_ref[...] = out.astype(o_ref.dtype)


def _round_up(v, m):
    return ((v + m - 1) // m) * m


def _pick_tile_m(n, requested):
    """Lane tile (multiple of 128) for the flattened-coordinate axis.

    Large tiles amortize per-grid-step overhead (v5e/v6e); for mid-size n we use
    an even number of near-equal blocks so ("parallel",) keeps both v7x
    TensorCores busy instead of a ragged 2-step split (e.g. 1024+476).
    """
    requested = max(128, (int(requested) // 128) * 128)      # multiple of 128
    if n <= requested:
        return max(128, _round_up(n, 128))                   # single step
    steps = pl.cdiv(n, requested)
    steps = max(2, steps + (steps % 2))                      # even step count
    return max(128, min(requested, _round_up(pl.cdiv(n, steps), 128)))


def ffmlp_forward(coords, params, *, feats_scale=30.0, tile_m=1024, use_bf16=False):
    """coords: (..., in_features) -> (..., out_features); whole net in one kernel."""
    in_features = coords.shape[-1]
    lead = coords.shape[:-1]
    x = coords.reshape(-1, in_features).astype(jnp.float32)
    n = x.shape[0]
    # Feature-major: coordinate rows on the lane axis.  The wrapper-side
    # transposes touch only (n, in=2) and (out=1, n) tensors (review item 11).
    x_t = x.T                                                # (in_features, n)

    half = params["w0"].shape[0]
    out_features = params["wf"].shape[0]
    num_fourier_layers = 1 + len(params["hidden"])

    # ---- host-side weight prep (done once; weights stay resident in VMEM) ----
    w_dtype = jnp.bfloat16 if use_bf16 else jnp.float32
    w0 = params["w0"].astype(jnp.float32) * feats_scale      # fold feats_scale
    flat = [
        jnp.concatenate([w0, w0], axis=0),                   # (width, in_features)
        jnp.concatenate([jnp.zeros((half, 1), jnp.float32),
                         jnp.full((half, 1), _HALF_PI, jnp.float32)], axis=0),
    ]
    for w, b in params["hidden"]:
        w = w.astype(jnp.float32)
        b = b.astype(jnp.float32).reshape(half, 1)
        flat += [
            jnp.concatenate([w, w], axis=0).astype(w_dtype),         # (width, width)
            jnp.concatenate([b, b + _HALF_PI], axis=0),              # (width, 1)
        ]
    flat += [
        params["wf"].astype(w_dtype),                                # (out, width)
        params["bf"].astype(jnp.float32).reshape(out_features, 1),   # (out, 1)
    ]

    tile = _pick_tile_m(n, tile_m)
    grid = (pl.cdiv(n, tile),)       # ragged last block: partial writeback is masked

    def resident(arr):               # whole (2-D) array in VMEM, same block every step
        return pl.BlockSpec(arr.shape, lambda i: (0, 0))

    in_specs = [pl.BlockSpec((in_features, tile), lambda i: (0, i))]
    in_specs += [resident(p) for p in flat]
    out_spec = pl.BlockSpec((out_features, tile), lambda i: (0, i))

    dot_precision = None if use_bf16 else jax.lax.Precision.HIGHEST
    kernel = functools.partial(_ffmlp_kernel, num_fourier_layers, use_bf16,
                               dot_precision)

    out_t = pl.pallas_call(
        kernel,
        out_shape=jax.ShapeDtypeStruct((out_features, n), jnp.float32),
        grid=grid,
        in_specs=in_specs,
        out_specs=out_spec,
        compiler_params=pltpu.CompilerParams(
            dimension_semantics=("parallel",)),
    )(x_t, *flat)

    if out_features == 1:
        # (1, n) is already in n-major order; no transpose needed.
        return out_t.reshape(*lead, 1)
    return out_t.T.reshape(*lead, out_features)


def init_params(key, in_features, out_features, width, num_hidden_layers,
                init_sigma=1.0, final_sigma=0.01, eps=1e-4,
                first_layer_init_sigma=None):
    """Synthetic init mirroring the module's __init__. Weights are (out, in)."""
    half = width // 2
    keys = jax.random.split(key, 1 + 2 * num_hidden_layers + 2)
    sigma0 = (first_layer_init_sigma if first_layer_init_sigma is not None
              else 1.0 / in_features)
    # first layer: FourierFeatureMap, first_layer_trainable=False -> no bias
    w0 = sigma0 * jax.random.normal(keys[0], (half, in_features), jnp.float32)
    hidden = []
    ki = 1
    for _ in range(num_hidden_layers):
        w = init_sigma * jax.random.normal(keys[ki], (half, width), jnp.float32)
        b = init_sigma * jax.random.normal(keys[ki + 1], (half, 1), jnp.float32)
        ki += 2
        hidden.append((w, b))
    wf = final_sigma * jax.random.normal(keys[ki], (out_features, width), jnp.float32)
    bf = eps * jax.random.normal(keys[ki + 1], (out_features, 1), jnp.float32)
    return {"w0": w0, "hidden": hidden, "wf": wf, "bf": bf}


def _reference_forward_np(coords, params, feats_scale):
    """float64 numpy reference of the same net (row-major), precision-unambiguous."""
    in_features = coords.shape[-1]
    h = np.asarray(coords, np.float64).reshape(-1, in_features)
    w0 = np.asarray(params["w0"], np.float64)
    z = feats_scale * (h @ w0.T)
    h = np.concatenate([np.sin(z), np.cos(z)], axis=-1)
    for w, b in params["hidden"]:
        z = h @ np.asarray(w, np.float64).T + np.asarray(b, np.float64).T
        h = np.concatenate([np.sin(z), np.cos(z)], axis=-1)
    out = (h @ np.asarray(params["wf"], np.float64).T
           + np.asarray(params["bf"], np.float64).T)
    return out.reshape(*coords.shape[:-1], out.shape[-1])


if __name__ == "__main__":
    key = jax.random.PRNGKey(0)
    in_features, out_features = 2, 1
    width, num_hidden_layers = 32, 2
    first_layer_feats_scale = 30.0

    kp, _ = jax.random.split(key)
    params = init_params(kp, in_features, out_features, width, num_hidden_layers)

    # coordinate mesh like mesh.get_coord_mesh(): (H, W, in_features)
    H = W = 16
    ys = jnp.linspace(-1.0, 1.0, H)
    xs = jnp.linspace(-1.0, 1.0, W)
    mesh = jnp.stack(jnp.meshgrid(ys, xs, indexing="ij"), axis=-1)  # (16, 16, 2)

    # tile_m=128 -> 2 balanced grid steps of 128 columns (exercises the grid).
    out = ffmlp_forward(mesh, params, feats_scale=first_layer_feats_scale,
                        tile_m=128)
    out = jax.block_until_ready(out)
    assert out.shape == (H, W, out_features), out.shape

    ref = _reference_forward_np(np.asarray(mesh), params, first_layer_feats_scale)
    np.testing.assert_allclose(np.asarray(out), ref, rtol=1e-4, atol=1e-4)

    print("KERNEL_OK")
</pallas_src>

<mosaic_0001>
module attributes {stable_mosaic.version = 11 : i64} {
  func.func @_ffmlp_kernel(%arg0: i32, %arg1: memref<2x128xf32, #tpu.memory_space<vmem>>, %arg2: memref<32x2xf32, #tpu.memory_space<vmem>>, %arg3: memref<32x1xf32, #tpu.memory_space<vmem>>, %arg4: memref<32x32xf32, #tpu.memory_space<vmem>>, %arg5: memref<32x1xf32, #tpu.memory_space<vmem>>, %arg6: memref<32x32xf32, #tpu.memory_space<vmem>>, %arg7: memref<32x1xf32, #tpu.memory_space<vmem>>, %arg8: memref<1x32xf32, #tpu.memory_space<vmem>>, %arg9: memref<1x1xf32, #tpu.memory_space<vmem>>, %arg10: memref<1x128xf32, #tpu.memory_space<vmem>>) attributes {dimension_semantics = [#tpu.dimension_semantics<parallel>], iteration_bounds = array<i64: 2>, scalar_prefetch = 0 : i64, scratch_operands = 0 : i64, tpu.core_type = #tpu.core_type<tc>, window_params = [{transform_indices = @transform_0, window_bounds = array<i64: 2, 128>}, {pipeline_mode = #tpu.pipeline_mode<synchronous>, transform_indices = @transform_1, window_bounds = array<i64: 32, 2>}, {pipeline_mode = #tpu.pipeline_mode<synchronous>, transform_indices = @transform_2, window_bounds = array<i64: 32, 1>}, {pipeline_mode = #tpu.pipeline_mode<synchronous>, transform_indices = @transform_3, window_bounds = array<i64: 32, 32>}, {pipeline_mode = #tpu.pipeline_mode<synchronous>, transform_indices = @transform_4, window_bounds = array<i64: 32, 1>}, {pipeline_mode = #tpu.pipeline_mode<synchronous>, transform_indices = @transform_5, window_bounds = array<i64: 32, 32>}, {pipeline_mode = #tpu.pipeline_mode<synchronous>, transform_indices = @transform_6, window_bounds = array<i64: 32, 1>}, {pipeline_mode = #tpu.pipeline_mode<synchronous>, transform_indices = @transform_7, window_bounds = array<i64: 1, 32>}, {pipeline_mode = #tpu.pipeline_mode<synchronous>, transform_indices = @transform_8, window_bounds = array<i64: 1, 1>}, {transform_indices = @transform_9, window_bounds = array<i64: 1, 128>}]} {
    %c0 = arith.constant 0 : index
    %c0_0 = arith.constant 0 : index
    %0 = vector.load %arg1[%c0, %c0_0] : memref<2x128xf32, #tpu.memory_space<vmem>>, vector<2x128xf32>
    %c0_1 = arith.constant 0 : index
    %c0_2 = arith.constant 0 : index
    %1 = vector.load %arg2[%c0_1, %c0_2] : memref<32x2xf32, #tpu.memory_space<vmem>>, vector<32x2xf32>
    %c0_3 = arith.constant 0 : index
    %c0_4 = arith.constant 0 : index
    %2 = vector.load %arg3[%c0_3, %c0_4] : memref<32x1xf32, #tpu.memory_space<vmem>>, vector<32x1xf32>
    %cst = arith.constant dense<0.000000e+00> : vector<32x128xf32>
    %3 = tpu.matmul %1, %0, %cst {dimension_numbers = #tpu.dot_dimension_numbers<[1], [0], [0], [1], [0, 0, 1, 1], [], []>, precision = #tpu.contract_precision<fp32>} : vector<32x2xf32>, vector<2x128xf32>, vector<32x128xf32> -> vector<32x128xf32>
    %4 = vector.broadcast %2 : vector<32x1xf32> to vector<32x128xf32>
    %5 = arith.addf %3, %4 : vector<32x128xf32>
    %6 = math.sin %5 : vector<32x128xf32>
    %c0_5 = arith.constant 0 : index
    %c0_6 = arith.constant 0 : index
    %7 = vector.load %arg4[%c0_5, %c0_6] : memref<32x32xf32, #tpu.memory_space<vmem>>, vector<32x32xf32>
    %c0_7 = arith.constant 0 : index
    %c0_8 = arith.constant 0 : index
    %8 = vector.load %arg5[%c0_7, %c0_8] : memref<32x1xf32, #tpu.memory_space<vmem>>, vector<32x1xf32>
    %cst_9 = arith.constant dense<0.000000e+00> : vector<32x128xf32>
    %9 = tpu.matmul %7, %6, %cst_9 {dimension_numbers = #tpu.dot_dimension_numbers<[1], [0], [0], [1], [0, 0, 1, 1], [], []>, precision = #tpu.contract_precision<fp32>} : vector<32x32xf32>, vector<32x128xf32>, vector<32x128xf32> -> vector<32x128xf32>
    %10 = vector.broadcast %8 : vector<32x1xf32> to vector<32x128xf32>
    %11 = arith.addf %9, %10 : vector<32x128xf32>
    %12 = math.sin %11 : vector<32x128xf32>
    %c0_10 = arith.constant 0 : index
    %c0_11 = arith.constant 0 : index
    %13 = vector.load %arg6[%c0_10, %c0_11] : memref<32x32xf32, #tpu.memory_space<vmem>>, vector<32x32xf32>
    %c0_12 = arith.constant 0 : index
    %c0_13 = arith.constant 0 : index
    %14 = vector.load %arg7[%c0_12, %c0_13] : memref<32x1xf32, #tpu.memory_space<vmem>>, vector<32x1xf32>
    %cst_14 = arith.constant dense<0.000000e+00> : vector<32x128xf32>
    %15 = tpu.matmul %13, %12, %cst_14 {dimension_numbers = #tpu.dot_dimension_numbers<[1], [0], [0], [1], [0, 0, 1, 1], [], []>, precision = #tpu.contract_precision<fp32>} : vector<32x32xf32>, vector<32x128xf32>, vector<32x128xf32> -> vector<32x128xf32>
    %16 = vector.broadcast %14 : vector<32x1xf32> to vector<32x128xf32>
    %17 = arith.addf %15, %16 : vector<32x128xf32>
    %18 = math.sin %17 : vector<32x128xf32>
    %c0_15 = arith.constant 0 : index
    %c0_16 = arith.constant 0 : index
    %19 = vector.load %arg8[%c0_15, %c0_16] : memref<1x32xf32, #tpu.memory_space<vmem>>, vector<1x32xf32>
    %c0_17 = arith.constant 0 : index
    %c0_18 = arith.constant 0 : index
    %20 = vector.load %arg9[%c0_17, %c0_18] : memref<1x1xf32, #tpu.memory_space<vmem>>, vector<1x1xf32>
    %cst_19 = arith.constant dense<0.000000e+00> : vector<1x128xf32>
    %21 = tpu.matmul %19, %18, %cst_19 {dimension_numbers = #tpu.dot_dimension_numbers<[1], [0], [0], [1], [0, 0, 1, 1], [], []>, precision = #tpu.contract_precision<fp32>} : vector<1x32xf32>, vector<32x128xf32>, vector<1x128xf32> -> vector<1x128xf32>
    %22 = vector.broadcast %20 : vector<1x1xf32> to vector<1x128xf32>
    %23 = arith.addf %21, %22 : vector<1x128xf32>
    %c0_20 = arith.constant 0 : index
    %c0_21 = arith.constant 0 : index
    %24 = vector.load %arg10[%c0_20, %c0_21] : memref<1x128xf32, #tpu.memory_space<vmem>>, vector<1x128xf32>
    tpu.vector_store %arg10[%c0_20, %c0_21], %23 {strides = array<i32>} : memref<1x128xf32, #tpu.memory_space<vmem>>, vector<1x128xf32>,
    return
  }
  func.func @transform_0(%arg0: i32) -> (i32, i32) {
    %c0_i32 = arith.constant 0 : i32
    %c0_i32_0 = arith.constant 0 : i32
    return %c0_i32, %arg0 : i32, i32
  }
  func.func @transform_1(%arg0: i32) -> (i32, i32) {
    %c0_i32 = arith.constant 0 : i32
    %c0_i32_0 = arith.constant 0 : i32
    %c0_i32_1 = arith.constant 0 : i32
    return %c0_i32, %c0_i32_0 : i32, i32
  }
  func.func @transform_2(%arg0: i32) -> (i32, i32) {
    %c0_i32 = arith.constant 0 : i32
    %c0_i32_0 = arith.constant 0 : i32
    %c0_i32_1 = arith.constant 0 : i32
    return %c0_i32, %c0_i32_0 : i32, i32
  }
  func.func @transform_3(%arg0: i32) -> (i32, i32) {
    %c0_i32 = arith.constant 0 : i32
    %c0_i32_0 = arith.constant 0 : i32
    %c0_i32_1 = arith.constant 0 : i32
    return %c0_i32, %c0_i32_0 : i32, i32
  }
  func.func @transform_4(%arg0: i32) -> (i32, i32) {
    %c0_i32 = arith.constant 0 : i32
    %c0_i32_0 = arith.constant 0 : i32
    %c0_i32_1 = arith.constant 0 : i32
    return %c0_i32, %c0_i32_0 : i32, i32
  }
  func.func @transform_5(%arg0: i32) -> (i32, i32) {
    %c0_i32 = arith.constant 0 : i32
    %c0_i32_0 = arith.constant 0 : i32
    %c0_i32_1 = arith.constant 0 : i32
    return %c0_i32, %c0_i32_0 : i32, i32
  }
  func.func @transform_6(%arg0: i32) -> (i32, i32) {
    %c0_i32 = arith.constant 0 : i32
    %c0_i32_0 = arith.constant 0 : i32
    %c0_i32_1 = arith.constant 0 : i32
    return %c0_i32, %c0_i32_0 : i32, i32
  }
  func.func @transform_7(%arg0: i32) -> (i32, i32) {
    %c0_i32 = arith.constant 0 : i32
    %c0_i32_0 = arith.constant 0 : i32
    %c0_i32_1 = arith.constant 0 : i32
    return %c0_i32, %c0_i32_0 : i32, i32
  }
  func.func @transform_8(%arg0: i32) -> (i32, i32) {
    %c0_i32 = arith.constant 0 : i32
    %c0_i32_0 = arith.constant 0 : i32
    %c0_i32_1 = arith.constant 0 : i32
    return %c0_i32, %c0_i32_0 : i32, i32
  }
  func.func @transform_9(%arg0: i32) -> (i32, i32) {
    %c0_i32 = arith.constant 0 : i32
    %c0_i32_0 = arith.constant 0 : i32
    return %c0_i32, %arg0 : i32, i32
  }
}

</mosaic_0001>

<llo_original>
// kernel: tpu_custom_call.1
$region0: #{tpu_custom_call.1}
  #allocation0 [shape = 'u32[]', space=smem, size = 0x4, offset = 0x4, fixed_abs, tag = 'smem constant byte address 0x4 - core index']
  #allocation1 [shape = 'u32[72,128]{1,0:T(1,128)}', space=vmem, size = 0x9000, scoped, tag = 'internal scratch']
  #allocation2 [shape = 'f32[1,1]{1,0:T(1,128)S(1)}', space=vmem, size = 0x200, scoped, tag = 'scoped memory for tpu_custom_call.1']
  %s0 = inlined_call_operand.vmem [shape: f32[2,256], index: 0, kind: input, shape index: {}]
  %s1 = inlined_call_operand.vmem [shape: f32[32,2], index: 1, kind: input, shape index: {}]
  %s2 = inlined_call_operand.vmem [shape: f32[32,1], index: 2, kind: input, shape index: {}]
  %s3 = inlined_call_operand.vmem [shape: f32[32,32], index: 3, kind: input, shape index: {}]
  %s4 = inlined_call_operand.vmem [shape: f32[32,1], index: 4, kind: input, shape index: {}]
  %s5 = inlined_call_operand.vmem [shape: f32[32,32], index: 5, kind: input, shape index: {}]
  %s6 = inlined_call_operand.vmem [shape: f32[32,1], index: 6, kind: input, shape index: {}]
  %s7 = inlined_call_operand.vmem [shape: f32[1,32], index: 7, kind: input, shape index: {}]
  %s8 = inlined_call_operand.<no memory space> [shape: f32[1,1], index: 8, kind: input, shape index: {}]
  %s9 = inlined_call_operand.hbm [shape: f32[1,256], index: 9, kind: output, shape index: {}]
  %s10 = sld [smem:[#allocation0]]
  $region69: #{tpu_custom_call.1} parent=0
    _
  %s12 = ssub.s32 1, %s10
  %s13 = scalar_select 0, %s12, %s10
  %v14 = vstv %s8
  %15 = vst [vmem:[#allocation2] sm:$0x1] %v14
  $region1: #{tpu_custom_call.1} parent=0
    #allocation3 [shape = 'u8[1024]{0}', space=vmem, size = 0x400, scoped, tag = 'output window, operand 0']
    #allocation4 [shape = 's32[2]{0}', space=sflag, size = 0x8, scoped, tag = 'scoped memory for tpu_custom_call.1']
    %16 = vsyncpa [#allocation4], 0
    %s17 = scalar_lea.sflag [#allocation4], 1
    %18 = vsyncpa %s17, 0
    loop: start=0, step=1, limit=4
    $region2: #{tpu_custom_call.1} parent=1 // loop_pre_header
      _
    $region3: #{tpu_custom_call.1} parent=1 // loop_header
      %s20 = sphi 0, %s24
      %p21 = scmp.ge.s32.totalorder %s20, 4
      %s30 = sphi 0, %s32
      %s33 = sphi 0, %s30
      %s34 = sphi 0, %s33
      %s50 = sphi 0, %s34
      %s54 = sphi 0, %s54
      %s56 = sphi 0, %s54
      %s57 = sphi 0, %s56
      %s71 = sphi 0, %s57
      %s75 = sphi 0, %s75
      %s77 = sphi 0, %s75
      %s78 = sphi 0, %s77
      %s92 = sphi 0, %s78
      %s96 = sphi 0, %s96
      %s98 = sphi 0, %s96
      %s99 = sphi 0, %s98
      %s113 = sphi 0, %s99
      %s117 = sphi 0, %s117
      %s119 = sphi 0, %s117
      %s120 = sphi 0, %s119
      %s134 = sphi 0, %s120
      %s138 = sphi 0, %s138
      %s140 = sphi 0, %s138
      %s141 = sphi 0, %s140
      %s155 = sphi 0, %s141
      %s159 = sphi 0, %s159
      %s161 = sphi 0, %s159
      %s162 = sphi 0, %s161
      %s176 = sphi 0, %s162
      %s180 = sphi 0, %s180
      %s182 = sphi 0, %s180
      %s183 = sphi 0, %s182
      %s197 = sphi 0, %s183
      %s201 = sphi 0, %s201
      %s203 = sphi 0, %s201
      %s204 = sphi 0, %s203
      %s218 = sphi 0, %s204
      %s224 = sphi 0, %s226
      %s227 = sphi 0, %s224
      %s228 = sphi 0, %s227
      %s244 = sphi 0, %s228
    $region4: #{tpu_custom_call.1} parent=1 // loop_header_branch
      %23 = sbr.rel (%p21) target = $region8
    $region5: #{tpu_custom_call.1} parent=1 // loop_body
      %s25 = ssub.s32 %s20, 1
      %s26 = ssub.s32 %s20, 2
      %s27 = sadd.s32 %s20, 1
      %s28 = ssub.s32 %s20, %s27
      %p29 = scmp.eq.s32.totalorder %s28, 0
      %s31 = sadd.s32 %s30, 1
      %s32 = scalar_select %p29, %s30, %s31
      %p35 = pneg %p29
      %p36 = scmp.eq.s32.totalorder %s20, 1
      %p37 = por %p35, %p36
      %p38 = scmp.ne.s32.totalorder %s30, %s33
      %p39 = scmp.eq.s32.totalorder %s20, 0
      %p40 = por %p38, %p39
      %p41 = scmp.ne.s32.totalorder %s30, %s33
      %p42 = scmp.eq.s32.totalorder %s25, 1
      %p43 = por %p41, %p42
      %p44 = scmp.ne.s32.totalorder %s33, %s34
      %p45 = scmp.eq.s32.totalorder %s25, 0
      %p46 = por %p44, %p45
      %p47 = scmp.ne.s32.totalorder %s33, %s34
      %p48 = scmp.eq.s32.totalorder %s26, 1
      %p49 = por %p47, %p48
      %p51 = scmp.ne.s32.totalorder %s34, %s50
      %p52 = scmp.eq.s32.totalorder %s26, 0
      %p53 = por %p51, %p52
      %s55 = sadd.s32 %s54, 1
      %p58 = scmp.eq.s32.totalorder %s20, 1
      %p59 = scmp.ne.s32.totalorder %s54, %s56
      %p60 = scmp.eq.s32.totalorder %s20, 0
      %p61 = por %p59, %p60
      %p62 = scmp.ne.s32.totalorder %s54, %s56
      %p63 = scmp.eq.s32.totalorder %s25, 1
      %p64 = por %p62, %p63
      %p65 = scmp.ne.s32.totalorder %s56, %s57
      %p66 = scmp.eq.s32.totalorder %s25, 0
      %p67 = por %p65, %p66
      %p68 = scmp.ne.s32.totalorder %s56, %s57
      %p69 = scmp.eq.s32.totalorder %s26, 1
      %p70 = por %p68, %p69
      %p72 = scmp.ne.s32.totalorder %s57, %s71
      %p73 = scmp.eq.s32.totalorder %s26, 0
      %p74 = por %p72, %p73
      %s76 = sadd.s32 %s75, 1
      %p79 = scmp.eq.s32.totalorder %s20, 1
      %p80 = scmp.ne.s32.totalorder %s75, %s77
      %p81 = scmp.eq.s32.totalorder %s20, 0
      %p82 = por %p80, %p81
      %p83 = scmp.ne.s32.totalorder %s75, %s77
      %p84 = scmp.eq.s32.totalorder %s25, 1
      %p85 = por %p83, %p84
      %p86 = scmp.ne.s32.totalorder %s77, %s78
      %p87 = scmp.eq.s32.totalorder %s25, 0
      %p88 = por %p86, %p87
      %p89 = scmp.ne.s32.totalorder %s77, %s78
      %p90 = scmp.eq.s32.totalorder %s26, 1
      %p91 = por %p89, %p90
      %p93 = scmp.ne.s32.totalorder %s78, %s92
      %p94 = scmp.eq.s32.totalorder %s26, 0
      %p95 = por %p93, %p94
      %s97 = sadd.s32 %s96, 1
      %p100 = scmp.eq.s32.totalorder %s20, 1
      %p101 = scmp.ne.s32.totalorder %s96, %s98
      %p102 = scmp.eq.s32.totalorder %s20, 0
      %p103 = por %p101, %p102
      %p104 = scmp.ne.s32.totalorder %s96, %s98
      %p105 = scmp.eq.s32.totalorder %s25, 1
      %p106 = por %p104, %p105
      %p107 = scmp.ne.s32.totalorder %s98, %s99
      %p108 = scmp.eq.s32.totalorder %s25, 0
      %p109 = por %p107, %p108
      %p110 = scmp.ne.s32.totalorder %s98, %s99
      %p111 = scmp.eq.s32.totalorder %s26, 1
      %p112 = por %p110, %p111
      %p114 = scmp.ne.s32.totalorder %s99, %s113
      %p115 = scmp.eq.s32.totalorder %s26, 0
      %p116 = por %p114, %p115
      %s118 = sadd.s32 %s117, 1
      %p121 = scmp.eq.s32.totalorder %s20, 1
      %p122 = scmp.ne.s32.totalorder %s117, %s119
      %p123 = scmp.eq.s32.totalorder %s20, 0
      %p124 = por %p122, %p123
      %p125 = scmp.ne.s32.totalorder %s117, %s119
      %p126 = scmp.eq.s32.totalorder %s25, 1
      %p127 = por %p125, %p126
      %p128 = scmp.ne.s32.totalorder %s119, %s120
      %p129 = scmp.eq.s32.totalorder %s25, 0
      %p130 = por %p128, %p129
      %p131 = scmp.ne.s32.totalorder %s119, %s120
      %p132 = scmp.eq.s32.totalorder %s26, 1
      %p133 = por %p131, %p132
      %p135 = scmp.ne.s32.totalorder %s120, %s134
      %p136 = scmp.eq.s32.totalorder %s26, 0
      %p137 = por %p135, %p136
      %s139 = sadd.s32 %s138, 1
      %p142 = scmp.eq.s32.totalorder %s20, 1
      %p143 = scmp.ne.s32.totalorder %s138, %s140
      %p144 = scmp.eq.s32.totalorder %s20, 0
      %p145 = por %p143, %p144
      %p146 = scmp.ne.s32.totalorder %s138, %s140
      %p147 = scmp.eq.s32.totalorder %s25, 1
      %p148 = por %p146, %p147
      %p149 = scmp.ne.s32.totalorder %s140, %s141
      %p150 = scmp.eq.s32.totalorder %s25, 0
      %p151 = por %p149, %p150
      %p152 = scmp.ne.s32.totalorder %s140, %s141
      %p153 = scmp.eq.s32.totalorder %s26, 1
      %p154 = por %p152, %p153
      %p156 = scmp.ne.s32.totalorder %s141, %s155
      %p157 = scmp.eq.s32.totalorder %s26, 0
      %p158 = por %p156, %p157
      %s160 = sadd.s32 %s159, 1
      %p163 = scmp.eq.s32.totalorder %s20, 1
      %p164 = scmp.ne.s32.totalorder %s159, %s161
      %p165 = scmp.eq.s32.totalorder %s20, 0
      %p166 = por %p164, %p165
      %p167 = scmp.ne.s32.totalorder %s159, %s161
      %p168 = scmp.eq.s32.totalorder %s25, 1
      %p169 = por %p167, %p168
      %p170 = scmp.ne.s32.totalorder %s161, %s162
      %p171 = scmp.eq.s32.totalorder %s25, 0
      %p172 = por %p170, %p171
      %p173 = scmp.ne.s32.totalorder %s161, %s162
      %p174 = scmp.eq.s32.totalorder %s26, 1
      %p175 = por %p173, %p174
      %p177 = scmp.ne.s32.totalorder %s162, %s176
      %p178 = scmp.eq.s32.totalorder %s26, 0
      %p179 = por %p177, %p178
      %s181 = sadd.s32 %s180, 1
      %p184 = scmp.eq.s32.totalorder %s20, 1
      %p185 = scmp.ne.s32.totalorder %s180, %s182
      %p186 = scmp.eq.s32.totalorder %s20, 0
      %p187 = por %p185, %p186
      %p188 = scmp.ne.s32.totalorder %s180, %s182
      %p189 = scmp.eq.s32.totalorder %s25, 1
      %p190 = por %p188, %p189
      %p191 = scmp.ne.s32.totalorder %s182, %s183
      %p192 = scmp.eq.s32.totalorder %s25, 0
      %p193 = por %p191, %p192
      %p194 = scmp.ne.s32.totalorder %s182, %s183
      %p195 = scmp.eq.s32.totalorder %s26, 1
      %p196 = por %p194, %p195
      %p198 = scmp.ne.s32.totalorder %s183, %s197
      %p199 = scmp.eq.s32.totalorder %s26, 0
      %p200 = por %p198, %p199
      %s202 = sadd.s32 %s201, 1
      %p205 = scmp.eq.s32.totalorder %s20, 1
      %p206 = scmp.ne.s32.totalorder %s201, %s203
      %p207 = scmp.eq.s32.totalorder %s20, 0
      %p208 = por %p206, %p207
      %p209 = scmp.ne.s32.totalorder %s201, %s203
      %p210 = scmp.eq.s32.totalorder %s25, 1
      %p211 = por %p209, %p210
      %p212 = scmp.ne.s32.totalorder %s203, %s204
      %p213 = scmp.eq.s32.totalorder %s25, 0
      %p214 = por %p212, %p213
      %p215 = scmp.ne.s32.totalorder %s203, %s204
      %p216 = scmp.eq.s32.totalorder %s26, 1
      %p217 = por %p215, %p216
      %p219 = scmp.ne.s32.totalorder %s204, %s218
      %p220 = scmp.eq.s32.totalorder %s26, 0
      %p221 = por %p219, %p220
      %s222 = ssub.s32 %s20, %s27
      %p223 = scmp.eq.s32.totalorder %s222, 0
      %s225 = sadd.s32 %s224, 1
      %s226 = scalar_select %p223, %s224, %s225
      %p229 = pneg %p223
      %p230 = scmp.eq.s32.totalorder %s20, 1
      %p231 = por %p229, %p230
      %p232 = scmp.ne.s32.totalorder %s224, %s227
      %p233 = scmp.eq.s32.totalorder %s20, 0
      %p234 = por %p232, %p233
      %p235 = scmp.ne.s32.totalorder %s224, %s227
      %p236 = scmp.eq.s32.totalorder %s25, 1
      %p237 = por %p235, %p236
      %p238 = scmp.ne.s32.totalorder %s227, %s228
      %p239 = scmp.eq.s32.totalorder %s25, 0
      %p240 = por %p238, %p239
      %p241 = scmp.ne.s32.totalorder %s227, %s228
      %p242 = scmp.eq.s32.totalorder %s26, 1
      %p243 = por %p241, %p242
      %p245 = scmp.ne.s32.totalorder %s228, %s244
      %p246 = scmp.eq.s32.totalorder %s26, 0
      %p247 = por %p245, %p246
      %p248 = scmp.le.s32.totalorder 1, %s20
      %p249 = scmp.lt.s32.totalorder %s20, 3
      %p250 = pnand %p248, %p249
      %p251 = pneg %p250
      // Predicated region
      $region9: #{tpu_custom_call.1} parent=5 // pred_check
        _
      $region10: #{tpu_custom_call.1} parent=5 // pred_check_branch
        %253 = sbr.rel (%p250) target = $region12
      $region11: #{tpu_custom_call.1} parent=5 // pred_region
        %s254 = ssub.s32 %s20, 1
        // Predicated region
        $region13: #{tpu_custom_call.1} parent=11 // pred_check
          %p255 = pneg %p67
        $region14: #{tpu_custom_call.1} parent=11 // pred_check_branch
          %257 = sbr.rel (%p255) target = $region16
        $region15: #{tpu_custom_call.1} parent=11 // pred_region
          _
        $region16: #{tpu_custom_call.1} parent=11 // pred_fallthru
          _
        // Predicated region
        $region17: #{tpu_custom_call.1} parent=11 // pred_check
          %p258 = pneg %p88
        $region18: #{tpu_custom_call.1} parent=11 // pred_check_branch
          %260 = sbr.rel (%p258) target = $region20
        $region19: #{tpu_custom_call.1} parent=11 // pred_region
          _
        $region20: #{tpu_custom_call.1} parent=11 // pred_fallthru
          _
        // Predicated region
        $region21: #{tpu_custom_call.1} parent=11 // pred_check
          %p261 = pneg %p109
        $region22: #{tpu_custom_call.1} parent=11 // pred_check_branch
          %263 = sbr.rel (%p261) target = $region24
        $region23: #{tpu_custom_call.1} parent=11 // pred_region
          _
        $region24: #{tpu_custom_call.1} parent=11 // pred_fallthru
          _
        // Predicated region
        $region25: #{tpu_custom_call.1} parent=11 // pred_check
          %p264 = pneg %p130
        $region26: #{tpu_custom_call.1} parent=11 // pred_check_branch
          %266 = sbr.rel (%p264) target = $region28
        $region27: #{tpu_custom_call.1} parent=11 // pred_region
          _
        $region28: #{tpu_custom_call.1} parent=11 // pred_fallthru
          _
        // Predicated region
        $region29: #{tpu_custom_call.1} parent=11 // pred_check
          %p267 = pneg %p151
        $region30: #{tpu_custom_call.1} parent=11 // pred_check_branch
          %269 = sbr.rel (%p267) target = $region32
        $region31: #{tpu_custom_call.1} parent=11 // pred_region
          _
        $region32: #{tpu_custom_call.1} parent=11 // pred_fallthru
          _
        // Predicated region
        $region33: #{tpu_custom_call.1} parent=11 // pred_check
          %p270 = pneg %p172
        $region34: #{tpu_custom_call.1} parent=11 // pred_check_branch
          %272 = sbr.rel (%p270) target = $region36
        $region35: #{tpu_custom_call.1} parent=11 // pred_region
          _
        $region36: #{tpu_custom_call.1} parent=11 // pred_fallthru
          _
        // Predicated region
        $region37: #{tpu_custom_call.1} parent=11 // pred_check
          %p273 = pneg %p193
        $region38: #{tpu_custom_call.1} parent=11 // pred_check_branch
          %275 = sbr.rel (%p273) target = $region40
        $region39: #{tpu_custom_call.1} parent=11 // pred_region
          _
        $region40: #{tpu_custom_call.1} parent=11 // pred_fallthru
          _
        // Predicated region
        $region41: #{tpu_custom_call.1} parent=11 // pred_check
          %p276 = pneg %p214
        $region42: #{tpu_custom_call.1} parent=11 // pred_check_branch
          %278 = sbr.rel (%p276) target = $region44
        $region43: #{tpu_custom_call.1} parent=11 // pred_region
          _
        $region44: #{tpu_custom_call.1} parent=11 // pred_fallthru
          _
      $region12: #{tpu_custom_call.1} parent=5 // pred_fallthru
        _
      %p279 = scmp.lt.s32.totalorder %s20, 2
      // Predicated region
      $region45: #{tpu_custom_call.1} parent=5 // pred_check
        %p280 = pneg %p279
      $region46: #{tpu_custom_call.1} parent=5 // pred_check_branch
        %282 = sbr.rel (%p280) target = $region48
      $region47: #{tpu_custom_call.1} parent=5 // pred_region
        // Predicated region
        $region49: #{tpu_custom_call.1} parent=47 // pred_check
          %p283 = pneg %p40
        $region50: #{tpu_custom_call.1} parent=47 // pred_check_branch
          %285 = sbr.rel (%p283) target = $region52
        $region51: #{tpu_custom_call.1} parent=47 // pred_region
          %p286 = scmp.lt.s32.totalorder %s20, 1
          %s287 = scalar_select %p286, %s20, 1
          %s288 = smul.addr %s287, 2
          %s289 = scalar_lea.vmem %s0, %s288
        $region52: #{tpu_custom_call.1} parent=47 // pred_fallthru
          _
      $region48: #{tpu_custom_call.1} parent=5 // pred_fallthru
        _
      %p290 = scmp.le.s32.totalorder 1, %s20
      %p291 = scmp.lt.s32.totalorder %s20, 3
      %p292 = pnand %p290, %p291
      %p293 = pneg %p292
      // Predicated region
      $region53: #{tpu_custom_call.1} parent=5 // pred_check
        _
      $region54: #{tpu_custom_call.1} parent=5 // pred_check_branch
        %295 = sbr.rel (%p292) target = $region56
      $region55: #{tpu_custom_call.1} parent=5 // pred_region
        %s296 = ssub.s32 %s20, 1
        %p297 = scmp.lt.s32.totalorder %s25, 1
        %s298 = scalar_select %p297, %s25, 1
        %s299 = smul.addr %s298, 2
        %s300 = scalar_lea.vmem %s0, %s299
        %p301 = pneg %p46
        %p302 = pneg %p43
        %p303 = pneg %p67
        %p304 = pneg %p64
        %p305 = pneg %p88
        %p306 = pneg %p85
        %p307 = pneg %p109
        %p308 = pneg %p106
        %p309 = pneg %p130
        %p310 = pneg %p127
        %p311 = pneg %p151
        %p312 = pneg %p148
        %p313 = pneg %p172
        %p314 = pneg %p169
        %p315 = pneg %p193
        %p316 = pneg %p190
        %p317 = pneg %p214
        %p318 = pneg %p211
        %p319 = pneg %p240
        %p320 = pneg %p237
        %s321 = sand.u32 %s227, 1
        %s322 = scalar_lea.sflag [#allocation4], %s321
        %s323 = sand.u32 %s227, 1
        %s324 = scalar_lea.vmem [#allocation3], %s323
        %p325 = scmp.lt.s32.totalorder %s25, 1
        %s326 = scalar_select %p325, %s25, 1
        %s327 = smul.addr %s326, 2
        %s328 = scalar_lea.vmem %s0, %s327
        %v329 = vld [vmem:[%s328] sm:$0x3]
        %v330 = vld [vmem:[%s1] sm:$0xff]
        %v331 = vld [vmem:[%s1 + $0x8] sm:$0xff]
        %v332 = vld [vmem:[%s1 + $0x10] sm:$0xff]
        %v333 = vld [vmem:[%s1 + $0x18] sm:$0xff]
        %v334 = vld [vmem:[%s2] sm:$0xff]
        %v335 = vld [vmem:[%s2 + $0x8] sm:$0xff]
        %v336 = vld [vmem:[%s2 + $0x10] sm:$0xff]
        %v337 = vld [vmem:[%s2 + $0x18] sm:$0xff]
        %339 = vset.pattern.permute.xlu0 0
        %340 = vperm.xlu0 %339, %v334
        %v341 = vpop.permute.xlu0 %340
        %344 = vset.pattern.permute.xlu0 0
        %345 = vperm.xlu0 %344, %v335
        %v346 = vpop.permute.xlu0 %345
        %349 = vset.pattern.permute.xlu0 0
        %350 = vperm.xlu0 %349, %v336
        %v351 = vpop.permute.xlu0 %350
        %354 = vset.pattern.permute.xlu0 0
        %355 = vperm.xlu0 %354, %v337
        %v356 = vpop.permute.xlu0 %355
        %vm358 = vcmask 15360
        %v360 = vsel %vm358, %v330, 0
        %v363 = vsel %vm358, %v331, 0
        %v366 = vsel %vm358, %v332, 0
        %v369 = vsel %vm358, %v333, 0
        %vm371 = vcmask 1041408
        %v373 = vsel %vm371, %v329, 0
        %375 = vmatpush.msra.mxu0 0.0
        %376 = vmatpush.msra.mxu0 0.0
        %377 = vmatpush.msra.mxu0 0.0
        %378 = vmatpush.msra.mxu0 0.0
        %379 = vmatpush.msra.mxu0 0.0
        %380 = vmatpush.msra.mxu0 0.0
        %381 = vmatpush.msra.mxu0 0.0
        %382 = vmatpush.msra.mxu0 0.0
        %383 = vmatpush.msra.mxu0 0.0
        %384 = vmatpush.msra.mxu0 0.0
        %385 = vmatpush.msra.mxu0 0.0
        %386 = vmatpush.msra.mxu0 0.0
        %387 = vmatpush.msra.mxu0 0.0
        %388 = vmatpush.msra.mxu0 0.0
        %389 = vmatpush.msra.mxu0 0.0
        %v390 = vand.u32 %v373, 4294901760
        %391 = vmatpush.msra.mxu0 %v390
        %v392 = vand.u32 %v360, 4294901760
        %v393 = vsub.f32 %v360, %v392
        %v394 = vand.u32 %v393, 4294901760
        %v395 = vsub.f32 %v393, %v394
        %v396 = vand.u32 %v395, 4294901760
        %397 = vmatmul.f32.gmra.mxu0 %v396
        %v398 = vpop.f32.mrf.mxu0
        %v399 = vadd.f32 %v341, %v398
        %v400 = vand.u32 %v363, 4294901760
        %v401 = vsub.f32 %v363, %v400
        %v402 = vand.u32 %v401, 4294901760
        %v403 = vsub.f32 %v401, %v402
        %v404 = vand.u32 %v403, 4294901760
        %405 = vmatmul.f32.gmra.mxu0 %v404
        %v406 = vpop.f32.mrf.mxu0
        %v407 = vadd.f32 %v346, %v406
        %v408 = vand.u32 %v366, 4294901760
        %v409 = vsub.f32 %v366, %v408
        %v410 = vand.u32 %v409, 4294901760
        %v411 = vsub.f32 %v409, %v410
        %v412 = vand.u32 %v411, 4294901760
        %413 = vmatmul.f32.gmra.mxu0 %v412
        %v414 = vpop.f32.mrf.mxu0
        %v415 = vadd.f32 %v351, %v414
        %v416 = vand.u32 %v369, 4294901760
        %v417 = vsub.f32 %v369, %v416
        %v418 = vand.u32 %v417, 4294901760
        %v419 = vsub.f32 %v417, %v418
        %v420 = vand.u32 %v419, 4294901760
        %421 = vmatmul.f32.gmra.mxu0 %v420
        %v422 = vpop.f32.mrf.mxu0
        %v423 = vadd.f32 %v356, %v422
        %424 = vdwg.mxu0
        %425 = vmatpush.msra.mxu0 0.0
        %426 = vmatpush.msra.mxu0 0.0
        %427 = vmatpush.msra.mxu0 0.0
        %428 = vmatpush.msra.mxu0 0.0
        %429 = vmatpush.msra.mxu0 0.0
        %430 = vmatpush.msra.mxu0 0.0
        %431 = vmatpush.msra.mxu0 0.0
        %432 = vmatpush.msra.mxu0 0.0
        %433 = vmatpush.msra.mxu0 0.0
        %434 = vmatpush.msra.mxu0 0.0
        %435 = vmatpush.msra.mxu0 0.0
        %436 = vmatpush.msra.mxu0 0.0
        %437 = vmatpush.msra.mxu0 0.0
        %438 = vmatpush.msra.mxu0 0.0
        %439 = vmatpush.msra.mxu0 0.0
        %v440 = vand.u32 %v373, 4294901760
        %v441 = vsub.f32 %v373, %v440
        %v442 = vand.u32 %v441, 4294901760
        %v443 = vsub.f32 %v441, %v442
        %v444 = vand.u32 %v443, 4294901760
        %445 = vmatpush.msra.mxu0 %v444
        %v446 = vand.u32 %v360, 4294901760
        %447 = vmatmul.f32.gmra.mxu0 %v446
        %v448 = vpop.f32.mrf.mxu0
        %v449 = vadd.f32 %v399, %v448
        %v450 = vand.u32 %v363, 4294901760
        %451 = vmatmul.f32.gmra.mxu0 %v450
        %v452 = vpop.f32.mrf.mxu0
        %v453 = vadd.f32 %v407, %v452
        %v454 = vand.u32 %v366, 4294901760
        %455 = vmatmul.f32.gmra.mxu0 %v454
        %v456 = vpop.f32.mrf.mxu0
        %v457 = vadd.f32 %v415, %v456
        %v458 = vand.u32 %v369, 4294901760
        %459 = vmatmul.f32.gmra.mxu0 %v458
        %v460 = vpop.f32.mrf.mxu0
        %v461 = vadd.f32 %v423, %v460
        %462 = vdwg.mxu0
        %463 = vmatpush.msra.mxu0 0.0
        %464 = vmatpush.msra.mxu0 0.0
        %465 = vmatpush.msra.mxu0 0.0
        %466 = vmatpush.msra.mxu0 0.0
        %467 = vmatpush.msra.mxu0 0.0
        %468 = vmatpush.msra.mxu0 0.0
        %469 = vmatpush.msra.mxu0 0.0
        %470 = vmatpush.msra.mxu0 0.0
        %471 = vmatpush.msra.mxu0 0.0
        %472 = vmatpush.msra.mxu0 0.0
        %473 = vmatpush.msra.mxu0 0.0
        %474 = vmatpush.msra.mxu0 0.0
        %475 = vmatpush.msra.mxu0 0.0
        %476 = vmatpush.msra.mxu0 0.0
        %477 = vmatpush.msra.mxu0 0.0
        %v478 = vand.u32 %v373, 4294901760
        %v479 = vsub.f32 %v373, %v478
        %480 = vmatpush.msra.mxu0 %v479
        %v481 = vand.u32 %v360, 4294901760
        %v482 = vsub.f32 %v360, %v481
        %483 = vmatmul.f32.gmra.mxu0 %v482
        %v484 = vpop.f32.mrf.mxu0
        %v485 = vadd.f32 %v449, %v484
        %v486 = vand.u32 %v363, 4294901760
        %v487 = vsub.f32 %v363, %v486
        %488 = vmatmul.f32.gmra.mxu0 %v487
        %v489 = vpop.f32.mrf.mxu0
        %v490 = vadd.f32 %v453, %v489
        %v491 = vand.u32 %v366, 4294901760
        %v492 = vsub.f32 %v366, %v491
        %493 = vmatmul.f32.gmra.mxu0 %v492
        %v494 = vpop.f32.mrf.mxu0
        %v495 = vadd.f32 %v457, %v494
        %v496 = vand.u32 %v369, 4294901760
        %v497 = vsub.f32 %v369, %v496
        %498 = vmatmul.f32.gmra.mxu0 %v497
        %v499 = vpop.f32.mrf.mxu0
        %v500 = vadd.f32 %v461, %v499
        %501 = vdwg.mxu0
        %502 = vmatpush.msra.mxu0 0.0
        %503 = vmatpush.msra.mxu0 0.0
        %504 = vmatpush.msra.mxu0 0.0
        %505 = vmatpush.msra.mxu0 0.0
        %506 = vmatpush.msra.mxu0 0.0
        %507 = vmatpush.msra.mxu0 0.0
        %508 = vmatpush.msra.mxu0 0.0
        %509 = vmatpush.msra.mxu0 0.0
        %510 = vmatpush.msra.mxu0 0.0
        %511 = vmatpush.msra.mxu0 0.0
        %512 = vmatpush.msra.mxu0 0.0
        %513 = vmatpush.msra.mxu0 0.0
        %514 = vmatpush.msra.mxu0 0.0
        %515 = vmatpush.msra.mxu0 0.0
        %516 = vmatpush.msra.mxu0 0.0
        %v517 = vand.u32 %v373, 4294901760
        %518 = vmatpush.msra.mxu0 %v517
        %v519 = vand.u32 %v360, 4294901760
        %v520 = vsub.f32 %v360, %v519
        %v521 = vand.u32 %v520, 4294901760
        %522 = vmatmul.f32.gmra.mxu0 %v521
        %v523 = vpop.f32.mrf.mxu0
        %v524 = vadd.f32 %v485, %v523
        %v525 = vand.u32 %v363, 4294901760
        %v526 = vsub.f32 %v363, %v525
        %v527 = vand.u32 %v526, 4294901760
        %528 = vmatmul.f32.gmra.mxu0 %v527
        %v529 = vpop.f32.mrf.mxu0
        %v530 = vadd.f32 %v490, %v529
        %v531 = vand.u32 %v366, 4294901760
        %v532 = vsub.f32 %v366, %v531
        %v533 = vand.u32 %v532, 4294901760
        %534 = vmatmul.f32.gmra.mxu0 %v533
        %v535 = vpop.f32.mrf.mxu0
        %v536 = vadd.f32 %v495, %v535
        %v537 = vand.u32 %v369, 4294901760
        %v538 = vsub.f32 %v369, %v537
        %v539 = vand.u32 %v538, 4294901760
        %540 = vmatmul.f32.gmra.mxu0 %v539
        %v541 = vpop.f32.mrf.mxu0
        %v542 = vadd.f32 %v500, %v541
        %543 = vdwg.mxu0
        %544 = vmatpush.msra.mxu0 0.0
        %545 = vmatpush.msra.mxu0 0.0
        %546 = vmatpush.msra.mxu0 0.0
        %547 = vmatpush.msra.mxu0 0.0
        %548 = vmatpush.msra.mxu0 0.0
        %549 = vmatpush.msra.mxu0 0.0
        %550 = vmatpush.msra.mxu0 0.0
        %551 = vmatpush.msra.mxu0 0.0
        %552 = vmatpush.msra.mxu0 0.0
        %553 = vmatpush.msra.mxu0 0.0
        %554 = vmatpush.msra.mxu0 0.0
        %555 = vmatpush.msra.mxu0 0.0
        %556 = vmatpush.msra.mxu0 0.0
        %557 = vmatpush.msra.mxu0 0.0
        %558 = vmatpush.msra.mxu0 0.0
        %v559 = vand.u32 %v373, 4294901760
        %v560 = vsub.f32 %v373, %v559
        %v561 = vand.u32 %v560, 4294901760
        %562 = vmatpush.msra.mxu0 %v561
        %v563 = vand.u32 %v360, 4294901760
        %564 = vmatmul.f32.gmra.mxu0 %v563
        %v565 = vpop.f32.mrf.mxu0
        %v566 = vadd.f32 %v524, %v565
        %v567 = vand.u32 %v363, 4294901760
        %568 = vmatmul.f32.gmra.mxu0 %v567
        %v569 = vpop.f32.mrf.mxu0
        %v570 = vadd.f32 %v530, %v569
        %v571 = vand.u32 %v366, 4294901760
        %572 = vmatmul.f32.gmra.mxu0 %v571
        %v573 = vpop.f32.mrf.mxu0
        %v574 = vadd.f32 %v536, %v573
        %v575 = vand.u32 %v369, 4294901760
        %576 = vmatmul.f32.gmra.mxu0 %v575
        %v577 = vpop.f32.mrf.mxu0
        %v578 = vadd.f32 %v542, %v577
        %579 = vdwg.mxu0
        %580 = vmatpush.msra.mxu0 0.0
        %581 = vmatpush.msra.mxu0 0.0
        %582 = vmatpush.msra.mxu0 0.0
        %583 = vmatpush.msra.mxu0 0.0
        %584 = vmatpush.msra.mxu0 0.0
        %585 = vmatpush.msra.mxu0 0.0
        %586 = vmatpush.msra.mxu0 0.0
        %587 = vmatpush.msra.mxu0 0.0
        %588 = vmatpush.msra.mxu0 0.0
        %589 = vmatpush.msra.mxu0 0.0
        %590 = vmatpush.msra.mxu0 0.0
        %591 = vmatpush.msra.mxu0 0.0
        %592 = vmatpush.msra.mxu0 0.0
        %593 = vmatpush.msra.mxu0 0.0
        %594 = vmatpush.msra.mxu0 0.0
        %v595 = vand.u32 %v373, 4294901760
        %596 = vmatpush.msra.mxu0 %v595
        %v597 = vand.u32 %v360, 4294901760
        %598 = vmatmul.f32.gmra.mxu0 %v597
        %v599 = vpop.f32.mrf.mxu0
        %v600 = vadd.f32 %v566, %v599
        %v601 = vand.u32 %v363, 4294901760
        %602 = vmatmul.f32.gmra.mxu0 %v601
        %v603 = vpop.f32.mrf.mxu0
        %v604 = vadd.f32 %v570, %v603
        %v605 = vand.u32 %v366, 4294901760
        %606 = vmatmul.f32.gmra.mxu0 %v605
        %v607 = vpop.f32.mrf.mxu0
        %v608 = vadd.f32 %v574, %v607
        %v609 = vand.u32 %v369, 4294901760
        %610 = vmatmul.f32.gmra.mxu0 %v609
        %v611 = vpop.f32.mrf.mxu0
        %v612 = vadd.f32 %v578, %v611
        %613 = vdwg.mxu0
        %v614 = vand.u32 2147483647, %v600
        %vm615 = vcmp.le.f32.partialorder %v614, 0.7853982
        %vm616 = vcmp.lt.s32.totalorder %v600, 0
        %v617 = vand.u32 %v600, 2139095040
        %v618 = vshrl.u32 %v617, 23
        %v619 = vsub.s32 %v618, 127
        %v620 = vand.u32 2147483647, %v600
        %v621 = vand.u32 %v620, 8388607
        %v622 = vor.u32 %v621, 8388608
        %v623 = vsub.s32 0, %v622
        %v624 = vadd.s32 %v619, 1
        %vm625 = vcmp.gt.s32.totalorder %v624, 0
        %v626 = vsel %vm625, %v624, 0
        %v627 = vshrl.u32 %v626, 5
        %v628 = vand.u32 %v626, 31
        %v629 = vsub.s32 32, %v628
        %v630 = vshrl.u32 683565275, %v629
        %v631 = vshll.u32 683565275, %v628
        %v632 = vshrl.u32 2475754826, %v629
        %v633 = vor.u32 %v631, %v632
        %v634 = vshll.u32 2475754826, %v628
        %v635 = vshrl.u32 2131351028, %v629
        %v636 = vor.u32 %v634, %v635
        %v637 = vshll.u32 2131351028, %v628
        %v638 = vshrl.u32 2102212464, %v629
        %v639 = vor.u32 %v637, %v638
        %v640 = vshll.u32 2102212464, %v628
        %v641 = vshrl.u32 920167782, %v629
        %v642 = vor.u32 %v640, %v641
        %v643 = vshll.u32 920167782, %v628
        %v644 = vshrl.u32 1326507024, %v629
        %v645 = vor.u32 %v643, %v644
        %vm646 = vcmp.lt.s32.totalorder %v627, 1
        %vm647 = vcmp.lt.s32.totalorder %v627, 2
        %vm648 = vcmp.lt.s32.totalorder %v627, 3
        %vm649 = vcmp.lt.s32.totalorder %v627, 4
        %v650 = vsel %vm646, %v630, %v633
        %v651 = vsel %vm649, %v639, 2102212464
        %v652 = vsel %vm648, %v636, %v651
        %v653 = vsel %vm647, %v650, %v652
        %v654 = vsel %vm646, %v633, %v636
        %v655 = vsel %vm649, %v642, 920167782
        %v656 = vsel %vm648, %v639, %v655
        %v657 = vsel %vm647, %v654, %v656
        %v658 = vsel %vm646, %v636, %v639
        %v659 = vsel %vm649, %v645, 1326507024
        %v660 = vsel %vm648, %v642, %v659
        %v661 = vsel %vm647, %v658, %v660
        %v662 = vshll.u32 %v622, 8
        %v663 = vand.u32 %v662, 65535
        %v664 = vshrl.u32 %v662, 16
        %v665 = vand.u32 %v661, 65535
        %v666 = vshrl.u32 %v661, 16
        %v667 = vmul.u32 %v663, %v665
        %v668 = vmul.u32 %v663, %v666
        %v669 = vmul.u32 %v664, %v665
        %v670 = vmul.u32 %v664, %v666
        %v671 = vshll.u32 %v668, 16
        %v672 = vshrl.u32 %v668, 16
        %v673 = vshll.u32 %v669, 16
        %v674 = vshrl.u32 %v669, 16
        %vm675 = vc.u32 %v667, %v671
        %v676 = vsel %vm675, 1, 0
        %v677 = vadd.s32 %v667, %v671
        %v678 = vadd.s32 %v670, %v676
        %vm679 = vc.u32 %v677, %v673
        %v680 = vsel %vm679, 1, 0
        %v681 = vadd.s32 %v677, %v673
        %v682 = vadd.s32 %v678, %v680
        %v683 = vadd.s32 %v682, %v672
        %v684 = vadd.s32 %v683, %v674
        %v685 = vand.u32 %v662, 65535
        %v686 = vshrl.u32 %v662, 16
        %v687 = vand.u32 %v657, 65535
        %v688 = vshrl.u32 %v657, 16
        %v689 = vmul.u32 %v685, %v687
        %v690 = vmul.u32 %v685, %v688
        %v691 = vmul.u32 %v686, %v687
        %v692 = vmul.u32 %v686, %v688
        %v693 = vshll.u32 %v690, 16
        %v694 = vshrl.u32 %v690, 16
        %v695 = vshll.u32 %v691, 16
        %v696 = vshrl.u32 %v691, 16
        %vm697 = vc.u32 %v689, %v693
        %v698 = vsel %vm697, 1, 0
        %v699 = vadd.s32 %v689, %v693
        %v700 = vadd.s32 %v692, %v698
        %vm701 = vc.u32 %v699, %v695
        %v702 = vsel %vm701, 1, 0
        %v703 = vadd.s32 %v699, %v695
        %v704 = vadd.s32 %v700, %v702
        %v705 = vadd.s32 %v704, %v694
        %v706 = vadd.s32 %v705, %v696
        %v707 = vmul.u32 %v662, %v653
        %v708 = vadd.s32 %v684, %v703
        %vm709 = vc.u32 %v684, %v703
        %v710 = vadd.s32 %v706, 1
        %v711 = vsel %vm709, %v710, %v706
        %v712 = vadd.s32 %v707, %v711
        %v713 = vadd.s32 %v712, 536870912
        %v714 = vshrl.u32 %v713, 30
        %v715 = vshll.u32 %v714, 30
        %v716 = vsub.s32 %v712, %v715
        %vm717 = vcmp.lt.s32.totalorder %v716, 0
        %v718 = vsub.s32 0, %v716
        %v719 = vsel %vm717, %v718, %v716
        %v720 = vclz %v719
        %v721 = vsub.s32 %v720, 2
        %vm722 = vcmp.gt.s32.totalorder 0, %v721
        %v723 = vsel %vm722, 0, %v721
        %v724 = vsub.s32 32, %v723
        %v725 = vshll.u32 %v716, %v723
        %v726 = vshrl.u32 %v708, %v724
        %v727 = vor.u32 %v725, %v726
        %v728 = vsub.s32 4294967266, %v723
        %v729 = vadd.s32 %v728, 127
        %v730 = vshll.u32 %v729, 23
        %v731 = vor.u32 4788187, %v730
        %v732 = vand.u32 2147483647, %v731
        %v734 = vcvt.s32.f32 %v727
        %v735 = vmul.f32 %v734, %v732
        %v736 = vxor.u32 %v735, 2147483648
        %v737 = vsel %vm616, %v736, %v735
        %v738 = vsub.s32 4, %v714
        %v739 = vsel %vm616, %v738, %v714
        %v740 = vsel %vm615, %v600, %v737
        %v741 = vsel %vm615, 0, %v739
        %v742 = vmul.f32 %v740, %v740
        %v743 = vmul.f32 %v742, -0.001358992
        %v744 = vadd.f32 %v743, 0.041655596
        %v745 = vmul.f32 %v742, %v744
        %v746 = vadd.f32 %v745, -0.4999988
        %v747 = vmul.f32 %v742, %v746
        %v748 = vadd.f32 1.0, %v747
        %v749 = vmul.f32 %v740, %v740
        %v750 = vmul.f32 %v749, -0.00019511016
        %v751 = vadd.f32 %v750, 0.008332121
        %v752 = vmul.f32 %v749, %v751
        %v753 = vadd.f32 %v752, -0.16666654
        %v754 = vmul.f32 %v749, %v753
        %v755 = vadd.f32 %v754, 1.0
        %v756 = vmul.f32 %v755, %v740
        %vm757 = vweird.f32 %v600
        %v758 = vadd.s32 %v741, 3
        %v759 = vand.u32 %v758, 3
        %vm760 = vcmp.lt.s32.totalorder %v759, 2
        %vm761 = vcmp.eq.s32.totalorder %v759, 0
        %v762 = vxor.u32 %v756, 2147483648
        %v763 = vsel %vm761, %v748, %v762
        %vm764 = vcmp.eq.s32.totalorder %v759, 2
        %v765 = vxor.u32 %v748, 2147483648
        %v766 = vsel %vm764, %v765, %v756
        %v767 = vsel %vm760, %v763, %v766
        %v768 = vsel %vm757, nan, %v767
        %v769 = vand.u32 2147483647, %v604
        %vm770 = vcmp.le.f32.partialorder %v769, 0.7853982
        %vm771 = vcmp.lt.s32.totalorder %v604, 0
        %v772 = vand.u32 %v604, 2139095040
        %v773 = vshrl.u32 %v772, 23
        %v774 = vsub.s32 %v773, 127
        %v775 = vand.u32 2147483647, %v604
        %v776 = vand.u32 %v775, 8388607
        %v777 = vor.u32 %v776, 8388608
        %v778 = vsub.s32 0, %v777
        %v779 = vadd.s32 %v774, 1
        %vm780 = vcmp.gt.s32.totalorder %v779, 0
        %v781 = vsel %vm780, %v779, 0
        %v782 = vshrl.u32 %v781, 5
        %v783 = vand.u32 %v781, 31
        %v784 = vsub.s32 32, %v783
        %v785 = vshrl.u32 683565275, %v784
        %v786 = vshll.u32 683565275, %v783
        %v787 = vshrl.u32 2475754826, %v784
        %v788 = vor.u32 %v786, %v787
        %v789 = vshll.u32 2475754826, %v783
        %v790 = vshrl.u32 2131351028, %v784
        %v791 = vor.u32 %v789, %v790
        %v792 = vshll.u32 2131351028, %v783
        %v793 = vshrl.u32 2102212464, %v784
        %v794 = vor.u32 %v792, %v793
        %v795 = vshll.u32 2102212464, %v783
        %v796 = vshrl.u32 920167782, %v784
        %v797 = vor.u32 %v795, %v796
        %v798 = vshll.u32 920167782, %v783
        %v799 = vshrl.u32 1326507024, %v784
        %v800 = vor.u32 %v798, %v799
        %vm801 = vcmp.lt.s32.totalorder %v782, 1
        %vm802 = vcmp.lt.s32.totalorder %v782, 2
        %vm803 = vcmp.lt.s32.totalorder %v782, 3
        %vm804 = vcmp.lt.s32.totalorder %v782, 4
        %v805 = vsel %vm801, %v785, %v788
        %v806 = vsel %vm804, %v794, 2102212464
        %v807 = vsel %vm803, %v791, %v806
        %v808 = vsel %vm802, %v805, %v807
        %v809 = vsel %vm801, %v788, %v791
        %v810 = vsel %vm804, %v797, 920167782
        %v811 = vsel %vm803, %v794, %v810
        %v812 = vsel %vm802, %v809, %v811
        %v813 = vsel %vm801, %v791, %v794
        %v814 = vsel %vm804, %v800, 1326507024
        %v815 = vsel %vm803, %v797, %v814
        %v816 = vsel %vm802, %v813, %v815
        %v817 = vshll.u32 %v777, 8
        %v818 = vand.u32 %v817, 65535
        %v819 = vshrl.u32 %v817, 16
        %v820 = vand.u32 %v816, 65535
        %v821 = vshrl.u32 %v816, 16
        %v822 = vmul.u32 %v818, %v820
        %v823 = vmul.u32 %v818, %v821
        %v824 = vmul.u32 %v819, %v820
        %v825 = vmul.u32 %v819, %v821
        %v826 = vshll.u32 %v823, 16
        %v827 = vshrl.u32 %v823, 16
        %v828 = vshll.u32 %v824, 16
        %v829 = vshrl.u32 %v824, 16
        %vm830 = vc.u32 %v822, %v826
        %v831 = vsel %vm830, 1, 0
        %v832 = vadd.s32 %v822, %v826
        %v833 = vadd.s32 %v825, %v831
        %vm834 = vc.u32 %v832, %v828
        %v835 = vsel %vm834, 1, 0
        %v836 = vadd.s32 %v832, %v828
        %v837 = vadd.s32 %v833, %v835
        %v838 = vadd.s32 %v837, %v827
        %v839 = vadd.s32 %v838, %v829
        %v840 = vand.u32 %v817, 65535
        %v841 = vshrl.u32 %v817, 16
        %v842 = vand.u32 %v812, 65535
        %v843 = vshrl.u32 %v812, 16
        %v844 = vmul.u32 %v840, %v842
        %v845 = vmul.u32 %v840, %v843
        %v846 = vmul.u32 %v841, %v842
        %v847 = vmul.u32 %v841, %v843
        %v848 = vshll.u32 %v845, 16
        %v849 = vshrl.u32 %v845, 16
        %v850 = vshll.u32 %v846, 16
        %v851 = vshrl.u32 %v846, 16
        %vm852 = vc.u32 %v844, %v848
        %v853 = vsel %vm852, 1, 0
        %v854 = vadd.s32 %v844, %v848
        %v855 = vadd.s32 %v847, %v853
        %vm856 = vc.u32 %v854, %v850
        %v857 = vsel %vm856, 1, 0
        %v858 = vadd.s32 %v854, %v850
        %v859 = vadd.s32 %v855, %v857
        %v860 = vadd.s32 %v859, %v849
        %v861 = vadd.s32 %v860, %v851
        %v862 = vmul.u32 %v817, %v808
        %v863 = vadd.s32 %v839, %v858
        %vm864 = vc.u32 %v839, %v858
        %v865 = vadd.s32 %v861, 1
        %v866 = vsel %vm864, %v865, %v861
        %v867 = vadd.s32 %v862, %v866
        %v868 = vadd.s32 %v867, 536870912
        %v869 = vshrl.u32 %v868, 30
        %v870 = vshll.u32 %v869, 30
        %v871 = vsub.s32 %v867, %v870
        %vm872 = vcmp.lt.s32.totalorder %v871, 0
        %v873 = vsub.s32 0, %v871
        %v874 = vsel %vm872, %v873, %v871
        %v875 = vclz %v874
        %v876 = vsub.s32 %v875, 2
        %vm877 = vcmp.gt.s32.totalorder 0, %v876
        %v878 = vsel %vm877, 0, %v876
        %v879 = vsub.s32 32, %v878
        %v880 = vshll.u32 %v871, %v878
        %v881 = vshrl.u32 %v863, %v879
        %v882 = vor.u32 %v880, %v881
        %v883 = vsub.s32 4294967266, %v878
        %v884 = vadd.s32 %v883, 127
        %v885 = vshll.u32 %v884, 23
        %v886 = vor.u32 4788187, %v885
        %v887 = vand.u32 2147483647, %v886
        %v889 = vcvt.s32.f32 %v882
        %v890 = vmul.f32 %v889, %v887
        %v891 = vxor.u32 %v890, 2147483648
        %v892 = vsel %vm771, %v891, %v890
        %v893 = vsub.s32 4, %v869
        %v894 = vsel %vm771, %v893, %v869
        %v895 = vsel %vm770, %v604, %v892
        %v896 = vsel %vm770, 0, %v894
        %v897 = vmul.f32 %v895, %v895
        %v898 = vmul.f32 %v897, -0.001358992
        %v899 = vadd.f32 %v898, 0.041655596
        %v900 = vmul.f32 %v897, %v899
        %v901 = vadd.f32 %v900, -0.4999988
        %v902 = vmul.f32 %v897, %v901
        %v903 = vadd.f32 1.0, %v902
        %v904 = vmul.f32 %v895, %v895
        %v905 = vmul.f32 %v904, -0.00019511016
        %v906 = vadd.f32 %v905, 0.008332121
        %v907 = vmul.f32 %v904, %v906
        %v908 = vadd.f32 %v907, -0.16666654
        %v909 = vmul.f32 %v904, %v908
        %v910 = vadd.f32 %v909, 1.0
        %v911 = vmul.f32 %v910, %v895
        %vm912 = vweird.f32 %v604
        %v913 = vadd.s32 %v896, 3
        %v914 = vand.u32 %v913, 3
        %vm915 = vcmp.lt.s32.totalorder %v914, 2
        %vm916 = vcmp.eq.s32.totalorder %v914, 0
        %v917 = vxor.u32 %v911, 2147483648
        %v918 = vsel %vm916, %v903, %v917
        %vm919 = vcmp.eq.s32.totalorder %v914, 2
        %v920 = vxor.u32 %v903, 2147483648
        %v921 = vsel %vm919, %v920, %v911
        %v922 = vsel %vm915, %v918, %v921
        %v923 = vsel %vm912, nan, %v922
        %v924 = vand.u32 2147483647, %v608
        %vm925 = vcmp.le.f32.partialorder %v924, 0.7853982
        %vm926 = vcmp.lt.s32.totalorder %v608, 0
        %v927 = vand.u32 %v608, 2139095040
        %v928 = vshrl.u32 %v927, 23
        %v929 = vsub.s32 %v928, 127
        %v930 = vand.u32 2147483647, %v608
        %v931 = vand.u32 %v930, 8388607
        %v932 = vor.u32 %v931, 8388608
        %v933 = vsub.s32 0, %v932
        %v934 = vadd.s32 %v929, 1
        %vm935 = vcmp.gt.s32.totalorder %v934, 0
        %v936 = vsel %vm935, %v934, 0
        %v937 = vshrl.u32 %v936, 5
        %v938 = vand.u32 %v936, 31
        %v939 = vsub.s32 32, %v938
        %v940 = vshrl.u32 683565275, %v939
        %v941 = vshll.u32 683565275, %v938
        %v942 = vshrl.u32 2475754826, %v939
        %v943 = vor.u32 %v941, %v942
        %v944 = vshll.u32 2475754826, %v938
        %v945 = vshrl.u32 2131351028, %v939
        %v946 = vor.u32 %v944, %v945
        %v947 = vshll.u32 2131351028, %v938
        %v948 = vshrl.u32 2102212464, %v939
        %v949 = vor.u32 %v947, %v948
        %v950 = vshll.u32 2102212464, %v938
        %v951 = vshrl.u32 920167782, %v939
        %v952 = vor.u32 %v950, %v951
        %v953 = vshll.u32 920167782, %v938
        %v954 = vshrl.u32 1326507024, %v939
        %v955 = vor.u32 %v953, %v954
        %vm956 = vcmp.lt.s32.totalorder %v937, 1
        %vm957 = vcmp.lt.s32.totalorder %v937, 2
        %vm958 = vcmp.lt.s32.totalorder %v937, 3
        %vm959 = vcmp.lt.s32.totalorder %v937, 4
        %v960 = vsel %vm956, %v940, %v943
        %v961 = vsel %vm959, %v949, 2102212464
        %v962 = vsel %vm958, %v946, %v961
        %v963 = vsel %vm957, %v960, %v962
        %v964 = vsel %vm956, %v943, %v946
        %v965 = vsel %vm959, %v952, 920167782
        %v966 = vsel %vm958, %v949, %v965
        %v967 = vsel %vm957, %v964, %v966
        %v968 = vsel %vm956, %v946, %v949
        %v969 = vsel %vm959, %v955, 1326507024
        %v970 = vsel %vm958, %v952, %v969
        %v971 = vsel %vm957, %v968, %v970
        %v972 = vshll.u32 %v932, 8
        %v973 = vand.u32 %v972, 65535
        %v974 = vshrl.u32 %v972, 16
        %v975 = vand.u32 %v971, 65535
        %v976 = vshrl.u32 %v971, 16
        %v977 = vmul.u32 %v973, %v975
        %v978 = vmul.u32 %v973, %v976
        %v979 = vmul.u32 %v974, %v975
        %v980 = vmul.u32 %v974, %v976
        %v981 = vshll.u32 %v978, 16
        %v982 = vshrl.u32 %v978, 16
        %v983 = vshll.u32 %v979, 16
        %v984 = vshrl.u32 %v979, 16
        %vm985 = vc.u32 %v977, %v981
        %v986 = vsel %vm985, 1, 0
        %v987 = vadd.s32 %v977, %v981
        %v988 = vadd.s32 %v980, %v986
        %vm989 = vc.u32 %v987, %v983
        %v990 = vsel %vm989, 1, 0
        %v991 = vadd.s32 %v987, %v983
        %v992 = vadd.s32 %v988, %v990
        %v993 = vadd.s32 %v992, %v982
        %v994 = vadd.s32 %v993, %v984
        %v995 = vand.u32 %v972, 65535
        %v996 = vshrl.u32 %v972, 16
        %v997 = vand.u32 %v967, 65535
        %v998 = vshrl.u32 %v967, 16
        %v999 = vmul.u32 %v995, %v997
        %v1000 = vmul.u32 %v995, %v998
        %v1001 = vmul.u32 %v996, %v997
        %v1002 = vmul.u32 %v996, %v998
        %v1003 = vshll.u32 %v1000, 16
        %v1004 = vshrl.u32 %v1000, 16
        %v1005 = vshll.u32 %v1001, 16
        %v1006 = vshrl.u32 %v1001, 16
        %vm1007 = vc.u32 %v999, %v1003
        %v1008 = vsel %vm1007, 1, 0
        %v1009 = vadd.s32 %v999, %v1003
        %v1010 = vadd.s32 %v1002, %v1008
        %vm1011 = vc.u32 %v1009, %v1005
        %v1012 = vsel %vm1011, 1, 0
        %v1013 = vadd.s32 %v1009, %v1005
        %v1014 = vadd.s32 %v1010, %v1012
        %v1015 = vadd.s32 %v1014, %v1004
        %v1016 = vadd.s32 %v1015, %v1006
        %v1017 = vmul.u32 %v972, %v963
        %v1018 = vadd.s32 %v994, %v1013
        %vm1019 = vc.u32 %v994, %v1013
        %v1020 = vadd.s32 %v1016, 1
        %v1021 = vsel %vm1019, %v1020, %v1016
        %v1022 = vadd.s32 %v1017, %v1021
        %v1023 = vadd.s32 %v1022, 536870912
        %v1024 = vshrl.u32 %v1023, 30
        %v1025 = vshll.u32 %v1024, 30
        %v1026 = vsub.s32 %v1022, %v1025
        %vm1027 = vcmp.lt.s32.totalorder %v1026, 0
        %v1028 = vsub.s32 0, %v1026
        %v1029 = vsel %vm1027, %v1028, %v1026
        %v1030 = vclz %v1029
        %v1031 = vsub.s32 %v1030, 2
        %vm1032 = vcmp.gt.s32.totalorder 0, %v1031
        %v1033 = vsel %vm1032, 0, %v1031
        %v1034 = vsub.s32 32, %v1033
        %v1035 = vshll.u32 %v1026, %v1033
        %v1036 = vshrl.u32 %v1018, %v1034
        %v1037 = vor.u32 %v1035, %v1036
        %v1038 = vsub.s32 4294967266, %v1033
        %v1039 = vadd.s32 %v1038, 127
        %v1040 = vshll.u32 %v1039, 23
        %v1041 = vor.u32 4788187, %v1040
        %v1042 = vand.u32 2147483647, %v1041
        %v1044 = vcvt.s32.f32 %v1037
        %v1045 = vmul.f32 %v1044, %v1042
        %v1046 = vxor.u32 %v1045, 2147483648
        %v1047 = vsel %vm926, %v1046, %v1045
        %v1048 = vsub.s32 4, %v1024
        %v1049 = vsel %vm926, %v1048, %v1024
        %v1050 = vsel %vm925, %v608, %v1047
        %v1051 = vsel %vm925, 0, %v1049
        %v1052 = vmul.f32 %v1050, %v1050
        %v1053 = vmul.f32 %v1052, -0.001358992
        %v1054 = vadd.f32 %v1053, 0.041655596
        %v1055 = vmul.f32 %v1052, %v1054
        %v1056 = vadd.f32 %v1055, -0.4999988
        %v1057 = vmul.f32 %v1052, %v1056
        %v1058 = vadd.f32 1.0, %v1057
        %v1059 = vmul.f32 %v1050, %v1050
        %v1060 = vmul.f32 %v1059, -0.00019511016
        %v1061 = vadd.f32 %v1060, 0.008332121
        %v1062 = vmul.f32 %v1059, %v1061
        %v1063 = vadd.f32 %v1062, -0.16666654
        %v1064 = vmul.f32 %v1059, %v1063
        %v1065 = vadd.f32 %v1064, 1.0
        %v1066 = vmul.f32 %v1065, %v1050
        %vm1067 = vweird.f32 %v608
        %v1068 = vadd.s32 %v1051, 3
        %v1069 = vand.u32 %v1068, 3
        %vm1070 = vcmp.lt.s32.totalorder %v1069, 2
        %vm1071 = vcmp.eq.s32.totalorder %v1069, 0
        %v1072 = vxor.u32 %v1066, 2147483648
        %v1073 = vsel %vm1071, %v1058, %v1072
        %vm1074 = vcmp.eq.s32.totalorder %v1069, 2
        %v1075 = vxor.u32 %v1058, 2147483648
        %v1076 = vsel %vm1074, %v1075, %v1066
        %v1077 = vsel %vm1070, %v1073, %v1076
        %v1078 = vsel %vm1067, nan, %v1077
        %v1079 = vand.u32 2147483647, %v612
        %vm1080 = vcmp.le.f32.partialorder %v1079, 0.7853982
        %vm1081 = vcmp.lt.s32.totalorder %v612, 0
        %v1082 = vand.u32 %v612, 2139095040
        %v1083 = vshrl.u32 %v1082, 23
        %v1084 = vsub.s32 %v1083, 127
        %v1085 = vand.u32 2147483647, %v612
        %v1086 = vand.u32 %v1085, 8388607
        %v1087 = vor.u32 %v1086, 8388608
        %v1088 = vsub.s32 0, %v1087
        %v1089 = vadd.s32 %v1084, 1
        %vm1090 = vcmp.gt.s32.totalorder %v1089, 0
        %v1091 = vsel %vm1090, %v1089, 0
        %v1092 = vshrl.u32 %v1091, 5
        %v1093 = vand.u32 %v1091, 31
        %v1094 = vsub.s32 32, %v1093
        %v1095 = vshrl.u32 683565275, %v1094
        %v1096 = vshll.u32 683565275, %v1093
        %v1097 = vshrl.u32 2475754826, %v1094
        %v1098 = vor.u32 %v1096, %v1097
        %v1099 = vshll.u32 2475754826, %v1093
        %v1100 = vshrl.u32 2131351028, %v1094
        %v1101 = vor.u32 %v1099, %v1100
        %v1102 = vshll.u32 2131351028, %v1093
        %v1103 = vshrl.u32 2102212464, %v1094
        %v1104 = vor.u32 %v1102, %v1103
        %v1105 = vshll.u32 2102212464, %v1093
        %v1106 = vshrl.u32 920167782, %v1094
        %v1107 = vor.u32 %v1105, %v1106
        %v1108 = vshll.u32 920167782, %v1093
        %v1109 = vshrl.u32 1326507024, %v1094
        %v1110 = vor.u32 %v1108, %v1109
        %vm1111 = vcmp.lt.s32.totalorder %v1092, 1
        %vm1112 = vcmp.lt.s32.totalorder %v1092, 2
        %vm1113 = vcmp.lt.s32.totalorder %v1092, 3
        %vm1114 = vcmp.lt.s32.totalorder %v1092, 4
        %v1115 = vsel %vm1111, %v1095, %v1098
        %v1116 = vsel %vm1114, %v1104, 2102212464
        %v1117 = vsel %vm1113, %v1101, %v1116
        %v1118 = vsel %vm1112, %v1115, %v1117
        %v1119 = vsel %vm1111, %v1098, %v1101
        %v1120 = vsel %vm1114, %v1107, 920167782
        %v1121 = vsel %vm1113, %v1104, %v1120
        %v1122 = vsel %vm1112, %v1119, %v1121
        %v1123 = vsel %vm1111, %v1101, %v1104
        %v1124 = vsel %vm1114, %v1110, 1326507024
        %v1125 = vsel %vm1113, %v1107, %v1124
        %v1126 = vsel %vm1112, %v1123, %v1125
        %v1127 = vshll.u32 %v1087, 8
        %v1128 = vand.u32 %v1127, 65535
        %v1129 = vshrl.u32 %v1127, 16
        %v1130 = vand.u32 %v1126, 65535
        %v1131 = vshrl.u32 %v1126, 16
        %v1132 = vmul.u32 %v1128, %v1130
        %v1133 = vmul.u32 %v1128, %v1131
        %v1134 = vmul.u32 %v1129, %v1130
        %v1135 = vmul.u32 %v1129, %v1131
        %v1136 = vshll.u32 %v1133, 16
        %v1137 = vshrl.u32 %v1133, 16
        %v1138 = vshll.u32 %v1134, 16
        %v1139 = vshrl.u32 %v1134, 16
        %vm1140 = vc.u32 %v1132, %v1136
        %v1141 = vsel %vm1140, 1, 0
        %v1142 = vadd.s32 %v1132, %v1136
        %v1143 = vadd.s32 %v1135, %v1141
        %vm1144 = vc.u32 %v1142, %v1138
        %v1145 = vsel %vm1144, 1, 0
        %v1146 = vadd.s32 %v1142, %v1138
        %v1147 = vadd.s32 %v1143, %v1145
        %v1148 = vadd.s32 %v1147, %v1137
        %v1149 = vadd.s32 %v1148, %v1139
        %v1150 = vand.u32 %v1127, 65535
        %v1151 = vshrl.u32 %v1127, 16
        %v1152 = vand.u32 %v1122, 65535
        %v1153 = vshrl.u32 %v1122, 16
        %v1154 = vmul.u32 %v1150, %v1152
        %v1155 = vmul.u32 %v1150, %v1153
        %v1156 = vmul.u32 %v1151, %v1152
        %v1157 = vmul.u32 %v1151, %v1153
        %v1158 = vshll.u32 %v1155, 16
        %v1159 = vshrl.u32 %v1155, 16
        %v1160 = vshll.u32 %v1156, 16
        %v1161 = vshrl.u32 %v1156, 16
        %vm1162 = vc.u32 %v1154, %v1158
        %v1163 = vsel %vm1162, 1, 0
        %v1164 = vadd.s32 %v1154, %v1158
        %v1165 = vadd.s32 %v1157, %v1163
        %vm1166 = vc.u32 %v1164, %v1160
        %v1167 = vsel %vm1166, 1, 0
        %v1168 = vadd.s32 %v1164, %v1160
        %v1169 = vadd.s32 %v1165, %v1167
        %v1170 = vadd.s32 %v1169, %v1159
        %v1171 = vadd.s32 %v1170, %v1161
        %v1172 = vmul.u32 %v1127, %v1118
        %v1173 = vadd.s32 %v1149, %v1168
        %vm1174 = vc.u32 %v1149, %v1168
        %v1175 = vadd.s32 %v1171, 1
        %v1176 = vsel %vm1174, %v1175, %v1171
        %v1177 = vadd.s32 %v1172, %v1176
        %v1178 = vadd.s32 %v1177, 536870912
        %v1179 = vshrl.u32 %v1178, 30
        %v1180 = vshll.u32 %v1179, 30
        %v1181 = vsub.s32 %v1177, %v1180
        %vm1182 = vcmp.lt.s32.totalorder %v1181, 0
        %v1183 = vsub.s32 0, %v1181
        %v1184 = vsel %vm1182, %v1183, %v1181
        %v1185 = vclz %v1184
        %v1186 = vsub.s32 %v1185, 2
        %vm1187 = vcmp.gt.s32.totalorder 0, %v1186
        %v1188 = vsel %vm1187, 0, %v1186
        %v1189 = vsub.s32 32, %v1188
        %v1190 = vshll.u32 %v1181, %v1188
        %v1191 = vshrl.u32 %v1173, %v1189
        %v1192 = vor.u32 %v1190, %v1191
        %v1193 = vsub.s32 4294967266, %v1188
        %v1194 = vadd.s32 %v1193, 127
        %v1195 = vshll.u32 %v1194, 23
        %v1196 = vor.u32 4788187, %v1195
        %v1197 = vand.u32 2147483647, %v1196
        %v1199 = vcvt.s32.f32 %v1192
        %v1200 = vmul.f32 %v1199, %v1197
        %v1201 = vxor.u32 %v1200, 2147483648
        %v1202 = vsel %vm1081, %v1201, %v1200
        %v1203 = vsub.s32 4, %v1179
        %v1204 = vsel %vm1081, %v1203, %v1179
        %v1205 = vsel %vm1080, %v612, %v1202
        %v1206 = vsel %vm1080, 0, %v1204
        %v1207 = vmul.f32 %v1205, %v1205
        %v1208 = vmul.f32 %v1207, -0.001358992
        %v1209 = vadd.f32 %v1208, 0.041655596
        %v1210 = vmul.f32 %v1207, %v1209
        %v1211 = vadd.f32 %v1210, -0.4999988
        %v1212 = vmul.f32 %v1207, %v1211
        %v1213 = vadd.f32 1.0, %v1212
        %v1214 = vmul.f32 %v1205, %v1205
        %v1215 = vmul.f32 %v1214, -0.00019511016
        %v1216 = vadd.f32 %v1215, 0.008332121
        %v1217 = vmul.f32 %v1214, %v1216
        %v1218 = vadd.f32 %v1217, -0.16666654
        %v1219 = vmul.f32 %v1214, %v1218
        %v1220 = vadd.f32 %v1219, 1.0
        %v1221 = vmul.f32 %v1220, %v1205
        %vm1222 = vweird.f32 %v612
        %v1223 = vadd.s32 %v1206, 3
        %v1224 = vand.u32 %v1223, 3
        %vm1225 = vcmp.lt.s32.totalorder %v1224, 2
        %vm1226 = vcmp.eq.s32.totalorder %v1224, 0
        %v1227 = vxor.u32 %v1221, 2147483648
        %v1228 = vsel %vm1226, %v1213, %v1227
        %vm1229 = vcmp.eq.s32.totalorder %v1224, 2
        %v1230 = vxor.u32 %v1213, 2147483648
        %v1231 = vsel %vm1229, %v1230, %v1221
        %v1232 = vsel %vm1225, %v1228, %v1231
        %v1233 = vsel %vm1222, nan, %v1232
        %v1234 = vld [vmem:[%s3] sm:$0xff]
        %v1235 = vld [vmem:[%s3 + $0x8] sm:$0xff]
        %v1236 = vld [vmem:[%s3 + $0x10] sm:$0xff]
        %v1237 = vld [vmem:[%s3 + $0x18] sm:$0xff]
        %v1238 = vld [vmem:[%s4] sm:$0xff]
        %v1239 = vld [vmem:[%s4 + $0x8] sm:$0xff]
        %v1240 = vld [vmem:[%s4 + $0x10] sm:$0xff]
        %v1241 = vld [vmem:[%s4 + $0x18] sm:$0xff]
        %1243 = vset.pattern.permute.xlu0 0
        %1244 = vperm.xlu0 %1243, %v1238
        %v1245 = vpop.permute.xlu0 %1244
        %1248 = vset.pattern.permute.xlu0 0
        %1249 = vperm.xlu0 %1248, %v1239
        %v1250 = vpop.permute.xlu0 %1249
        %1253 = vset.pattern.permute.xlu0 0
        %1254 = vperm.xlu0 %1253, %v1240
        %v1255 = vpop.permute.xlu0 %1254
        %1258 = vset.pattern.permute.xlu0 0
        %1259 = vperm.xlu0 %1258, %v1241
        %v1260 = vpop.permute.xlu0 %1259
        %vm1262 = vcmask 261120
        %v1264 = vsel %vm1262, %v1234, 0
        %v1267 = vsel %vm1262, %v1235, 0
        %v1270 = vsel %vm1262, %v1236, 0
        %v1273 = vsel %vm1262, %v1237, 0
        %1275 = vmatpush.msra.mxu0 0.0
        %1276 = vmatpush.msra.mxu0 0.0
        %1277 = vmatpush.msra.mxu0 0.0
        %1278 = vmatpush.msra.mxu0 0.0
        %1279 = vmatpush.msra.mxu0 0.0
        %1280 = vmatpush.msra.mxu0 0.0
        %1281 = vmatpush.msra.mxu0 0.0
        %1282 = vmatpush.msra.mxu0 0.0
        %1283 = vmatpush.msra.mxu0 0.0
        %1284 = vmatpush.msra.mxu0 0.0
        %1285 = vmatpush.msra.mxu0 0.0
        %1286 = vmatpush.msra.mxu0 0.0
        %v1287 = vand.u32 %v1233, 4294901760
        %1288 = vmatpush.msra.mxu0 %v1287
        %v1289 = vand.u32 %v1078, 4294901760
        %1290 = vmatpush.msra.mxu0 %v1289
        %v1291 = vand.u32 %v923, 4294901760
        %1292 = vmatpush.msra.mxu0 %v1291
        %v1293 = vand.u32 %v768, 4294901760
        %1294 = vmatpush.msra.mxu0 %v1293
        %v1295 = vand.u32 %v1264, 4294901760
        %v1296 = vsub.f32 %v1264, %v1295
        %v1297 = vand.u32 %v1296, 4294901760
        %v1298 = vsub.f32 %v1296, %v1297
        %v1299 = vand.u32 %v1298, 4294901760
        %1300 = vmatmul.f32.gmra.mxu0 %v1299
        %v1301 = vpop.f32.mrf.mxu0
        %v1302 = vadd.f32 %v1245, %v1301
        %v1303 = vand.u32 %v1267, 4294901760
        %v1304 = vsub.f32 %v1267, %v1303
        %v1305 = vand.u32 %v1304, 4294901760
        %v1306 = vsub.f32 %v1304, %v1305
        %v1307 = vand.u32 %v1306, 4294901760
        %1308 = vmatmul.f32.gmra.mxu0 %v1307
        %v1309 = vpop.f32.mrf.mxu0
        %v1310 = vadd.f32 %v1250, %v1309
        %v1311 = vand.u32 %v1270, 4294901760
        %v1312 = vsub.f32 %v1270, %v1311
        %v1313 = vand.u32 %v1312, 4294901760
        %v1314 = vsub.f32 %v1312, %v1313
        %v1315 = vand.u32 %v1314, 4294901760
        %1316 = vmatmul.f32.gmra.mxu0 %v1315
        %v1317 = vpop.f32.mrf.mxu0
        %v1318 = vadd.f32 %v1255, %v1317
        %v1319 = vand.u32 %v1273, 4294901760
        %v1320 = vsub.f32 %v1273, %v1319
        %v1321 = vand.u32 %v1320, 4294901760
        %v1322 = vsub.f32 %v1320, %v1321
        %v1323 = vand.u32 %v1322, 4294901760
        %1324 = vmatmul.f32.gmra.mxu0 %v1323
        %v1325 = vpop.f32.mrf.mxu0
        %v1326 = vadd.f32 %v1260, %v1325
        %1327 = vdwg.mxu0
        %1328 = vmatpush.msra.mxu0 0.0
        %1329 = vmatpush.msra.mxu0 0.0
        %1330 = vmatpush.msra.mxu0 0.0
        %1331 = vmatpush.msra.mxu0 0.0
        %1332 = vmatpush.msra.mxu0 0.0
        %1333 = vmatpush.msra.mxu0 0.0
        %1334 = vmatpush.msra.mxu0 0.0
        %1335 = vmatpush.msra.mxu0 0.0
        %1336 = vmatpush.msra.mxu0 0.0
        %1337 = vmatpush.msra.mxu0 0.0
        %1338 = vmatpush.msra.mxu0 0.0
        %1339 = vmatpush.msra.mxu0 0.0
        %v1340 = vand.u32 %v1233, 4294901760
        %v1341 = vsub.f32 %v1233, %v1340
        %v1342 = vand.u32 %v1341, 4294901760
        %v1343 = vsub.f32 %v1341, %v1342
        %v1344 = vand.u32 %v1343, 4294901760
        %1345 = vmatpush.msra.mxu0 %v1344
        %v1346 = vand.u32 %v1078, 4294901760
        %v1347 = vsub.f32 %v1078, %v1346
        %v1348 = vand.u32 %v1347, 4294901760
        %v1349 = vsub.f32 %v1347, %v1348
        %v1350 = vand.u32 %v1349, 4294901760
        %1351 = vmatpush.msra.mxu0 %v1350
        %v1352 = vand.u32 %v923, 4294901760
        %v1353 = vsub.f32 %v923, %v1352
        %v1354 = vand.u32 %v1353, 4294901760
        %v1355 = vsub.f32 %v1353, %v1354
        %v1356 = vand.u32 %v1355, 4294901760
        %1357 = vmatpush.msra.mxu0 %v1356
        %v1358 = vand.u32 %v768, 4294901760
        %v1359 = vsub.f32 %v768, %v1358
        %v1360 = vand.u32 %v1359, 4294901760
        %v1361 = vsub.f32 %v1359, %v1360
        %v1362 = vand.u32 %v1361, 4294901760
        %1363 = vmatpush.msra.mxu0 %v1362
        %v1364 = vand.u32 %v1264, 4294901760
        %1365 = vmatmul.f32.gmra.mxu0 %v1364
        %v1366 = vpop.f32.mrf.mxu0
        %v1367 = vadd.f32 %v1302, %v1366
        %v1368 = vand.u32 %v1267, 4294901760
        %1369 = vmatmul.f32.gmra.mxu0 %v1368
        %v1370 = vpop.f32.mrf.mxu0
        %v1371 = vadd.f32 %v1310, %v1370
        %v1372 = vand.u32 %v1270, 4294901760
        %1373 = vmatmul.f32.gmra.mxu0 %v1372
        %v1374 = vpop.f32.mrf.mxu0
        %v1375 = vadd.f32 %v1318, %v1374
        %v1376 = vand.u32 %v1273, 4294901760
        %1377 = vmatmul.f32.gmra.mxu0 %v1376
        %v1378 = vpop.f32.mrf.mxu0
        %v1379 = vadd.f32 %v1326, %v1378
        %1380 = vdwg.mxu0
        %1381 = vmatpush.msra.mxu0 0.0
        %1382 = vmatpush.msra.mxu0 0.0
        %1383 = vmatpush.msra.mxu0 0.0
        %1384 = vmatpush.msra.mxu0 0.0
        %1385 = vmatpush.msra.mxu0 0.0
        %1386 = vmatpush.msra.mxu0 0.0
        %1387 = vmatpush.msra.mxu0 0.0
        %1388 = vmatpush.msra.mxu0 0.0
        %1389 = vmatpush.msra.mxu0 0.0
        %1390 = vmatpush.msra.mxu0 0.0
        %1391 = vmatpush.msra.mxu0 0.0
        %1392 = vmatpush.msra.mxu0 0.0
        %v1393 = vand.u32 %v1233, 4294901760
        %v1394 = vsub.f32 %v1233, %v1393
        %1395 = vmatpush.msra.mxu0 %v1394
        %v1396 = vand.u32 %v1078, 4294901760
        %v1397 = vsub.f32 %v1078, %v1396
        %1398 = vmatpush.msra.mxu0 %v1397
        %v1399 = vand.u32 %v923, 4294901760
        %v1400 = vsub.f32 %v923, %v1399
        %1401 = vmatpush.msra.mxu0 %v1400
        %v1402 = vand.u32 %v768, 4294901760
        %v1403 = vsub.f32 %v768, %v1402
        %1404 = vmatpush.msra.mxu0 %v1403
        %v1405 = vand.u32 %v1264, 4294901760
        %v1406 = vsub.f32 %v1264, %v1405
        %1407 = vmatmul.f32.gmra.mxu0 %v1406
        %v1408 = vpop.f32.mrf.mxu0
        %v1409 = vadd.f32 %v1367, %v1408
        %v1410 = vand.u32 %v1267, 4294901760
        %v1411 = vsub.f32 %v1267, %v1410
        %1412 = vmatmul.f32.gmra.mxu0 %v1411
        %v1413 = vpop.f32.mrf.mxu0
        %v1414 = vadd.f32 %v1371, %v1413
        %v1415 = vand.u32 %v1270, 4294901760
        %v1416 = vsub.f32 %v1270, %v1415
        %1417 = vmatmul.f32.gmra.mxu0 %v1416
        %v1418 = vpop.f32.mrf.mxu0
        %v1419 = vadd.f32 %v1375, %v1418
        %v1420 = vand.u32 %v1273, 4294901760
        %v1421 = vsub.f32 %v1273, %v1420
        %1422 = vmatmul.f32.gmra.mxu0 %v1421
        %v1423 = vpop.f32.mrf.mxu0
        %v1424 = vadd.f32 %v1379, %v1423
        %1425 = vdwg.mxu0
        %1426 = vmatpush.msra.mxu0 0.0
        %1427 = vmatpush.msra.mxu0 0.0
        %1428 = vmatpush.msra.mxu0 0.0
        %1429 = vmatpush.msra.mxu0 0.0
        %1430 = vmatpush.msra.mxu0 0.0
        %1431 = vmatpush.msra.mxu0 0.0
        %1432 = vmatpush.msra.mxu0 0.0
        %1433 = vmatpush.msra.mxu0 0.0
        %1434 = vmatpush.msra.mxu0 0.0
        %1435 = vmatpush.msra.mxu0 0.0
        %1436 = vmatpush.msra.mxu0 0.0
        %1437 = vmatpush.msra.mxu0 0.0
        %v1438 = vand.u32 %v1233, 4294901760
        %1439 = vmatpush.msra.mxu0 %v1438
        %v1440 = vand.u32 %v1078, 4294901760
        %1441 = vmatpush.msra.mxu0 %v1440
        %v1442 = vand.u32 %v923, 4294901760
        %1443 = vmatpush.msra.mxu0 %v1442
        %v1444 = vand.u32 %v768, 4294901760
        %1445 = vmatpush.msra.mxu0 %v1444
        %v1446 = vand.u32 %v1264, 4294901760
        %v1447 = vsub.f32 %v1264, %v1446
        %v1448 = vand.u32 %v1447, 4294901760
        %1449 = vmatmul.f32.gmra.mxu0 %v1448
        %v1450 = vpop.f32.mrf.mxu0
        %v1451 = vadd.f32 %v1409, %v1450
        %v1452 = vand.u32 %v1267, 4294901760
        %v1453 = vsub.f32 %v1267, %v1452
        %v1454 = vand.u32 %v1453, 4294901760
        %1455 = vmatmul.f32.gmra.mxu0 %v1454
        %v1456 = vpop.f32.mrf.mxu0
        %v1457 = vadd.f32 %v1414, %v1456
        %v1458 = vand.u32 %v1270, 4294901760
        %v1459 = vsub.f32 %v1270, %v1458
        %v1460 = vand.u32 %v1459, 4294901760
        %1461 = vmatmul.f32.gmra.mxu0 %v1460
        %v1462 = vpop.f32.mrf.mxu0
        %v1463 = vadd.f32 %v1419, %v1462
        %v1464 = vand.u32 %v1273, 4294901760
        %v1465 = vsub.f32 %v1273, %v1464
        %v1466 = vand.u32 %v1465, 4294901760
        %1467 = vmatmul.f32.gmra.mxu0 %v1466
        %v1468 = vpop.f32.mrf.mxu0
        %v1469 = vadd.f32 %v1424, %v1468
        %1470 = vdwg.mxu0
        %1471 = vmatpush.msra.mxu0 0.0
        %1472 = vmatpush.msra.mxu0 0.0
        %1473 = vmatpush.msra.mxu0 0.0
        %1474 = vmatpush.msra.mxu0 0.0
        %1475 = vmatpush.msra.mxu0 0.0
        %1476 = vmatpush.msra.mxu0 0.0
        %1477 = vmatpush.msra.mxu0 0.0
        %1478 = vmatpush.msra.mxu0 0.0
        %1479 = vmatpush.msra.mxu0 0.0
        %1480 = vmatpush.msra.mxu0 0.0
        %1481 = vmatpush.msra.mxu0 0.0
        %1482 = vmatpush.msra.mxu0 0.0
        %v1483 = vand.u32 %v1233, 4294901760
        %v1484 = vsub.f32 %v1233, %v1483
        %v1485 = vand.u32 %v1484, 4294901760
        %1486 = vmatpush.msra.mxu0 %v1485
        %v1487 = vand.u32 %v1078, 4294901760
        %v1488 = vsub.f32 %v1078, %v1487
        %v1489 = vand.u32 %v1488, 4294901760
        %1490 = vmatpush.msra.mxu0 %v1489
        %v1491 = vand.u32 %v923, 4294901760
        %v1492 = vsub.f32 %v923, %v1491
        %v1493 = vand.u32 %v1492, 4294901760
        %1494 = vmatpush.msra.mxu0 %v1493
        %v1495 = vand.u32 %v768, 4294901760
        %v1496 = vsub.f32 %v768, %v1495
        %v1497 = vand.u32 %v1496, 4294901760
        %1498 = vmatpush.msra.mxu0 %v1497
        %v1499 = vand.u32 %v1264, 4294901760
        %1500 = vmatmul.f32.gmra.mxu0 %v1499
        %v1501 = vpop.f32.mrf.mxu0
        %v1502 = vadd.f32 %v1451, %v1501
        %v1503 = vand.u32 %v1267, 4294901760
        %1504 = vmatmul.f32.gmra.mxu0 %v1503
        %v1505 = vpop.f32.mrf.mxu0
        %v1506 = vadd.f32 %v1457, %v1505
        %v1507 = vand.u32 %v1270, 4294901760
        %1508 = vmatmul.f32.gmra.mxu0 %v1507
        %v1509 = vpop.f32.mrf.mxu0
        %v1510 = vadd.f32 %v1463, %v1509
        %v1511 = vand.u32 %v1273, 4294901760
        %1512 = vmatmul.f32.gmra.mxu0 %v1511
        %v1513 = vpop.f32.mrf.mxu0
        %v1514 = vadd.f32 %v1469, %v1513
        %1515 = vdwg.mxu0
        %1516 = vmatpush.msra.mxu0 0.0
        %1517 = vmatpush.msra.mxu0 0.0
        %1518 = vmatpush.msra.mxu0 0.0
        %1519 = vmatpush.msra.mxu0 0.0
        %1520 = vmatpush.msra.mxu0 0.0
        %1521 = vmatpush.msra.mxu0 0.0
        %1522 = vmatpush.msra.mxu0 0.0
        %1523 = vmatpush.msra.mxu0 0.0
        %1524 = vmatpush.msra.mxu0 0.0
        %1525 = vmatpush.msra.mxu0 0.0
        %1526 = vmatpush.msra.mxu0 0.0
        %1527 = vmatpush.msra.mxu0 0.0
        %v1528 = vand.u32 %v1233, 4294901760
        %1529 = vmatpush.msra.mxu0 %v1528
        %v1530 = vand.u32 %v1078, 4294901760
        %1531 = vmatpush.msra.mxu0 %v1530
        %v1532 = vand.u32 %v923, 4294901760
        %1533 = vmatpush.msra.mxu0 %v1532
        %v1534 = vand.u32 %v768, 4294901760
        %1535 = vmatpush.msra.mxu0 %v1534
        %v1536 = vand.u32 %v1264, 4294901760
        %1537 = vmatmul.f32.gmra.mxu0 %v1536
        %v1538 = vpop.f32.mrf.mxu0
        %v1539 = vadd.f32 %v1502, %v1538
        %v1540 = vand.u32 %v1267, 4294901760
        %1541 = vmatmul.f32.gmra.mxu0 %v1540
        %v1542 = vpop.f32.mrf.mxu0
        %v1543 = vadd.f32 %v1506, %v1542
        %v1544 = vand.u32 %v1270, 4294901760
        %1545 = vmatmul.f32.gmra.mxu0 %v1544
        %v1546 = vpop.f32.mrf.mxu0
        %v1547 = vadd.f32 %v1510, %v1546
        %v1548 = vand.u32 %v1273, 4294901760
        %1549 = vmatmul.f32.gmra.mxu0 %v1548
        %v1550 = vpop.f32.mrf.mxu0
        %v1551 = vadd.f32 %v1514, %v1550
        %1552 = vdwg.mxu0
        %v1553 = vand.u32 2147483647, %v1539
        %vm1554 = vcmp.le.f32.partialorder %v1553, 0.7853982
        %vm1555 = vcmp.lt.s32.totalorder %v1539, 0
        %v1556 = vand.u32 %v1539, 2139095040
        %v1557 = vshrl.u32 %v1556, 23
        %v1558 = vsub.s32 %v1557, 127
        %v1559 = vand.u32 2147483647, %v1539
        %v1560 = vand.u32 %v1559, 8388607
        %v1561 = vor.u32 %v1560, 8388608
        %v1562 = vsub.s32 0, %v1561
        %v1563 = vadd.s32 %v1558, 1
        %vm1564 = vcmp.gt.s32.totalorder %v1563, 0
        %v1565 = vsel %vm1564, %v1563, 0
        %v1566 = vshrl.u32 %v1565, 5
        %v1567 = vand.u32 %v1565, 31
        %v1568 = vsub.s32 32, %v1567
        %v1569 = vshrl.u32 683565275, %v1568
        %v1570 = vshll.u32 683565275, %v1567
        %v1571 = vshrl.u32 2475754826, %v1568
        %v1572 = vor.u32 %v1570, %v1571
        %v1573 = vshll.u32 2475754826, %v1567
        %v1574 = vshrl.u32 2131351028, %v1568
        %v1575 = vor.u32 %v1573, %v1574
        %v1576 = vshll.u32 2131351028, %v1567
        %v1577 = vshrl.u32 2102212464, %v1568
        %v1578 = vor.u32 %v1576, %v1577
        %v1579 = vshll.u32 2102212464, %v1567
        %v1580 = vshrl.u32 920167782, %v1568
        %v1581 = vor.u32 %v1579, %v1580
        %v1582 = vshll.u32 920167782, %v1567
        %v1583 = vshrl.u32 1326507024, %v1568
        %v1584 = vor.u32 %v1582, %v1583
        %vm1585 = vcmp.lt.s32.totalorder %v1566, 1
        %vm1586 = vcmp.lt.s32.totalorder %v1566, 2
        %vm1587 = vcmp.lt.s32.totalorder %v1566, 3
        %vm1588 = vcmp.lt.s32.totalorder %v1566, 4
        %v1589 = vsel %vm1585, %v1569, %v1572
        %v1590 = vsel %vm1588, %v1578, 2102212464
        %v1591 = vsel %vm1587, %v1575, %v1590
        %v1592 = vsel %vm1586, %v1589, %v1591
        %v1593 = vsel %vm1585, %v1572, %v1575
        %v1594 = vsel %vm1588, %v1581, 920167782
        %v1595 = vsel %vm1587, %v1578, %v1594
        %v1596 = vsel %vm1586, %v1593, %v1595
        %v1597 = vsel %vm1585, %v1575, %v1578
        %v1598 = vsel %vm1588, %v1584, 1326507024
        %v1599 = vsel %vm1587, %v1581, %v1598
        %v1600 = vsel %vm1586, %v1597, %v1599
        %v1601 = vshll.u32 %v1561, 8
        %v1602 = vand.u32 %v1601, 65535
        %v1603 = vshrl.u32 %v1601, 16
        %v1604 = vand.u32 %v1600, 65535
        %v1605 = vshrl.u32 %v1600, 16
        %v1606 = vmul.u32 %v1602, %v1604
        %v1607 = vmul.u32 %v1602, %v1605
        %v1608 = vmul.u32 %v1603, %v1604
        %v1609 = vmul.u32 %v1603, %v1605
        %v1610 = vshll.u32 %v1607, 16
        %v1611 = vshrl.u32 %v1607, 16
        %v1612 = vshll.u32 %v1608, 16
        %v1613 = vshrl.u32 %v1608, 16
        %vm1614 = vc.u32 %v1606, %v1610
        %v1615 = vsel %vm1614, 1, 0
        %v1616 = vadd.s32 %v1606, %v1610
        %v1617 = vadd.s32 %v1609, %v1615
        %vm1618 = vc.u32 %v1616, %v1612
        %v1619 = vsel %vm1618, 1, 0
        %v1620 = vadd.s32 %v1616, %v1612
        %v1621 = vadd.s32 %v1617, %v1619
        %v1622 = vadd.s32 %v1621, %v1611
        %v1623 = vadd.s32 %v1622, %v1613
        %v1624 = vand.u32 %v1601, 65535
        %v1625 = vshrl.u32 %v1601, 16
        %v1626 = vand.u32 %v1596, 65535
        %v1627 = vshrl.u32 %v1596, 16
        %v1628 = vmul.u32 %v1624, %v1626
        %v1629 = vmul.u32 %v1624, %v1627
        %v1630 = vmul.u32 %v1625, %v1626
        %v1631 = vmul.u32 %v1625, %v1627
        %v1632 = vshll.u32 %v1629, 16
        %v1633 = vshrl.u32 %v1629, 16
        %v1634 = vshll.u32 %v1630, 16
        %v1635 = vshrl.u32 %v1630, 16
        %vm1636 = vc.u32 %v1628, %v1632
        %v1637 = vsel %vm1636, 1, 0
        %v1638 = vadd.s32 %v1628, %v1632
        %v1639 = vadd.s32 %v1631, %v1637
        %vm1640 = vc.u32 %v1638, %v1634
        %v1641 = vsel %vm1640, 1, 0
        %v1642 = vadd.s32 %v1638, %v1634
        %v1643 = vadd.s32 %v1639, %v1641
        %v1644 = vadd.s32 %v1643, %v1633
        %v1645 = vadd.s32 %v1644, %v1635
        %v1646 = vmul.u32 %v1601, %v1592
        %v1647 = vadd.s32 %v1623, %v1642
        %vm1648 = vc.u32 %v1623, %v1642
        %v1649 = vadd.s32 %v1645, 1
        %v1650 = vsel %vm1648, %v1649, %v1645
        %v1651 = vadd.s32 %v1646, %v1650
        %v1652 = vadd.s32 %v1651, 536870912
        %v1653 = vshrl.u32 %v1652, 30
        %v1654 = vshll.u32 %v1653, 30
        %v1655 = vsub.s32 %v1651, %v1654
        %vm1656 = vcmp.lt.s32.totalorder %v1655, 0
        %v1657 = vsub.s32 0, %v1655
        %v1658 = vsel %vm1656, %v1657, %v1655
        %v1659 = vclz %v1658
        %v1660 = vsub.s32 %v1659, 2
        %vm1661 = vcmp.gt.s32.totalorder 0, %v1660
        %v1662 = vsel %vm1661, 0, %v1660
        %v1663 = vsub.s32 32, %v1662
        %v1664 = vshll.u32 %v1655, %v1662
        %v1665 = vshrl.u32 %v1647, %v1663
        %v1666 = vor.u32 %v1664, %v1665
        %v1667 = vsub.s32 4294967266, %v1662
        %v1668 = vadd.s32 %v1667, 127
        %v1669 = vshll.u32 %v1668, 23
        %v1670 = vor.u32 4788187, %v1669
        %v1671 = vand.u32 2147483647, %v1670
        %v1673 = vcvt.s32.f32 %v1666
        %v1674 = vmul.f32 %v1673, %v1671
        %v1675 = vxor.u32 %v1674, 2147483648
        %v1676 = vsel %vm1555, %v1675, %v1674
        %v1677 = vsub.s32 4, %v1653
        %v1678 = vsel %vm1555, %v1677, %v1653
        %v1679 = vsel %vm1554, %v1539, %v1676
        %v1680 = vsel %vm1554, 0, %v1678
        %v1681 = vmul.f32 %v1679, %v1679
        %v1682 = vmul.f32 %v1681, -0.001358992
        %v1683 = vadd.f32 %v1682, 0.041655596
        %v1684 = vmul.f32 %v1681, %v1683
        %v1685 = vadd.f32 %v1684, -0.4999988
        %v1686 = vmul.f32 %v1681, %v1685
        %v1687 = vadd.f32 1.0, %v1686
        %v1688 = vmul.f32 %v1679, %v1679
        %v1689 = vmul.f32 %v1688, -0.00019511016
        %v1690 = vadd.f32 %v1689, 0.008332121
        %v1691 = vmul.f32 %v1688, %v1690
        %v1692 = vadd.f32 %v1691, -0.16666654
        %v1693 = vmul.f32 %v1688, %v1692
        %v1694 = vadd.f32 %v1693, 1.0
        %v1695 = vmul.f32 %v1694, %v1679
        %vm1696 = vweird.f32 %v1539
        %v1697 = vadd.s32 %v1680, 3
        %v1698 = vand.u32 %v1697, 3
        %vm1699 = vcmp.lt.s32.totalorder %v1698, 2
        %vm1700 = vcmp.eq.s32.totalorder %v1698, 0
        %v1701 = vxor.u32 %v1695, 2147483648
        %v1702 = vsel %vm1700, %v1687, %v1701
        %vm1703 = vcmp.eq.s32.totalorder %v1698, 2
        %v1704 = vxor.u32 %v1687, 2147483648
        %v1705 = vsel %vm1703, %v1704, %v1695
        %v1706 = vsel %vm1699, %v1702, %v1705
        %v1707 = vsel %vm1696, nan, %v1706
        %v1708 = vand.u32 2147483647, %v1543
        %vm1709 = vcmp.le.f32.partialorder %v1708, 0.7853982
        %vm1710 = vcmp.lt.s32.totalorder %v1543, 0
        %v1711 = vand.u32 %v1543, 2139095040
        %v1712 = vshrl.u32 %v1711, 23
        %v1713 = vsub.s32 %v1712, 127
        %v1714 = vand.u32 2147483647, %v1543
        %v1715 = vand.u32 %v1714, 8388607
        %v1716 = vor.u32 %v1715, 8388608
        %v1717 = vsub.s32 0, %v1716
        %v1718 = vadd.s32 %v1713, 1
        %vm1719 = vcmp.gt.s32.totalorder %v1718, 0
        %v1720 = vsel %vm1719, %v1718, 0
        %v1721 = vshrl.u32 %v1720, 5
        %v1722 = vand.u32 %v1720, 31
        %v1723 = vsub.s32 32, %v1722
        %v1724 = vshrl.u32 683565275, %v1723
        %v1725 = vshll.u32 683565275, %v1722
        %v1726 = vshrl.u32 2475754826, %v1723
        %v1727 = vor.u32 %v1725, %v1726
        %v1728 = vshll.u32 2475754826, %v1722
        %v1729 = vshrl.u32 2131351028, %v1723
        %v1730 = vor.u32 %v1728, %v1729
        %v1731 = vshll.u32 2131351028, %v1722
        %v1732 = vshrl.u32 2102212464, %v1723
        %v1733 = vor.u32 %v1731, %v1732
        %v1734 = vshll.u32 2102212464, %v1722
        %v1735 = vshrl.u32 920167782, %v1723
        %v1736 = vor.u32 %v1734, %v1735
        %v1737 = vshll.u32 920167782, %v1722
        %v1738 = vshrl.u32 1326507024, %v1723
        %v1739 = vor.u32 %v1737, %v1738
        %vm1740 = vcmp.lt.s32.totalorder %v1721, 1
        %vm1741 = vcmp.lt.s32.totalorder %v1721, 2
        %vm1742 = vcmp.lt.s32.totalorder %v1721, 3
        %vm1743 = vcmp.lt.s32.totalorder %v1721, 4
        %v1744 = vsel %vm1740, %v1724, %v1727
        %v1745 = vsel %vm1743, %v1733, 2102212464
        %v1746 = vsel %vm1742, %v1730, %v1745
        %v1747 = vsel %vm1741, %v1744, %v1746
        %v1748 = vsel %vm1740, %v1727, %v1730
        %v1749 = vsel %vm1743, %v1736, 920167782
        %v1750 = vsel %vm1742, %v1733, %v1749
        %v1751 = vsel %vm1741, %v1748, %v1750
        %v1752 = vsel %vm1740, %v1730, %v1733
        %v1753 = vsel %vm1743, %v1739, 1326507024
        %v1754 = vsel %vm1742, %v1736, %v1753
        %v1755 = vsel %vm1741, %v1752, %v1754
        %v1756 = vshll.u32 %v1716, 8
        %v1757 = vand.u32 %v1756, 65535
        %v1758 = vshrl.u32 %v1756, 16
        %v1759 = vand.u32 %v1755, 65535
        %v1760 = vshrl.u32 %v1755, 16
        %v1761 = vmul.u32 %v1757, %v1759
        %v1762 = vmul.u32 %v1757, %v1760
        %v1763 = vmul.u32 %v1758, %v1759
        %v1764 = vmul.u32 %v1758, %v1760
        %v1765 = vshll.u32 %v1762, 16
        %v1766 = vshrl.u32 %v1762, 16
        %v1767 = vshll.u32 %v1763, 16
        %v1768 = vshrl.u32 %v1763, 16
        %vm1769 = vc.u32 %v1761, %v1765
        %v1770 = vsel %vm1769, 1, 0
        %v1771 = vadd.s32 %v1761, %v1765
        %v1772 = vadd.s32 %v1764, %v1770
        %vm1773 = vc.u32 %v1771, %v1767
        %v1774 = vsel %vm1773, 1, 0
        %v1775 = vadd.s32 %v1771, %v1767
        %v1776 = vadd.s32 %v1772, %v1774
        %v1777 = vadd.s32 %v1776, %v1766
        %v1778 = vadd.s32 %v1777, %v1768
        %v1779 = vand.u32 %v1756, 65535
        %v1780 = vshrl.u32 %v1756, 16
        %v1781 = vand.u32 %v1751, 65535
        %v1782 = vshrl.u32 %v1751, 16
        %v1783 = vmul.u32 %v1779, %v1781
        %v1784 = vmul.u32 %v1779, %v1782
        %v1785 = vmul.u32 %v1780, %v1781
        %v1786 = vmul.u32 %v1780, %v1782
        %v1787 = vshll.u32 %v1784, 16
        %v1788 = vshrl.u32 %v1784, 16
        %v1789 = vshll.u32 %v1785, 16
        %v1790 = vshrl.u32 %v1785, 16
        %vm1791 = vc.u32 %v1783, %v1787
        %v1792 = vsel %vm1791, 1, 0
        %v1793 = vadd.s32 %v1783, %v1787
        %v1794 = vadd.s32 %v1786, %v1792
        %vm1795 = vc.u32 %v1793, %v1789
        %v1796 = vsel %vm1795, 1, 0
        %v1797 = vadd.s32 %v1793, %v1789
        %v1798 = vadd.s32 %v1794, %v1796
        %v1799 = vadd.s32 %v1798, %v1788
        %v1800 = vadd.s32 %v1799, %v1790
        %v1801 = vmul.u32 %v1756, %v1747
        %v1802 = vadd.s32 %v1778, %v1797
        %vm1803 = vc.u32 %v1778, %v1797
        %v1804 = vadd.s32 %v1800, 1
        %v1805 = vsel %vm1803, %v1804, %v1800
        %v1806 = vadd.s32 %v1801, %v1805
        %v1807 = vadd.s32 %v1806, 536870912
        %v1808 = vshrl.u32 %v1807, 30
        %v1809 = vshll.u32 %v1808, 30
        %v1810 = vsub.s32 %v1806, %v1809
        %vm1811 = vcmp.lt.s32.totalorder %v1810, 0
        %v1812 = vsub.s32 0, %v1810
        %v1813 = vsel %vm1811, %v1812, %v1810
        %v1814 = vclz %v1813
        %v1815 = vsub.s32 %v1814, 2
        %vm1816 = vcmp.gt.s32.totalorder 0, %v1815
        %v1817 = vsel %vm1816, 0, %v1815
        %v1818 = vsub.s32 32, %v1817
        %v1819 = vshll.u32 %v1810, %v1817
        %v1820 = vshrl.u32 %v1802, %v1818
        %v1821 = vor.u32 %v1819, %v1820
        %v1822 = vsub.s32 4294967266, %v1817
        %v1823 = vadd.s32 %v1822, 127
        %v1824 = vshll.u32 %v1823, 23
        %v1825 = vor.u32 4788187, %v1824
        %v1826 = vand.u32 2147483647, %v1825
        %v1828 = vcvt.s32.f32 %v1821
        %v1829 = vmul.f32 %v1828, %v1826
        %v1830 = vxor.u32 %v1829, 2147483648
        %v1831 = vsel %vm1710, %v1830, %v1829
        %v1832 = vsub.s32 4, %v1808
        %v1833 = vsel %vm1710, %v1832, %v1808
        %v1834 = vsel %vm1709, %v1543, %v1831
        %v1835 = vsel %vm1709, 0, %v1833
        %v1836 = vmul.f32 %v1834, %v1834
        %v1837 = vmul.f32 %v1836, -0.001358992
        %v1838 = vadd.f32 %v1837, 0.041655596
        %v1839 = vmul.f32 %v1836, %v1838
        %v1840 = vadd.f32 %v1839, -0.4999988
        %v1841 = vmul.f32 %v1836, %v1840
        %v1842 = vadd.f32 1.0, %v1841
        %v1843 = vmul.f32 %v1834, %v1834
        %v1844 = vmul.f32 %v1843, -0.00019511016
        %v1845 = vadd.f32 %v1844, 0.008332121
        %v1846 = vmul.f32 %v1843, %v1845
        %v1847 = vadd.f32 %v1846, -0.16666654
        %v1848 = vmul.f32 %v1843, %v1847
        %v1849 = vadd.f32 %v1848, 1.0
        %v1850 = vmul.f32 %v1849, %v1834
        %vm1851 = vweird.f32 %v1543
        %v1852 = vadd.s32 %v1835, 3
        %v1853 = vand.u32 %v1852, 3
        %vm1854 = vcmp.lt.s32.totalorder %v1853, 2
        %vm1855 = vcmp.eq.s32.totalorder %v1853, 0
        %v1856 = vxor.u32 %v1850, 2147483648
        %v1857 = vsel %vm1855, %v1842, %v1856
        %vm1858 = vcmp.eq.s32.totalorder %v1853, 2
        %v1859 = vxor.u32 %v1842, 2147483648
        %v1860 = vsel %vm1858, %v1859, %v1850
        %v1861 = vsel %vm1854, %v1857, %v1860
        %v1862 = vsel %vm1851, nan, %v1861
        %v1863 = vand.u32 2147483647, %v1547
        %vm1864 = vcmp.le.f32.partialorder %v1863, 0.7853982
        %vm1865 = vcmp.lt.s32.totalorder %v1547, 0
        %v1866 = vand.u32 %v1547, 2139095040
        %v1867 = vshrl.u32 %v1866, 23
        %v1868 = vsub.s32 %v1867, 127
        %v1869 = vand.u32 2147483647, %v1547
        %v1870 = vand.u32 %v1869, 8388607
        %v1871 = vor.u32 %v1870, 8388608
        %v1872 = vsub.s32 0, %v1871
        %v1873 = vadd.s32 %v1868, 1
        %vm1874 = vcmp.gt.s32.totalorder %v1873, 0
        %v1875 = vsel %vm1874, %v1873, 0
        %v1876 = vshrl.u32 %v1875, 5
        %v1877 = vand.u32 %v1875, 31
        %v1878 = vsub.s32 32, %v1877
        %v1879 = vshrl.u32 683565275, %v1878
        %v1880 = vshll.u32 683565275, %v1877
        %v1881 = vshrl.u32 2475754826, %v1878
        %v1882 = vor.u32 %v1880, %v1881
        %v1883 = vshll.u32 2475754826, %v1877
        %v1884 = vshrl.u32 2131351028, %v1878
        %v1885 = vor.u32 %v1883, %v1884
        %v1886 = vshll.u32 2131351028, %v1877
        %v1887 = vshrl.u32 2102212464, %v1878
        %v1888 = vor.u32 %v1886, %v1887
        %v1889 = vshll.u32 2102212464, %v1877
        %v1890 = vshrl.u32 920167782, %v1878
        %v1891 = vor.u32 %v1889, %v1890
        %v1892 = vshll.u32 920167782, %v1877
        %v1893 = vshrl.u32 1326507024, %v1878
        %v1894 = vor.u32 %v1892, %v1893
        %vm1895 = vcmp.lt.s32.totalorder %v1876, 1
        %vm1896 = vcmp.lt.s32.totalorder %v1876, 2
        %vm1897 = vcmp.lt.s32.totalorder %v1876, 3
        %vm1898 = vcmp.lt.s32.totalorder %v1876, 4
        %v1899 = vsel %vm1895, %v1879, %v1882
        %v1900 = vsel %vm1898, %v1888, 2102212464
        %v1901 = vsel %vm1897, %v1885, %v1900
        %v1902 = vsel %vm1896, %v1899, %v1901
        %v1903 = vsel %vm1895, %v1882, %v1885
        %v1904 = vsel %vm1898, %v1891, 920167782
        %v1905 = vsel %vm1897, %v1888, %v1904
        %v1906 = vsel %vm1896, %v1903, %v1905
        %v1907 = vsel %vm1895, %v1885, %v1888
        %v1908 = vsel %vm1898, %v1894, 1326507024
        %v1909 = vsel %vm1897, %v1891, %v1908
        %v1910 = vsel %vm1896, %v1907, %v1909
        %v1911 = vshll.u32 %v1871, 8
        %v1912 = vand.u32 %v1911, 65535
        %v1913 = vshrl.u32 %v1911, 16
        %v1914 = vand.u32 %v1910, 65535
        %v1915 = vshrl.u32 %v1910, 16
        %v1916 = vmul.u32 %v1912, %v1914
        %v1917 = vmul.u32 %v1912, %v1915
        %v1918 = vmul.u32 %v1913, %v1914
        %v1919 = vmul.u32 %v1913, %v1915
        %v1920 = vshll.u32 %v1917, 16
        %v1921 = vshrl.u32 %v1917, 16
        %v1922 = vshll.u32 %v1918, 16
        %v1923 = vshrl.u32 %v1918, 16
        %vm1924 = vc.u32 %v1916, %v1920
        %v1925 = vsel %vm1924, 1, 0
        %v1926 = vadd.s32 %v1916, %v1920
        %v1927 = vadd.s32 %v1919, %v1925
        %vm1928 = vc.u32 %v1926, %v1922
        %v1929 = vsel %vm1928, 1, 0
        %v1930 = vadd.s32 %v1926, %v1922
        %v1931 = vadd.s32 %v1927, %v1929
        %v1932 = vadd.s32 %v1931, %v1921
        %v1933 = vadd.s32 %v1932, %v1923
        %v1934 = vand.u32 %v1911, 65535
        %v1935 = vshrl.u32 %v1911, 16
        %v1936 = vand.u32 %v1906, 65535
        %v1937 = vshrl.u32 %v1906, 16
        %v1938 = vmul.u32 %v1934, %v1936
        %v1939 = vmul.u32 %v1934, %v1937
        %v1940 = vmul.u32 %v1935, %v1936
        %v1941 = vmul.u32 %v1935, %v1937
        %v1942 = vshll.u32 %v1939, 16
        %v1943 = vshrl.u32 %v1939, 16
        %v1944 = vshll.u32 %v1940, 16
        %v1945 = vshrl.u32 %v1940, 16
        %vm1946 = vc.u32 %v1938, %v1942
        %v1947 = vsel %vm1946, 1, 0
        %v1948 = vadd.s32 %v1938, %v1942
        %v1949 = vadd.s32 %v1941, %v1947
        %vm1950 = vc.u32 %v1948, %v1944
        %v1951 = vsel %vm1950, 1, 0
        %v1952 = vadd.s32 %v1948, %v1944
        %v1953 = vadd.s32 %v1949, %v1951
        %v1954 = vadd.s32 %v1953, %v1943
        %v1955 = vadd.s32 %v1954, %v1945
        %v1956 = vmul.u32 %v1911, %v1902
        %v1957 = vadd.s32 %v1933, %v1952
        %vm1958 = vc.u32 %v1933, %v1952
        %v1959 = vadd.s32 %v1955, 1
        %v1960 = vsel %vm1958, %v1959, %v1955
        %v1961 = vadd.s32 %v1956, %v1960
        %v1962 = vadd.s32 %v1961, 536870912
        %v1963 = vshrl.u32 %v1962, 30
        %v1964 = vshll.u32 %v1963, 30
        %v1965 = vsub.s32 %v1961, %v1964
        %vm1966 = vcmp.lt.s32.totalorder %v1965, 0
        %v1967 = vsub.s32 0, %v1965
        %v1968 = vsel %vm1966, %v1967, %v1965
        %v1969 = vclz %v1968
        %v1970 = vsub.s32 %v1969, 2
        %vm1971 = vcmp.gt.s32.totalorder 0, %v1970
        %v1972 = vsel %vm1971, 0, %v1970
        %v1973 = vsub.s32 32, %v1972
        %v1974 = vshll.u32 %v1965, %v1972
        %v1975 = vshrl.u32 %v1957, %v1973
        %v1976 = vor.u32 %v1974, %v1975
        %v1977 = vsub.s32 4294967266, %v1972
        %v1978 = vadd.s32 %v1977, 127
        %v1979 = vshll.u32 %v1978, 23
        %v1980 = vor.u32 4788187, %v1979
        %v1981 = vand.u32 2147483647, %v1980
        %v1983 = vcvt.s32.f32 %v1976
        %v1984 = vmul.f32 %v1983, %v1981
        %v1985 = vxor.u32 %v1984, 2147483648
        %v1986 = vsel %vm1865, %v1985, %v1984
        %v1987 = vsub.s32 4, %v1963
        %v1988 = vsel %vm1865, %v1987, %v1963
        %v1989 = vsel %vm1864, %v1547, %v1986
        %v1990 = vsel %vm1864, 0, %v1988
        %v1991 = vmul.f32 %v1989, %v1989
        %v1992 = vmul.f32 %v1991, -0.001358992
        %v1993 = vadd.f32 %v1992, 0.041655596
        %v1994 = vmul.f32 %v1991, %v1993
        %v1995 = vadd.f32 %v1994, -0.4999988
        %v1996 = vmul.f32 %v1991, %v1995
        %v1997 = vadd.f32 1.0, %v1996
        %v1998 = vmul.f32 %v1989, %v1989
        %v1999 = vmul.f32 %v1998, -0.00019511016
        %v2000 = vadd.f32 %v1999, 0.008332121
        %v2001 = vmul.f32 %v1998, %v2000
        %v2002 = vadd.f32 %v2001, -0.16666654
        %v2003 = vmul.f32 %v1998, %v2002
        %v2004 = vadd.f32 %v2003, 1.0
        %v2005 = vmul.f32 %v2004, %v1989
        %vm2006 = vweird.f32 %v1547
        %v2007 = vadd.s32 %v1990, 3
        %v2008 = vand.u32 %v2007, 3
        %vm2009 = vcmp.lt.s32.totalorder %v2008, 2
        %vm2010 = vcmp.eq.s32.totalorder %v2008, 0
        %v2011 = vxor.u32 %v2005, 2147483648
        %v2012 = vsel %vm2010, %v1997, %v2011
        %vm2013 = vcmp.eq.s32.totalorder %v2008, 2
        %v2014 = vxor.u32 %v1997, 2147483648
        %v2015 = vsel %vm2013, %v2014, %v2005
        %v2016 = vsel %vm2009, %v2012, %v2015
        %v2017 = vsel %vm2006, nan, %v2016
        %v2018 = vand.u32 2147483647, %v1551
        %vm2019 = vcmp.le.f32.partialorder %v2018, 0.7853982
        %vm2020 = vcmp.lt.s32.totalorder %v1551, 0
        %v2021 = vand.u32 %v1551, 2139095040
        %v2022 = vshrl.u32 %v2021, 23
        %v2023 = vsub.s32 %v2022, 127
        %v2024 = vand.u32 2147483647, %v1551
        %v2025 = vand.u32 %v2024, 8388607
        %v2026 = vor.u32 %v2025, 8388608
        %v2027 = vsub.s32 0, %v2026
        %v2028 = vadd.s32 %v2023, 1
        %vm2029 = vcmp.gt.s32.totalorder %v2028, 0
        %v2030 = vsel %vm2029, %v2028, 0
        %v2031 = vshrl.u32 %v2030, 5
        %v2032 = vand.u32 %v2030, 31
        %v2033 = vsub.s32 32, %v2032
        %v2034 = vshrl.u32 683565275, %v2033
        %v2035 = vshll.u32 683565275, %v2032
        %v2036 = vshrl.u32 2475754826, %v2033
        %v2037 = vor.u32 %v2035, %v2036
        %v2038 = vshll.u32 2475754826, %v2032
        %v2039 = vshrl.u32 2131351028, %v2033
        %v2040 = vor.u32 %v2038, %v2039
        %v2041 = vshll.u32 2131351028, %v2032
        %v2042 = vshrl.u32 2102212464, %v2033
        %v2043 = vor.u32 %v2041, %v2042
        %v2044 = vshll.u32 2102212464, %v2032
        %v2045 = vshrl.u32 920167782, %v2033
        %v2046 = vor.u32 %v2044, %v2045
        %v2047 = vshll.u32 920167782, %v2032
        %v2048 = vshrl.u32 1326507024, %v2033
        %v2049 = vor.u32 %v2047, %v2048
        %vm2050 = vcmp.lt.s32.totalorder %v2031, 1
        %vm2051 = vcmp.lt.s32.totalorder %v2031, 2
        %vm2052 = vcmp.lt.s32.totalorder %v2031, 3
        %vm2053 = vcmp.lt.s32.totalorder %v2031, 4
        %v2054 = vsel %vm2050, %v2034, %v2037
        %v2055 = vsel %vm2053, %v2043, 2102212464
        %v2056 = vsel %vm2052, %v2040, %v2055
        %v2057 = vsel %vm2051, %v2054, %v2056
        %v2058 = vsel %vm2050, %v2037, %v2040
        %v2059 = vsel %vm2053, %v2046, 920167782
        %v2060 = vsel %vm2052, %v2043, %v2059
        %v2061 = vsel %vm2051, %v2058, %v2060
        %v2062 = vsel %vm2050, %v2040, %v2043
        %v2063 = vsel %vm2053, %v2049, 1326507024
        %v2064 = vsel %vm2052, %v2046, %v2063
        %v2065 = vsel %vm2051, %v2062, %v2064
        %v2066 = vshll.u32 %v2026, 8
        %v2067 = vand.u32 %v2066, 65535
        %v2068 = vshrl.u32 %v2066, 16
        %v2069 = vand.u32 %v2065, 65535
        %v2070 = vshrl.u32 %v2065, 16
        %v2071 = vmul.u32 %v2067, %v2069
        %v2072 = vmul.u32 %v2067, %v2070
        %v2073 = vmul.u32 %v2068, %v2069
        %v2074 = vmul.u32 %v2068, %v2070
        %v2075 = vshll.u32 %v2072, 16
        %v2076 = vshrl.u32 %v2072, 16
        %v2077 = vshll.u32 %v2073, 16
        %v2078 = vshrl.u32 %v2073, 16
        %vm2079 = vc.u32 %v2071, %v2075
        %v2080 = vsel %vm2079, 1, 0
        %v2081 = vadd.s32 %v2071, %v2075
        %v2082 = vadd.s32 %v2074, %v2080
        %vm2083 = vc.u32 %v2081, %v2077
        %v2084 = vsel %vm2083, 1, 0
        %v2085 = vadd.s32 %v2081, %v2077
        %v2086 = vadd.s32 %v2082, %v2084
        %v2087 = vadd.s32 %v2086, %v2076
        %v2088 = vadd.s32 %v2087, %v2078
        %v2089 = vand.u32 %v2066, 65535
        %v2090 = vshrl.u32 %v2066, 16
        %v2091 = vand.u32 %v2061, 65535
        %v2092 = vshrl.u32 %v2061, 16
        %v2093 = vmul.u32 %v2089, %v2091
        %v2094 = vmul.u32 %v2089, %v2092
        %v2095 = vmul.u32 %v2090, %v2091
        %v2096 = vmul.u32 %v2090, %v2092
        %v2097 = vshll.u32 %v2094, 16
        %v2098 = vshrl.u32 %v2094, 16
        %v2099 = vshll.u32 %v2095, 16
        %v2100 = vshrl.u32 %v2095, 16
        %vm2101 = vc.u32 %v2093, %v2097
        %v2102 = vsel %vm2101, 1, 0
        %v2103 = vadd.s32 %v2093, %v2097
        %v2104 = vadd.s32 %v2096, %v2102
        %vm2105 = vc.u32 %v2103, %v2099
        %v2106 = vsel %vm2105, 1, 0
        %v2107 = vadd.s32 %v2103, %v2099
        %v2108 = vadd.s32 %v2104, %v2106
        %v2109 = vadd.s32 %v2108, %v2098
        %v2110 = vadd.s32 %v2109, %v2100
        %v2111 = vmul.u32 %v2066, %v2057
        %v2112 = vadd.s32 %v2088, %v2107
        %vm2113 = vc.u32 %v2088, %v2107
        %v2114 = vadd.s32 %v2110, 1
        %v2115 = vsel %vm2113, %v2114, %v2110
        %v2116 = vadd.s32 %v2111, %v2115
        %v2117 = vadd.s32 %v2116, 536870912
        %v2118 = vshrl.u32 %v2117, 30
        %v2119 = vshll.u32 %v2118, 30
        %v2120 = vsub.s32 %v2116, %v2119
        %vm2121 = vcmp.lt.s32.totalorder %v2120, 0
        %v2122 = vsub.s32 0, %v2120
        %v2123 = vsel %vm2121, %v2122, %v2120
        %v2124 = vclz %v2123
        %v2125 = vsub.s32 %v2124, 2
        %vm2126 = vcmp.gt.s32.totalorder 0, %v2125
        %v2127 = vsel %vm2126, 0, %v2125
        %v2128 = vsub.s32 32, %v2127
        %v2129 = vshll.u32 %v2120, %v2127
        %v2130 = vshrl.u32 %v2112, %v2128
        %v2131 = vor.u32 %v2129, %v2130
        %v2132 = vsub.s32 4294967266, %v2127
        %v2133 = vadd.s32 %v2132, 127
        %v2134 = vshll.u32 %v2133, 23
        %v2135 = vor.u32 4788187, %v2134
        %v2136 = vand.u32 2147483647, %v2135
        %v2138 = vcvt.s32.f32 %v2131
        %v2139 = vmul.f32 %v2138, %v2136
        %v2140 = vxor.u32 %v2139, 2147483648
        %v2141 = vsel %vm2020, %v2140, %v2139
        %v2142 = vsub.s32 4, %v2118
        %v2143 = vsel %vm2020, %v2142, %v2118
        %v2144 = vsel %vm2019, %v1551, %v2141
        %v2145 = vsel %vm2019, 0, %v2143
        %v2146 = vmul.f32 %v2144, %v2144
        %v2147 = vmul.f32 %v2146, -0.001358992
        %v2148 = vadd.f32 %v2147, 0.041655596
        %v2149 = vmul.f32 %v2146, %v2148
        %v2150 = vadd.f32 %v2149, -0.4999988
        %v2151 = vmul.f32 %v2146, %v2150
        %v2152 = vadd.f32 1.0, %v2151
        %v2153 = vmul.f32 %v2144, %v2144
        %v2154 = vmul.f32 %v2153, -0.00019511016
        %v2155 = vadd.f32 %v2154, 0.008332121
        %v2156 = vmul.f32 %v2153, %v2155
        %v2157 = vadd.f32 %v2156, -0.16666654
        %v2158 = vmul.f32 %v2153, %v2157
        %v2159 = vadd.f32 %v2158, 1.0
        %v2160 = vmul.f32 %v2159, %v2144
        %vm2161 = vweird.f32 %v1551
        %v2162 = vadd.s32 %v2145, 3
        %v2163 = vand.u32 %v2162, 3
        %vm2164 = vcmp.lt.s32.totalorder %v2163, 2
        %vm2165 = vcmp.eq.s32.totalorder %v2163, 0
        %v2166 = vxor.u32 %v2160, 2147483648
        %v2167 = vsel %vm2165, %v2152, %v2166
        %vm2168 = vcmp.eq.s32.totalorder %v2163, 2
        %v2169 = vxor.u32 %v2152, 2147483648
        %v2170 = vsel %vm2168, %v2169, %v2160
        %v2171 = vsel %vm2164, %v2167, %v2170
        %v2172 = vsel %vm2161, nan, %v2171
        %v2173 = vld [vmem:[%s5] sm:$0xff]
        %v2174 = vld [vmem:[%s5 + $0x8] sm:$0xff]
        %v2175 = vld [vmem:[%s5 + $0x10] sm:$0xff]
        %v2176 = vld [vmem:[%s5 + $0x18] sm:$0xff]
        %v2177 = vld [vmem:[%s6] sm:$0xff]
        %v2178 = vld [vmem:[%s6 + $0x8] sm:$0xff]
        %v2179 = vld [vmem:[%s6 + $0x10] sm:$0xff]
        %v2180 = vld [vmem:[%s6 + $0x18] sm:$0xff]
        %2182 = vset.pattern.permute.xlu0 0
        %2183 = vperm.xlu0 %2182, %v2177
        %v2184 = vpop.permute.xlu0 %2183
        %2187 = vset.pattern.permute.xlu0 0
        %2188 = vperm.xlu0 %2187, %v2178
        %v2189 = vpop.permute.xlu0 %2188
        %2192 = vset.pattern.permute.xlu0 0
        %2193 = vperm.xlu0 %2192, %v2179
        %v2194 = vpop.permute.xlu0 %2193
        %2197 = vset.pattern.permute.xlu0 0
        %2198 = vperm.xlu0 %2197, %v2180
        %v2199 = vpop.permute.xlu0 %2198
        %v2202 = vsel %vm1262, %v2173, 0
        %v2205 = vsel %vm1262, %v2174, 0
        %v2208 = vsel %vm1262, %v2175, 0
        %v2211 = vsel %vm1262, %v2176, 0
        %2213 = vmatpush.msra.mxu0 0.0
        %2214 = vmatpush.msra.mxu0 0.0
        %2215 = vmatpush.msra.mxu0 0.0
        %2216 = vmatpush.msra.mxu0 0.0
        %2217 = vmatpush.msra.mxu0 0.0
        %2218 = vmatpush.msra.mxu0 0.0
        %2219 = vmatpush.msra.mxu0 0.0
        %2220 = vmatpush.msra.mxu0 0.0
        %2221 = vmatpush.msra.mxu0 0.0
        %2222 = vmatpush.msra.mxu0 0.0
        %2223 = vmatpush.msra.mxu0 0.0
        %2224 = vmatpush.msra.mxu0 0.0
        %v2225 = vand.u32 %v2172, 4294901760
        %2226 = vmatpush.msra.mxu0 %v2225
        %v2227 = vand.u32 %v2017, 4294901760
        %2228 = vmatpush.msra.mxu0 %v2227
        %v2229 = vand.u32 %v1862, 4294901760
        %2230 = vmatpush.msra.mxu0 %v2229
        %v2231 = vand.u32 %v1707, 4294901760
        %2232 = vmatpush.msra.mxu0 %v2231
        %v2233 = vand.u32 %v2202, 4294901760
        %v2234 = vsub.f32 %v2202, %v2233
        %v2235 = vand.u32 %v2234, 4294901760
        %v2236 = vsub.f32 %v2234, %v2235
        %v2237 = vand.u32 %v2236, 4294901760
        %2238 = vmatmul.f32.gmra.mxu0 %v2237
        %v2239 = vpop.f32.mrf.mxu0
        %v2240 = vadd.f32 %v2184, %v2239
        %v2241 = vand.u32 %v2205, 4294901760
        %v2242 = vsub.f32 %v2205, %v2241
        %v2243 = vand.u32 %v2242, 4294901760
        %v2244 = vsub.f32 %v2242, %v2243
        %v2245 = vand.u32 %v2244, 4294901760
        %2246 = vmatmul.f32.gmra.mxu0 %v2245
        %v2247 = vpop.f32.mrf.mxu0
        %v2248 = vadd.f32 %v2189, %v2247
        %v2249 = vand.u32 %v2208, 4294901760
        %v2250 = vsub.f32 %v2208, %v2249
        %v2251 = vand.u32 %v2250, 4294901760
        %v2252 = vsub.f32 %v2250, %v2251
        %v2253 = vand.u32 %v2252, 4294901760
        %2254 = vmatmul.f32.gmra.mxu0 %v2253
        %v2255 = vpop.f32.mrf.mxu0
        %v2256 = vadd.f32 %v2194, %v2255
        %v2257 = vand.u32 %v2211, 4294901760
        %v2258 = vsub.f32 %v2211, %v2257
        %v2259 = vand.u32 %v2258, 4294901760
        %v2260 = vsub.f32 %v2258, %v2259
        %v2261 = vand.u32 %v2260, 4294901760
        %2262 = vmatmul.f32.gmra.mxu0 %v2261
        %v2263 = vpop.f32.mrf.mxu0
        %v2264 = vadd.f32 %v2199, %v2263
        %2265 = vdwg.mxu0
        %2266 = vmatpush.msra.mxu0 0.0
        %2267 = vmatpush.msra.mxu0 0.0
        %2268 = vmatpush.msra.mxu0 0.0
        %2269 = vmatpush.msra.mxu0 0.0
        %2270 = vmatpush.msra.mxu0 0.0
        %2271 = vmatpush.msra.mxu0 0.0
        %2272 = vmatpush.msra.mxu0 0.0
        %2273 = vmatpush.msra.mxu0 0.0
        %2274 = vmatpush.msra.mxu0 0.0
        %2275 = vmatpush.msra.mxu0 0.0
        %2276 = vmatpush.msra.mxu0 0.0
        %2277 = vmatpush.msra.mxu0 0.0
        %v2278 = vand.u32 %v2172, 4294901760
        %v2279 = vsub.f32 %v2172, %v2278
        %v2280 = vand.u32 %v2279, 4294901760
        %v2281 = vsub.f32 %v2279, %v2280
        %v2282 = vand.u32 %v2281, 4294901760
        %2283 = vmatpush.msra.mxu0 %v2282
        %v2284 = vand.u32 %v2017, 4294901760
        %v2285 = vsub.f32 %v2017, %v2284
        %v2286 = vand.u32 %v2285, 4294901760
        %v2287 = vsub.f32 %v2285, %v2286
        %v2288 = vand.u32 %v2287, 4294901760
        %2289 = vmatpush.msra.mxu0 %v2288
        %v2290 = vand.u32 %v1862, 4294901760
        %v2291 = vsub.f32 %v1862, %v2290
        %v2292 = vand.u32 %v2291, 4294901760
        %v2293 = vsub.f32 %v2291, %v2292
        %v2294 = vand.u32 %v2293, 4294901760
        %2295 = vmatpush.msra.mxu0 %v2294
        %v2296 = vand.u32 %v1707, 4294901760
        %v2297 = vsub.f32 %v1707, %v2296
        %v2298 = vand.u32 %v2297, 4294901760
        %v2299 = vsub.f32 %v2297, %v2298
        %v2300 = vand.u32 %v2299, 4294901760
        %2301 = vmatpush.msra.mxu0 %v2300
        %v2302 = vand.u32 %v2202, 4294901760
        %2303 = vmatmul.f32.gmra.mxu0 %v2302
        %v2304 = vpop.f32.mrf.mxu0
        %v2305 = vadd.f32 %v2240, %v2304
        %v2306 = vand.u32 %v2205, 4294901760
        %2307 = vmatmul.f32.gmra.mxu0 %v2306
        %v2308 = vpop.f32.mrf.mxu0
        %v2309 = vadd.f32 %v2248, %v2308
        %v2310 = vand.u32 %v2208, 4294901760
        %2311 = vmatmul.f32.gmra.mxu0 %v2310
        %v2312 = vpop.f32.mrf.mxu0
        %v2313 = vadd.f32 %v2256, %v2312
        %v2314 = vand.u32 %v2211, 4294901760
        %2315 = vmatmul.f32.gmra.mxu0 %v2314
        %v2316 = vpop.f32.mrf.mxu0
        %v2317 = vadd.f32 %v2264, %v2316
        %2318 = vdwg.mxu0
        %2319 = vmatpush.msra.mxu0 0.0
        %2320 = vmatpush.msra.mxu0 0.0
        %2321 = vmatpush.msra.mxu0 0.0
        %2322 = vmatpush.msra.mxu0 0.0
        %2323 = vmatpush.msra.mxu0 0.0
        %2324 = vmatpush.msra.mxu0 0.0
        %2325 = vmatpush.msra.mxu0 0.0
        %2326 = vmatpush.msra.mxu0 0.0
        %2327 = vmatpush.msra.mxu0 0.0
        %2328 = vmatpush.msra.mxu0 0.0
        %2329 = vmatpush.msra.mxu0 0.0
        %2330 = vmatpush.msra.mxu0 0.0
        %v2331 = vand.u32 %v2172, 4294901760
        %v2332 = vsub.f32 %v2172, %v2331
        %2333 = vmatpush.msra.mxu0 %v2332
        %v2334 = vand.u32 %v2017, 4294901760
        %v2335 = vsub.f32 %v2017, %v2334
        %2336 = vmatpush.msra.mxu0 %v2335
        %v2337 = vand.u32 %v1862, 4294901760
        %v2338 = vsub.f32 %v1862, %v2337
        %2339 = vmatpush.msra.mxu0 %v2338
        %v2340 = vand.u32 %v1707, 4294901760
        %v2341 = vsub.f32 %v1707, %v2340
        %2342 = vmatpush.msra.mxu0 %v2341
        %v2343 = vand.u32 %v2202, 4294901760
        %v2344 = vsub.f32 %v2202, %v2343
        %2345 = vmatmul.f32.gmra.mxu0 %v2344
        %v2346 = vpop.f32.mrf.mxu0
        %v2347 = vadd.f32 %v2305, %v2346
        %v2348 = vand.u32 %v2205, 4294901760
        %v2349 = vsub.f32 %v2205, %v2348
        %2350 = vmatmul.f32.gmra.mxu0 %v2349
        %v2351 = vpop.f32.mrf.mxu0
        %v2352 = vadd.f32 %v2309, %v2351
        %v2353 = vand.u32 %v2208, 4294901760
        %v2354 = vsub.f32 %v2208, %v2353
        %2355 = vmatmul.f32.gmra.mxu0 %v2354
        %v2356 = vpop.f32.mrf.mxu0
        %v2357 = vadd.f32 %v2313, %v2356
        %v2358 = vand.u32 %v2211, 4294901760
        %v2359 = vsub.f32 %v2211, %v2358
        %2360 = vmatmul.f32.gmra.mxu0 %v2359
        %v2361 = vpop.f32.mrf.mxu0
        %v2362 = vadd.f32 %v2317, %v2361
        %2363 = vdwg.mxu0
        %2364 = vmatpush.msra.mxu0 0.0
        %2365 = vmatpush.msra.mxu0 0.0
        %2366 = vmatpush.msra.mxu0 0.0
        %2367 = vmatpush.msra.mxu0 0.0
        %2368 = vmatpush.msra.mxu0 0.0
        %2369 = vmatpush.msra.mxu0 0.0
        %2370 = vmatpush.msra.mxu0 0.0
        %2371 = vmatpush.msra.mxu0 0.0
        %2372 = vmatpush.msra.mxu0 0.0
        %2373 = vmatpush.msra.mxu0 0.0
        %2374 = vmatpush.msra.mxu0 0.0
        %2375 = vmatpush.msra.mxu0 0.0
        %v2376 = vand.u32 %v2172, 4294901760
        %2377 = vmatpush.msra.mxu0 %v2376
        %v2378 = vand.u32 %v2017, 4294901760
        %2379 = vmatpush.msra.mxu0 %v2378
        %v2380 = vand.u32 %v1862, 4294901760
        %2381 = vmatpush.msra.mxu0 %v2380
        %v2382 = vand.u32 %v1707, 4294901760
        %2383 = vmatpush.msra.mxu0 %v2382
        %v2384 = vand.u32 %v2202, 4294901760
        %v2385 = vsub.f32 %v2202, %v2384
        %v2386 = vand.u32 %v2385, 4294901760
        %2387 = vmatmul.f32.gmra.mxu0 %v2386
        %v2388 = vpop.f32.mrf.mxu0
        %v2389 = vadd.f32 %v2347, %v2388
        %v2390 = vand.u32 %v2205, 4294901760
        %v2391 = vsub.f32 %v2205, %v2390
        %v2392 = vand.u32 %v2391, 4294901760
        %2393 = vmatmul.f32.gmra.mxu0 %v2392
        %v2394 = vpop.f32.mrf.mxu0
        %v2395 = vadd.f32 %v2352, %v2394
        %v2396 = vand.u32 %v2208, 4294901760
        %v2397 = vsub.f32 %v2208, %v2396
        %v2398 = vand.u32 %v2397, 4294901760
        %2399 = vmatmul.f32.gmra.mxu0 %v2398
        %v2400 = vpop.f32.mrf.mxu0
        %v2401 = vadd.f32 %v2357, %v2400
        %v2402 = vand.u32 %v2211, 4294901760
        %v2403 = vsub.f32 %v2211, %v2402
        %v2404 = vand.u32 %v2403, 4294901760
        %2405 = vmatmul.f32.gmra.mxu0 %v2404
        %v2406 = vpop.f32.mrf.mxu0
        %v2407 = vadd.f32 %v2362, %v2406
        %2408 = vdwg.mxu0
        %2409 = vmatpush.msra.mxu0 0.0
        %2410 = vmatpush.msra.mxu0 0.0
        %2411 = vmatpush.msra.mxu0 0.0
        %2412 = vmatpush.msra.mxu0 0.0
        %2413 = vmatpush.msra.mxu0 0.0
        %2414 = vmatpush.msra.mxu0 0.0
        %2415 = vmatpush.msra.mxu0 0.0
        %2416 = vmatpush.msra.mxu0 0.0
        %2417 = vmatpush.msra.mxu0 0.0
        %2418 = vmatpush.msra.mxu0 0.0
        %2419 = vmatpush.msra.mxu0 0.0
        %2420 = vmatpush.msra.mxu0 0.0
        %v2421 = vand.u32 %v2172, 4294901760
        %v2422 = vsub.f32 %v2172, %v2421
        %v2423 = vand.u32 %v2422, 4294901760
        %2424 = vmatpush.msra.mxu0 %v2423
        %v2425 = vand.u32 %v2017, 4294901760
        %v2426 = vsub.f32 %v2017, %v2425
        %v2427 = vand.u32 %v2426, 4294901760
        %2428 = vmatpush.msra.mxu0 %v2427
        %v2429 = vand.u32 %v1862, 4294901760
        %v2430 = vsub.f32 %v1862, %v2429
        %v2431 = vand.u32 %v2430, 4294901760
        %2432 = vmatpush.msra.mxu0 %v2431
        %v2433 = vand.u32 %v1707, 4294901760
        %v2434 = vsub.f32 %v1707, %v2433
        %v2435 = vand.u32 %v2434, 4294901760
        %2436 = vmatpush.msra.mxu0 %v2435
        %v2437 = vand.u32 %v2202, 4294901760
        %2438 = vmatmul.f32.gmra.mxu0 %v2437
        %v2439 = vpop.f32.mrf.mxu0
        %v2440 = vadd.f32 %v2389, %v2439
        %v2441 = vand.u32 %v2205, 4294901760
        %2442 = vmatmul.f32.gmra.mxu0 %v2441
        %v2443 = vpop.f32.mrf.mxu0
        %v2444 = vadd.f32 %v2395, %v2443
        %v2445 = vand.u32 %v2208, 4294901760
        %2446 = vmatmul.f32.gmra.mxu0 %v2445
        %v2447 = vpop.f32.mrf.mxu0
        %v2448 = vadd.f32 %v2401, %v2447
        %v2449 = vand.u32 %v2211, 4294901760
        %2450 = vmatmul.f32.gmra.mxu0 %v2449
        %v2451 = vpop.f32.mrf.mxu0
        %v2452 = vadd.f32 %v2407, %v2451
        %2453 = vdwg.mxu0
        %2454 = vmatpush.msra.mxu0 0.0
        %2455 = vmatpush.msra.mxu0 0.0
        %2456 = vmatpush.msra.mxu0 0.0
        %2457 = vmatpush.msra.mxu0 0.0
        %2458 = vmatpush.msra.mxu0 0.0
        %2459 = vmatpush.msra.mxu0 0.0
        %2460 = vmatpush.msra.mxu0 0.0
        %2461 = vmatpush.msra.mxu0 0.0
        %2462 = vmatpush.msra.mxu0 0.0
        %2463 = vmatpush.msra.mxu0 0.0
        %2464 = vmatpush.msra.mxu0 0.0
        %2465 = vmatpush.msra.mxu0 0.0
        %v2466 = vand.u32 %v2172, 4294901760
        %2467 = vmatpush.msra.mxu0 %v2466
        %v2468 = vand.u32 %v2017, 4294901760
        %2469 = vmatpush.msra.mxu0 %v2468
        %v2470 = vand.u32 %v1862, 4294901760
        %2471 = vmatpush.msra.mxu0 %v2470
        %v2472 = vand.u32 %v1707, 4294901760
        %2473 = vmatpush.msra.mxu0 %v2472
        %v2474 = vand.u32 %v2202, 4294901760
        %2475 = vmatmul.f32.gmra.mxu0 %v2474
        %v2476 = vpop.f32.mrf.mxu0
        %v2477 = vadd.f32 %v2440, %v2476
        %v2478 = vand.u32 %v2205, 4294901760
        %2479 = vmatmul.f32.gmra.mxu0 %v2478
        %v2480 = vpop.f32.mrf.mxu0
        %v2481 = vadd.f32 %v2444, %v2480
        %v2482 = vand.u32 %v2208, 4294901760
        %2483 = vmatmul.f32.gmra.mxu0 %v2482
        %v2484 = vpop.f32.mrf.mxu0
        %v2485 = vadd.f32 %v2448, %v2484
        %v2486 = vand.u32 %v2211, 4294901760
        %2487 = vmatmul.f32.gmra.mxu0 %v2486
        %v2488 = vpop.f32.mrf.mxu0
        %v2489 = vadd.f32 %v2452, %v2488
        %2490 = vdwg.mxu0
        %v2491 = vand.u32 2147483647, %v2477
        %vm2492 = vcmp.le.f32.partialorder %v2491, 0.7853982
        %vm2493 = vcmp.lt.s32.totalorder %v2477, 0
        %v2494 = vand.u32 %v2477, 2139095040
        %v2495 = vshrl.u32 %v2494, 23
        %v2496 = vsub.s32 %v2495, 127
        %v2497 = vand.u32 2147483647, %v2477
        %v2498 = vand.u32 %v2497, 8388607
        %v2499 = vor.u32 %v2498, 8388608
        %v2500 = vsub.s32 0, %v2499
        %v2501 = vadd.s32 %v2496, 1
        %vm2502 = vcmp.gt.s32.totalorder %v2501, 0
        %v2503 = vsel %vm2502, %v2501, 0
        %v2504 = vshrl.u32 %v2503, 5
        %v2505 = vand.u32 %v2503, 31
        %v2506 = vsub.s32 32, %v2505
        %v2507 = vshrl.u32 683565275, %v2506
        %v2508 = vshll.u32 683565275, %v2505
        %v2509 = vshrl.u32 2475754826, %v2506
        %v2510 = vor.u32 %v2508, %v2509
        %v2511 = vshll.u32 2475754826, %v2505
        %v2512 = vshrl.u32 2131351028, %v2506
        %v2513 = vor.u32 %v2511, %v2512
        %v2514 = vshll.u32 2131351028, %v2505
        %v2515 = vshrl.u32 2102212464, %v2506
        %v2516 = vor.u32 %v2514, %v2515
        %v2517 = vshll.u32 2102212464, %v2505
        %v2518 = vshrl.u32 920167782, %v2506
        %v2519 = vor.u32 %v2517, %v2518
        %v2520 = vshll.u32 920167782, %v2505
        %v2521 = vshrl.u32 1326507024, %v2506
        %v2522 = vor.u32 %v2520, %v2521
        %vm2523 = vcmp.lt.s32.totalorder %v2504, 1
        %vm2524 = vcmp.lt.s32.totalorder %v2504, 2
        %vm2525 = vcmp.lt.s32.totalorder %v2504, 3
        %vm2526 = vcmp.lt.s32.totalorder %v2504, 4
        %v2527 = vsel %vm2523, %v2507, %v2510
        %v2528 = vsel %vm2526, %v2516, 2102212464
        %v2529 = vsel %vm2525, %v2513, %v2528
        %v2530 = vsel %vm2524, %v2527, %v2529
        %v2531 = vsel %vm2523, %v2510, %v2513
        %v2532 = vsel %vm2526, %v2519, 920167782
        %v2533 = vsel %vm2525, %v2516, %v2532
        %v2534 = vsel %vm2524, %v2531, %v2533
        %v2535 = vsel %vm2523, %v2513, %v2516
        %v2536 = vsel %vm2526, %v2522, 1326507024
        %v2537 = vsel %vm2525, %v2519, %v2536
        %v2538 = vsel %vm2524, %v2535, %v2537
        %v2539 = vshll.u32 %v2499, 8
        %v2540 = vand.u32 %v2539, 65535
        %v2541 = vshrl.u32 %v2539, 16
        %v2542 = vand.u32 %v2538, 65535
        %v2543 = vshrl.u32 %v2538, 16
        %v2544 = vmul.u32 %v2540, %v2542
        %v2545 = vmul.u32 %v2540, %v2543
        %v2546 = vmul.u32 %v2541, %v2542
        %v2547 = vmul.u32 %v2541, %v2543
        %v2548 = vshll.u32 %v2545, 16
        %v2549 = vshrl.u32 %v2545, 16
        %v2550 = vshll.u32 %v2546, 16
        %v2551 = vshrl.u32 %v2546, 16
        %vm2552 = vc.u32 %v2544, %v2548
        %v2553 = vsel %vm2552, 1, 0
        %v2554 = vadd.s32 %v2544, %v2548
        %v2555 = vadd.s32 %v2547, %v2553
        %vm2556 = vc.u32 %v2554, %v2550
        %v2557 = vsel %vm2556, 1, 0
        %v2558 = vadd.s32 %v2554, %v2550
        %v2559 = vadd.s32 %v2555, %v2557
        %v2560 = vadd.s32 %v2559, %v2549
        %v2561 = vadd.s32 %v2560, %v2551
        %v2562 = vand.u32 %v2539, 65535
        %v2563 = vshrl.u32 %v2539, 16
        %v2564 = vand.u32 %v2534, 65535
        %v2565 = vshrl.u32 %v2534, 16
        %v2566 = vmul.u32 %v2562, %v2564
        %v2567 = vmul.u32 %v2562, %v2565
        %v2568 = vmul.u32 %v2563, %v2564
        %v2569 = vmul.u32 %v2563, %v2565
        %v2570 = vshll.u32 %v2567, 16
        %v2571 = vshrl.u32 %v2567, 16
        %v2572 = vshll.u32 %v2568, 16
        %v2573 = vshrl.u32 %v2568, 16
        %vm2574 = vc.u32 %v2566, %v2570
        %v2575 = vsel %vm2574, 1, 0
        %v2576 = vadd.s32 %v2566, %v2570
        %v2577 = vadd.s32 %v2569, %v2575
        %vm2578 = vc.u32 %v2576, %v2572
        %v2579 = vsel %vm2578, 1, 0
        %v2580 = vadd.s32 %v2576, %v2572
        %v2581 = vadd.s32 %v2577, %v2579
        %v2582 = vadd.s32 %v2581, %v2571
        %v2583 = vadd.s32 %v2582, %v2573
        %v2584 = vmul.u32 %v2539, %v2530
        %v2585 = vadd.s32 %v2561, %v2580
        %vm2586 = vc.u32 %v2561, %v2580
        %v2587 = vadd.s32 %v2583, 1
        %v2588 = vsel %vm2586, %v2587, %v2583
        %v2589 = vadd.s32 %v2584, %v2588
        %v2590 = vadd.s32 %v2589, 536870912
        %v2591 = vshrl.u32 %v2590, 30
        %v2592 = vshll.u32 %v2591, 30
        %v2593 = vsub.s32 %v2589, %v2592
        %vm2594 = vcmp.lt.s32.totalorder %v2593, 0
        %v2595 = vsub.s32 0, %v2593
        %v2596 = vsel %vm2594, %v2595, %v2593
        %v2597 = vclz %v2596
        %v2598 = vsub.s32 %v2597, 2
        %vm2599 = vcmp.gt.s32.totalorder 0, %v2598
        %v2600 = vsel %vm2599, 0, %v2598
        %v2601 = vsub.s32 32, %v2600
        %v2602 = vshll.u32 %v2593, %v2600
        %v2603 = vshrl.u32 %v2585, %v2601
        %v2604 = vor.u32 %v2602, %v2603
        %v2605 = vsub.s32 4294967266, %v2600
        %v2606 = vadd.s32 %v2605, 127
        %v2607 = vshll.u32 %v2606, 23
        %v2608 = vor.u32 4788187, %v2607
        %v2609 = vand.u32 2147483647, %v2608
        %v2611 = vcvt.s32.f32 %v2604
        %v2612 = vmul.f32 %v2611, %v2609
        %v2613 = vxor.u32 %v2612, 2147483648
        %v2614 = vsel %vm2493, %v2613, %v2612
        %v2615 = vsub.s32 4, %v2591
        %v2616 = vsel %vm2493, %v2615, %v2591
        %v2617 = vsel %vm2492, %v2477, %v2614
        %v2618 = vsel %vm2492, 0, %v2616
        %v2619 = vmul.f32 %v2617, %v2617
        %v2620 = vmul.f32 %v2619, -0.001358992
        %v2621 = vadd.f32 %v2620, 0.041655596
        %v2622 = vmul.f32 %v2619, %v2621
        %v2623 = vadd.f32 %v2622, -0.4999988
        %v2624 = vmul.f32 %v2619, %v2623
        %v2625 = vadd.f32 1.0, %v2624
        %v2626 = vmul.f32 %v2617, %v2617
        %v2627 = vmul.f32 %v2626, -0.00019511016
        %v2628 = vadd.f32 %v2627, 0.008332121
        %v2629 = vmul.f32 %v2626, %v2628
        %v2630 = vadd.f32 %v2629, -0.16666654
        %v2631 = vmul.f32 %v2626, %v2630
        %v2632 = vadd.f32 %v2631, 1.0
        %v2633 = vmul.f32 %v2632, %v2617
        %vm2634 = vweird.f32 %v2477
        %v2635 = vadd.s32 %v2618, 3
        %v2636 = vand.u32 %v2635, 3
        %vm2637 = vcmp.lt.s32.totalorder %v2636, 2
        %vm2638 = vcmp.eq.s32.totalorder %v2636, 0
        %v2639 = vxor.u32 %v2633, 2147483648
        %v2640 = vsel %vm2638, %v2625, %v2639
        %vm2641 = vcmp.eq.s32.totalorder %v2636, 2
        %v2642 = vxor.u32 %v2625, 2147483648
        %v2643 = vsel %vm2641, %v2642, %v2633
        %v2644 = vsel %vm2637, %v2640, %v2643
        %v2645 = vsel %vm2634, nan, %v2644
        %v2646 = vand.u32 2147483647, %v2481
        %vm2647 = vcmp.le.f32.partialorder %v2646, 0.7853982
        %vm2648 = vcmp.lt.s32.totalorder %v2481, 0
        %v2649 = vand.u32 %v2481, 2139095040
        %v2650 = vshrl.u32 %v2649, 23
        %v2651 = vsub.s32 %v2650, 127
        %v2652 = vand.u32 2147483647, %v2481
        %v2653 = vand.u32 %v2652, 8388607
        %v2654 = vor.u32 %v2653, 8388608
        %v2655 = vsub.s32 0, %v2654
        %v2656 = vadd.s32 %v2651, 1
        %vm2657 = vcmp.gt.s32.totalorder %v2656, 0
        %v2658 = vsel %vm2657, %v2656, 0
        %v2659 = vshrl.u32 %v2658, 5
        %v2660 = vand.u32 %v2658, 31
        %v2661 = vsub.s32 32, %v2660
        %v2662 = vshrl.u32 683565275, %v2661
        %v2663 = vshll.u32 683565275, %v2660
        %v2664 = vshrl.u32 2475754826, %v2661
        %v2665 = vor.u32 %v2663, %v2664
        %v2666 = vshll.u32 2475754826, %v2660
        %v2667 = vshrl.u32 2131351028, %v2661
        %v2668 = vor.u32 %v2666, %v2667
        %v2669 = vshll.u32 2131351028, %v2660
        %v2670 = vshrl.u32 2102212464, %v2661
        %v2671 = vor.u32 %v2669, %v2670
        %v2672 = vshll.u32 2102212464, %v2660
        %v2673 = vshrl.u32 920167782, %v2661
        %v2674 = vor.u32 %v2672, %v2673
        %v2675 = vshll.u32 920167782, %v2660
        %v2676 = vshrl.u32 1326507024, %v2661
        %v2677 = vor.u32 %v2675, %v2676
        %vm2678 = vcmp.lt.s32.totalorder %v2659, 1
        %vm2679 = vcmp.lt.s32.totalorder %v2659, 2
        %vm2680 = vcmp.lt.s32.totalorder %v2659, 3
        %vm2681 = vcmp.lt.s32.totalorder %v2659, 4
        %v2682 = vsel %vm2678, %v2662, %v2665
        %v2683 = vsel %vm2681, %v2671, 2102212464
        %v2684 = vsel %vm2680, %v2668, %v2683
        %v2685 = vsel %vm2679, %v2682, %v2684
        %v2686 = vsel %vm2678, %v2665, %v2668
        %v2687 = vsel %vm2681, %v2674, 920167782
        %v2688 = vsel %vm2680, %v2671, %v2687
        %v2689 = vsel %vm2679, %v2686, %v2688
        %v2690 = vsel %vm2678, %v2668, %v2671
        %v2691 = vsel %vm2681, %v2677, 1326507024
        %v2692 = vsel %vm2680, %v2674, %v2691
        %v2693 = vsel %vm2679, %v2690, %v2692
        %v2694 = vshll.u32 %v2654, 8
        %v2695 = vand.u32 %v2694, 65535
        %v2696 = vshrl.u32 %v2694, 16
        %v2697 = vand.u32 %v2693, 65535
        %v2698 = vshrl.u32 %v2693, 16
        %v2699 = vmul.u32 %v2695, %v2697
        %v2700 = vmul.u32 %v2695, %v2698
        %v2701 = vmul.u32 %v2696, %v2697
        %v2702 = vmul.u32 %v2696, %v2698
        %v2703 = vshll.u32 %v2700, 16
        %v2704 = vshrl.u32 %v2700, 16
        %v2705 = vshll.u32 %v2701, 16
        %v2706 = vshrl.u32 %v2701, 16
        %vm2707 = vc.u32 %v2699, %v2703
        %v2708 = vsel %vm2707, 1, 0
        %v2709 = vadd.s32 %v2699, %v2703
        %v2710 = vadd.s32 %v2702, %v2708
        %vm2711 = vc.u32 %v2709, %v2705
        %v2712 = vsel %vm2711, 1, 0
        %v2713 = vadd.s32 %v2709, %v2705
        %v2714 = vadd.s32 %v2710, %v2712
        %v2715 = vadd.s32 %v2714, %v2704
        %v2716 = vadd.s32 %v2715, %v2706
        %v2717 = vand.u32 %v2694, 65535
        %v2718 = vshrl.u32 %v2694, 16
        %v2719 = vand.u32 %v2689, 65535
        %v2720 = vshrl.u32 %v2689, 16
        %v2721 = vmul.u32 %v2717, %v2719
        %v2722 = vmul.u32 %v2717, %v2720
        %v2723 = vmul.u32 %v2718, %v2719
        %v2724 = vmul.u32 %v2718, %v2720
        %v2725 = vshll.u32 %v2722, 16
        %v2726 = vshrl.u32 %v2722, 16
        %v2727 = vshll.u32 %v2723, 16
        %v2728 = vshrl.u32 %v2723, 16
        %vm2729 = vc.u32 %v2721, %v2725
        %v2730 = vsel %vm2729, 1, 0
        %v2731 = vadd.s32 %v2721, %v2725
        %v2732 = vadd.s32 %v2724, %v2730
        %vm2733 = vc.u32 %v2731, %v2727
        %v2734 = vsel %vm2733, 1, 0
        %v2735 = vadd.s32 %v2731, %v2727
        %v2736 = vadd.s32 %v2732, %v2734
        %v2737 = vadd.s32 %v2736, %v2726
        %v2738 = vadd.s32 %v2737, %v2728
        %v2739 = vmul.u32 %v2694, %v2685
        %v2740 = vadd.s32 %v2716, %v2735
        %vm2741 = vc.u32 %v2716, %v2735
        %v2742 = vadd.s32 %v2738, 1
        %v2743 = vsel %vm2741, %v2742, %v2738
        %v2744 = vadd.s32 %v2739, %v2743
        %v2745 = vadd.s32 %v2744, 536870912
        %v2746 = vshrl.u32 %v2745, 30
        %v2747 = vshll.u32 %v2746, 30
        %v2748 = vsub.s32 %v2744, %v2747
        %vm2749 = vcmp.lt.s32.totalorder %v2748, 0
        %v2750 = vsub.s32 0, %v2748
        %v2751 = vsel %vm2749, %v2750, %v2748
        %v2752 = vclz %v2751
        %v2753 = vsub.s32 %v2752, 2
        %vm2754 = vcmp.gt.s32.totalorder 0, %v2753
        %v2755 = vsel %vm2754, 0, %v2753
        %v2756 = vsub.s32 32, %v2755
        %v2757 = vshll.u32 %v2748, %v2755
        %v2758 = vshrl.u32 %v2740, %v2756
        %v2759 = vor.u32 %v2757, %v2758
        %v2760 = vsub.s32 4294967266, %v2755
        %v2761 = vadd.s32 %v2760, 127
        %v2762 = vshll.u32 %v2761, 23
        %v2763 = vor.u32 4788187, %v2762
        %v2764 = vand.u32 2147483647, %v2763
        %v2766 = vcvt.s32.f32 %v2759
        %v2767 = vmul.f32 %v2766, %v2764
        %v2768 = vxor.u32 %v2767, 2147483648
        %v2769 = vsel %vm2648, %v2768, %v2767
        %v2770 = vsub.s32 4, %v2746
        %v2771 = vsel %vm2648, %v2770, %v2746
        %v2772 = vsel %vm2647, %v2481, %v2769
        %v2773 = vsel %vm2647, 0, %v2771
        %v2774 = vmul.f32 %v2772, %v2772
        %v2775 = vmul.f32 %v2774, -0.001358992
        %v2776 = vadd.f32 %v2775, 0.041655596
        %v2777 = vmul.f32 %v2774, %v2776
        %v2778 = vadd.f32 %v2777, -0.4999988
        %v2779 = vmul.f32 %v2774, %v2778
        %v2780 = vadd.f32 1.0, %v2779
        %v2781 = vmul.f32 %v2772, %v2772
        %v2782 = vmul.f32 %v2781, -0.00019511016
        %v2783 = vadd.f32 %v2782, 0.008332121
        %v2784 = vmul.f32 %v2781, %v2783
        %v2785 = vadd.f32 %v2784, -0.16666654
        %v2786 = vmul.f32 %v2781, %v2785
        %v2787 = vadd.f32 %v2786, 1.0
        %v2788 = vmul.f32 %v2787, %v2772
        %vm2789 = vweird.f32 %v2481
        %v2790 = vadd.s32 %v2773, 3
        %v2791 = vand.u32 %v2790, 3
        %vm2792 = vcmp.lt.s32.totalorder %v2791, 2
        %vm2793 = vcmp.eq.s32.totalorder %v2791, 0
        %v2794 = vxor.u32 %v2788, 2147483648
        %v2795 = vsel %vm2793, %v2780, %v2794
        %vm2796 = vcmp.eq.s32.totalorder %v2791, 2
        %v2797 = vxor.u32 %v2780, 2147483648
        %v2798 = vsel %vm2796, %v2797, %v2788
        %v2799 = vsel %vm2792, %v2795, %v2798
        %v2800 = vsel %vm2789, nan, %v2799
        %v2801 = vand.u32 2147483647, %v2485
        %vm2802 = vcmp.le.f32.partialorder %v2801, 0.7853982
        %vm2803 = vcmp.lt.s32.totalorder %v2485, 0
        %v2804 = vand.u32 %v2485, 2139095040
        %v2805 = vshrl.u32 %v2804, 23
        %v2806 = vsub.s32 %v2805, 127
        %v2807 = vand.u32 2147483647, %v2485
        %v2808 = vand.u32 %v2807, 8388607
        %v2809 = vor.u32 %v2808, 8388608
        %v2810 = vsub.s32 0, %v2809
        %v2811 = vadd.s32 %v2806, 1
        %vm2812 = vcmp.gt.s32.totalorder %v2811, 0
        %v2813 = vsel %vm2812, %v2811, 0
        %v2814 = vshrl.u32 %v2813, 5
        %v2815 = vand.u32 %v2813, 31
        %v2816 = vsub.s32 32, %v2815
        %v2817 = vshrl.u32 683565275, %v2816
        %v2818 = vshll.u32 683565275, %v2815
        %v2819 = vshrl.u32 2475754826, %v2816
        %v2820 = vor.u32 %v2818, %v2819
        %v2821 = vshll.u32 2475754826, %v2815
        %v2822 = vshrl.u32 2131351028, %v2816
        %v2823 = vor.u32 %v2821, %v2822
        %v2824 = vshll.u32 2131351028, %v2815
        %v2825 = vshrl.u32 2102212464, %v2816
        %v2826 = vor.u32 %v2824, %v2825
        %v2827 = vshll.u32 2102212464, %v2815
        %v2828 = vshrl.u32 920167782, %v2816
        %v2829 = vor.u32 %v2827, %v2828
        %v2830 = vshll.u32 920167782, %v2815
        %v2831 = vshrl.u32 1326507024, %v2816
        %v2832 = vor.u32 %v2830, %v2831
        %vm2833 = vcmp.lt.s32.totalorder %v2814, 1
        %vm2834 = vcmp.lt.s32.totalorder %v2814, 2
        %vm2835 = vcmp.lt.s32.totalorder %v2814, 3
        %vm2836 = vcmp.lt.s32.totalorder %v2814, 4
        %v2837 = vsel %vm2833, %v2817, %v2820
        %v2838 = vsel %vm2836, %v2826, 2102212464
        %v2839 = vsel %vm2835, %v2823, %v2838
        %v2840 = vsel %vm2834, %v2837, %v2839
        %v2841 = vsel %vm2833, %v2820, %v2823
        %v2842 = vsel %vm2836, %v2829, 920167782
        %v2843 = vsel %vm2835, %v2826, %v2842
        %v2844 = vsel %vm2834, %v2841, %v2843
        %v2845 = vsel %vm2833, %v2823, %v2826
        %v2846 = vsel %vm2836, %v2832, 1326507024
        %v2847 = vsel %vm2835, %v2829, %v2846
        %v2848 = vsel %vm2834, %v2845, %v2847
        %v2849 = vshll.u32 %v2809, 8
        %v2850 = vand.u32 %v2849, 65535
        %v2851 = vshrl.u32 %v2849, 16
        %v2852 = vand.u32 %v2848, 65535
        %v2853 = vshrl.u32 %v2848, 16
        %v2854 = vmul.u32 %v2850, %v2852
        %v2855 = vmul.u32 %v2850, %v2853
        %v2856 = vmul.u32 %v2851, %v2852
        %v2857 = vmul.u32 %v2851, %v2853
        %v2858 = vshll.u32 %v2855, 16
        %v2859 = vshrl.u32 %v2855, 16
        %v2860 = vshll.u32 %v2856, 16
        %v2861 = vshrl.u32 %v2856, 16
        %vm2862 = vc.u32 %v2854, %v2858
        %v2863 = vsel %vm2862, 1, 0
        %v2864 = vadd.s32 %v2854, %v2858
        %v2865 = vadd.s32 %v2857, %v2863
        %vm2866 = vc.u32 %v2864, %v2860
        %v2867 = vsel %vm2866, 1, 0
        %v2868 = vadd.s32 %v2864, %v2860
        %v2869 = vadd.s32 %v2865, %v2867
        %v2870 = vadd.s32 %v2869, %v2859
        %v2871 = vadd.s32 %v2870, %v2861
        %v2872 = vand.u32 %v2849, 65535
        %v2873 = vshrl.u32 %v2849, 16
        %v2874 = vand.u32 %v2844, 65535
        %v2875 = vshrl.u32 %v2844, 16
        %v2876 = vmul.u32 %v2872, %v2874
        %v2877 = vmul.u32 %v2872, %v2875
        %v2878 = vmul.u32 %v2873, %v2874
        %v2879 = vmul.u32 %v2873, %v2875
        %v2880 = vshll.u32 %v2877, 16
        %v2881 = vshrl.u32 %v2877, 16
        %v2882 = vshll.u32 %v2878, 16
        %v2883 = vshrl.u32 %v2878, 16
        %vm2884 = vc.u32 %v2876, %v2880
        %v2885 = vsel %vm2884, 1, 0
        %v2886 = vadd.s32 %v2876, %v2880
        %v2887 = vadd.s32 %v2879, %v2885
        %vm2888 = vc.u32 %v2886, %v2882
        %v2889 = vsel %vm2888, 1, 0
        %v2890 = vadd.s32 %v2886, %v2882
        %v2891 = vadd.s32 %v2887, %v2889
        %v2892 = vadd.s32 %v2891, %v2881
        %v2893 = vadd.s32 %v2892, %v2883
        %v2894 = vmul.u32 %v2849, %v2840
        %v2895 = vadd.s32 %v2871, %v2890
        %vm2896 = vc.u32 %v2871, %v2890
        %v2897 = vadd.s32 %v2893, 1
        %v2898 = vsel %vm2896, %v2897, %v2893
        %v2899 = vadd.s32 %v2894, %v2898
        %v2900 = vadd.s32 %v2899, 536870912
        %v2901 = vshrl.u32 %v2900, 30
        %v2902 = vshll.u32 %v2901, 30
        %v2903 = vsub.s32 %v2899, %v2902
        %vm2904 = vcmp.lt.s32.totalorder %v2903, 0
        %v2905 = vsub.s32 0, %v2903
        %v2906 = vsel %vm2904, %v2905, %v2903
        %v2907 = vclz %v2906
        %v2908 = vsub.s32 %v2907, 2
        %vm2909 = vcmp.gt.s32.totalorder 0, %v2908
        %v2910 = vsel %vm2909, 0, %v2908
        %v2911 = vsub.s32 32, %v2910
        %v2912 = vshll.u32 %v2903, %v2910
        %v2913 = vshrl.u32 %v2895, %v2911
        %v2914 = vor.u32 %v2912, %v2913
        %v2915 = vsub.s32 4294967266, %v2910
        %v2916 = vadd.s32 %v2915, 127
        %v2917 = vshll.u32 %v2916, 23
        %v2918 = vor.u32 4788187, %v2917
        %v2919 = vand.u32 2147483647, %v2918
        %v2921 = vcvt.s32.f32 %v2914
        %v2922 = vmul.f32 %v2921, %v2919
        %v2923 = vxor.u32 %v2922, 2147483648
        %v2924 = vsel %vm2803, %v2923, %v2922
        %v2925 = vsub.s32 4, %v2901
        %v2926 = vsel %vm2803, %v2925, %v2901
        %v2927 = vsel %vm2802, %v2485, %v2924
        %v2928 = vsel %vm2802, 0, %v2926
        %v2929 = vmul.f32 %v2927, %v2927
        %v2930 = vmul.f32 %v2929, -0.001358992
        %v2931 = vadd.f32 %v2930, 0.041655596
        %v2932 = vmul.f32 %v2929, %v2931
        %v2933 = vadd.f32 %v2932, -0.4999988
        %v2934 = vmul.f32 %v2929, %v2933
        %v2935 = vadd.f32 1.0, %v2934
        %v2936 = vmul.f32 %v2927, %v2927
        %v2937 = vmul.f32 %v2936, -0.00019511016
        %v2938 = vadd.f32 %v2937, 0.008332121
        %v2939 = vmul.f32 %v2936, %v2938
        %v2940 = vadd.f32 %v2939, -0.16666654
        %v2941 = vmul.f32 %v2936, %v2940
        %v2942 = vadd.f32 %v2941, 1.0
        %v2943 = vmul.f32 %v2942, %v2927
        %vm2944 = vweird.f32 %v2485
        %v2945 = vadd.s32 %v2928, 3
        %v2946 = vand.u32 %v2945, 3
        %vm2947 = vcmp.lt.s32.totalorder %v2946, 2
        %vm2948 = vcmp.eq.s32.totalorder %v2946, 0
        %v2949 = vxor.u32 %v2943, 2147483648
        %v2950 = vsel %vm2948, %v2935, %v2949
        %vm2951 = vcmp.eq.s32.totalorder %v2946, 2
        %v2952 = vxor.u32 %v2935, 2147483648
        %v2953 = vsel %vm2951, %v2952, %v2943
        %v2954 = vsel %vm2947, %v2950, %v2953
        %v2955 = vsel %vm2944, nan, %v2954
        %v2956 = vand.u32 2147483647, %v2489
        %vm2957 = vcmp.le.f32.partialorder %v2956, 0.7853982
        %vm2958 = vcmp.lt.s32.totalorder %v2489, 0
        %v2959 = vand.u32 %v2489, 2139095040
        %v2960 = vshrl.u32 %v2959, 23
        %v2961 = vsub.s32 %v2960, 127
        %v2962 = vand.u32 2147483647, %v2489
        %v2963 = vand.u32 %v2962, 8388607
        %v2964 = vor.u32 %v2963, 8388608
        %v2965 = vsub.s32 0, %v2964
        %v2966 = vadd.s32 %v2961, 1
        %vm2967 = vcmp.gt.s32.totalorder %v2966, 0
        %v2968 = vsel %vm2967, %v2966, 0
        %v2969 = vshrl.u32 %v2968, 5
        %v2970 = vand.u32 %v2968, 31
        %v2971 = vsub.s32 32, %v2970
        %v2972 = vshrl.u32 683565275, %v2971
        %v2973 = vshll.u32 683565275, %v2970
        %v2974 = vshrl.u32 2475754826, %v2971
        %v2975 = vor.u32 %v2973, %v2974
        %v2976 = vshll.u32 2475754826, %v2970
        %v2977 = vshrl.u32 2131351028, %v2971
        %v2978 = vor.u32 %v2976, %v2977
        %v2979 = vshll.u32 2131351028, %v2970
        %v2980 = vshrl.u32 2102212464, %v2971
        %v2981 = vor.u32 %v2979, %v2980
        %v2982 = vshll.u32 2102212464, %v2970
        %v2983 = vshrl.u32 920167782, %v2971
        %v2984 = vor.u32 %v2982, %v2983
        %v2985 = vshll.u32 920167782, %v2970
        %v2986 = vshrl.u32 1326507024, %v2971
        %v2987 = vor.u32 %v2985, %v2986
        %vm2988 = vcmp.lt.s32.totalorder %v2969, 1
        %vm2989 = vcmp.lt.s32.totalorder %v2969, 2
        %vm2990 = vcmp.lt.s32.totalorder %v2969, 3
        %vm2991 = vcmp.lt.s32.totalorder %v2969, 4
        %v2992 = vsel %vm2988, %v2972, %v2975
        %v2993 = vsel %vm2991, %v2981, 2102212464
        %v2994 = vsel %vm2990, %v2978, %v2993
        %v2995 = vsel %vm2989, %v2992, %v2994
        %v2996 = vsel %vm2988, %v2975, %v2978
        %v2997 = vsel %vm2991, %v2984, 920167782
        %v2998 = vsel %vm2990, %v2981, %v2997
        %v2999 = vsel %vm2989, %v2996, %v2998
        %v3000 = vsel %vm2988, %v2978, %v2981
        %v3001 = vsel %vm2991, %v2987, 1326507024
        %v3002 = vsel %vm2990, %v2984, %v3001
        %v3003 = vsel %vm2989, %v3000, %v3002
        %v3004 = vshll.u32 %v2964, 8
        %v3005 = vand.u32 %v3004, 65535
        %v3006 = vshrl.u32 %v3004, 16
        %v3007 = vand.u32 %v3003, 65535
        %v3008 = vshrl.u32 %v3003, 16
        %v3009 = vmul.u32 %v3005, %v3007
        %v3010 = vmul.u32 %v3005, %v3008
        %v3011 = vmul.u32 %v3006, %v3007
        %v3012 = vmul.u32 %v3006, %v3008
        %v3013 = vshll.u32 %v3010, 16
        %v3014 = vshrl.u32 %v3010, 16
        %v3015 = vshll.u32 %v3011, 16
        %v3016 = vshrl.u32 %v3011, 16
        %vm3017 = vc.u32 %v3009, %v3013
        %v3018 = vsel %vm3017, 1, 0
        %v3019 = vadd.s32 %v3009, %v3013
        %v3020 = vadd.s32 %v3012, %v3018
        %vm3021 = vc.u32 %v3019, %v3015
        %v3022 = vsel %vm3021, 1, 0
        %v3023 = vadd.s32 %v3019, %v3015
        %v3024 = vadd.s32 %v3020, %v3022
        %v3025 = vadd.s32 %v3024, %v3014
        %v3026 = vadd.s32 %v3025, %v3016
        %v3027 = vand.u32 %v3004, 65535
        %v3028 = vshrl.u32 %v3004, 16
        %v3029 = vand.u32 %v2999, 65535
        %v3030 = vshrl.u32 %v2999, 16
        %v3031 = vmul.u32 %v3027, %v3029
        %v3032 = vmul.u32 %v3027, %v3030
        %v3033 = vmul.u32 %v3028, %v3029
        %v3034 = vmul.u32 %v3028, %v3030
        %v3035 = vshll.u32 %v3032, 16
        %v3036 = vshrl.u32 %v3032, 16
        %v3037 = vshll.u32 %v3033, 16
        %v3038 = vshrl.u32 %v3033, 16
        %vm3039 = vc.u32 %v3031, %v3035
        %v3040 = vsel %vm3039, 1, 0
        %v3041 = vadd.s32 %v3031, %v3035
        %v3042 = vadd.s32 %v3034, %v3040
        %vm3043 = vc.u32 %v3041, %v3037
        %v3044 = vsel %vm3043, 1, 0
        %v3045 = vadd.s32 %v3041, %v3037
        %v3046 = vadd.s32 %v3042, %v3044
        %v3047 = vadd.s32 %v3046, %v3036
        %v3048 = vadd.s32 %v3047, %v3038
        %v3049 = vmul.u32 %v3004, %v2995
        %v3050 = vadd.s32 %v3026, %v3045
        %vm3051 = vc.u32 %v3026, %v3045
        %v3052 = vadd.s32 %v3048, 1
        %v3053 = vsel %vm3051, %v3052, %v3048
        %v3054 = vadd.s32 %v3049, %v3053
        %v3055 = vadd.s32 %v3054, 536870912
        %v3056 = vshrl.u32 %v3055, 30
        %v3057 = vshll.u32 %v3056, 30
        %v3058 = vsub.s32 %v3054, %v3057
        %vm3059 = vcmp.lt.s32.totalorder %v3058, 0
        %v3060 = vsub.s32 0, %v3058
        %v3061 = vsel %vm3059, %v3060, %v3058
        %v3062 = vclz %v3061
        %v3063 = vsub.s32 %v3062, 2
        %vm3064 = vcmp.gt.s32.totalorder 0, %v3063
        %v3065 = vsel %vm3064, 0, %v3063
        %v3066 = vsub.s32 32, %v3065
        %v3067 = vshll.u32 %v3058, %v3065
        %v3068 = vshrl.u32 %v3050, %v3066
        %v3069 = vor.u32 %v3067, %v3068
        %v3070 = vsub.s32 4294967266, %v3065
        %v3071 = vadd.s32 %v3070, 127
        %v3072 = vshll.u32 %v3071, 23
        %v3073 = vor.u32 4788187, %v3072
        %v3074 = vand.u32 2147483647, %v3073
        %v3076 = vcvt.s32.f32 %v3069
        %v3077 = vmul.f32 %v3076, %v3074
        %v3078 = vxor.u32 %v3077, 2147483648
        %v3079 = vsel %vm2958, %v3078, %v3077
        %v3080 = vsub.s32 4, %v3056
        %v3081 = vsel %vm2958, %v3080, %v3056
        %v3082 = vsel %vm2957, %v2489, %v3079
        %v3083 = vsel %vm2957, 0, %v3081
        %v3084 = vmul.f32 %v3082, %v3082
        %v3085 = vmul.f32 %v3084, -0.001358992
        %v3086 = vadd.f32 %v3085, 0.041655596
        %v3087 = vmul.f32 %v3084, %v3086
        %v3088 = vadd.f32 %v3087, -0.4999988
        %v3089 = vmul.f32 %v3084, %v3088
        %v3090 = vadd.f32 1.0, %v3089
        %v3091 = vmul.f32 %v3082, %v3082
        %v3092 = vmul.f32 %v3091, -0.00019511016
        %v3093 = vadd.f32 %v3092, 0.008332121
        %v3094 = vmul.f32 %v3091, %v3093
        %v3095 = vadd.f32 %v3094, -0.16666654
        %v3096 = vmul.f32 %v3091, %v3095
        %v3097 = vadd.f32 %v3096, 1.0
        %v3098 = vmul.f32 %v3097, %v3082
        %vm3099 = vweird.f32 %v2489
        %v3100 = vadd.s32 %v3083, 3
        %v3101 = vand.u32 %v3100, 3
        %vm3102 = vcmp.lt.s32.totalorder %v3101, 2
        %vm3103 = vcmp.eq.s32.totalorder %v3101, 0
        %v3104 = vxor.u32 %v3098, 2147483648
        %v3105 = vsel %vm3103, %v3090, %v3104
        %vm3106 = vcmp.eq.s32.totalorder %v3101, 2
        %v3107 = vxor.u32 %v3090, 2147483648
        %v3108 = vsel %vm3106, %v3107, %v3098
        %v3109 = vsel %vm3102, %v3105, %v3108
        %v3110 = vsel %vm3099, nan, %v3109
        %v3111 = vld [vmem:[%s7] sm:$0x1]
        %v3112 = vld [vmem:[#allocation2] sm:$0x1]
        %3114 = vset.pattern.permute.xlu0 0
        %3115 = vperm.xlu0 %3114, %v3112
        %v3116 = vpop.permute.xlu0 %3115
        %v3118 = vperm.slane %v3116, 0
        %v3120 = vsel %vm1262, %v3111, 0
        %3122 = vmatpush.msra.mxu0 0.0
        %3123 = vmatpush.msra.mxu0 0.0
        %3124 = vmatpush.msra.mxu0 0.0
        %3125 = vmatpush.msra.mxu0 0.0
        %3126 = vmatpush.msra.mxu0 0.0
        %3127 = vmatpush.msra.mxu0 0.0
        %3128 = vmatpush.msra.mxu0 0.0
        %3129 = vmatpush.msra.mxu0 0.0
        %3130 = vmatpush.msra.mxu0 0.0
        %3131 = vmatpush.msra.mxu0 0.0
        %3132 = vmatpush.msra.mxu0 0.0
        %3133 = vmatpush.msra.mxu0 0.0
        %v3134 = vand.u32 %v3110, 4294901760
        %3135 = vmatpush.msra.mxu0 %v3134
        %v3136 = vand.u32 %v2955, 4294901760
        %3137 = vmatpush.msra.mxu0 %v3136
        %v3138 = vand.u32 %v2800, 4294901760
        %3139 = vmatpush.msra.mxu0 %v3138
        %v3140 = vand.u32 %v2645, 4294901760
        %3141 = vmatpush.msra.mxu0 %v3140
        %v3142 = vand.u32 %v3120, 4294901760
        %v3143 = vsub.f32 %v3120, %v3142
        %v3144 = vand.u32 %v3143, 4294901760
        %v3145 = vsub.f32 %v3143, %v3144
        %v3146 = vand.u32 %v3145, 4294901760
        %3147 = vmatmul.f32.gmra.mxu0 %v3146
        %v3148 = vpop.f32.mrf.mxu0
        %v3149 = vadd.f32 %v3118, %v3148
        %3150 = vdwg.mxu0
        %3151 = vmatpush.msra.mxu0 0.0
        %3152 = vmatpush.msra.mxu0 0.0
        %3153 = vmatpush.msra.mxu0 0.0
        %3154 = vmatpush.msra.mxu0 0.0
        %3155 = vmatpush.msra.mxu0 0.0
        %3156 = vmatpush.msra.mxu0 0.0
        %3157 = vmatpush.msra.mxu0 0.0
        %3158 = vmatpush.msra.mxu0 0.0
        %3159 = vmatpush.msra.mxu0 0.0
        %3160 = vmatpush.msra.mxu0 0.0
        %3161 = vmatpush.msra.mxu0 0.0
        %3162 = vmatpush.msra.mxu0 0.0
        %v3163 = vand.u32 %v3110, 4294901760
        %v3164 = vsub.f32 %v3110, %v3163
        %v3165 = vand.u32 %v3164, 4294901760
        %v3166 = vsub.f32 %v3164, %v3165
        %v3167 = vand.u32 %v3166, 4294901760
        %3168 = vmatpush.msra.mxu0 %v3167
        %v3169 = vand.u32 %v2955, 4294901760
        %v3170 = vsub.f32 %v2955, %v3169
        %v3171 = vand.u32 %v3170, 4294901760
        %v3172 = vsub.f32 %v3170, %v3171
        %v3173 = vand.u32 %v3172, 4294901760
        %3174 = vmatpush.msra.mxu0 %v3173
        %v3175 = vand.u32 %v2800, 4294901760
        %v3176 = vsub.f32 %v2800, %v3175
        %v3177 = vand.u32 %v3176, 4294901760
        %v3178 = vsub.f32 %v3176, %v3177
        %v3179 = vand.u32 %v3178, 4294901760
        %3180 = vmatpush.msra.mxu0 %v3179
        %v3181 = vand.u32 %v2645, 4294901760
        %v3182 = vsub.f32 %v2645, %v3181
        %v3183 = vand.u32 %v3182, 4294901760
        %v3184 = vsub.f32 %v3182, %v3183
        %v3185 = vand.u32 %v3184, 4294901760
        %3186 = vmatpush.msra.mxu0 %v3185
        %v3187 = vand.u32 %v3120, 4294901760
        %3188 = vmatmul.f32.gmra.mxu0 %v3187
        %v3189 = vpop.f32.mrf.mxu0
        %v3190 = vadd.f32 %v3149, %v3189
        %3191 = vdwg.mxu0
        %3192 = vmatpush.msra.mxu0 0.0
        %3193 = vmatpush.msra.mxu0 0.0
        %3194 = vmatpush.msra.mxu0 0.0
        %3195 = vmatpush.msra.mxu0 0.0
        %3196 = vmatpush.msra.mxu0 0.0
        %3197 = vmatpush.msra.mxu0 0.0
        %3198 = vmatpush.msra.mxu0 0.0
        %3199 = vmatpush.msra.mxu0 0.0
        %3200 = vmatpush.msra.mxu0 0.0
        %3201 = vmatpush.msra.mxu0 0.0
        %3202 = vmatpush.msra.mxu0 0.0
        %3203 = vmatpush.msra.mxu0 0.0
        %v3204 = vand.u32 %v3110, 4294901760
        %v3205 = vsub.f32 %v3110, %v3204
        %3206 = vmatpush.msra.mxu0 %v3205
        %v3207 = vand.u32 %v2955, 4294901760
        %v3208 = vsub.f32 %v2955, %v3207
        %3209 = vmatpush.msra.mxu0 %v3208
        %v3210 = vand.u32 %v2800, 4294901760
        %v3211 = vsub.f32 %v2800, %v3210
        %3212 = vmatpush.msra.mxu0 %v3211
        %v3213 = vand.u32 %v2645, 4294901760
        %v3214 = vsub.f32 %v2645, %v3213
        %3215 = vmatpush.msra.mxu0 %v3214
        %v3216 = vand.u32 %v3120, 4294901760
        %v3217 = vsub.f32 %v3120, %v3216
        %3218 = vmatmul.f32.gmra.mxu0 %v3217
        %v3219 = vpop.f32.mrf.mxu0
        %v3220 = vadd.f32 %v3190, %v3219
        %3221 = vdwg.mxu0
        %3222 = vmatpush.msra.mxu0 0.0
        %3223 = vmatpush.msra.mxu0 0.0
        %3224 = vmatpush.msra.mxu0 0.0
        %3225 = vmatpush.msra.mxu0 0.0
        %3226 = vmatpush.msra.mxu0 0.0
        %3227 = vmatpush.msra.mxu0 0.0
        %3228 = vmatpush.msra.mxu0 0.0
        %3229 = vmatpush.msra.mxu0 0.0
        %3230 = vmatpush.msra.mxu0 0.0
        %3231 = vmatpush.msra.mxu0 0.0
        %3232 = vmatpush.msra.mxu0 0.0
        %3233 = vmatpush.msra.mxu0 0.0
        %v3234 = vand.u32 %v3110, 4294901760
        %3235 = vmatpush.msra.mxu0 %v3234
        %v3236 = vand.u32 %v2955, 4294901760
        %3237 = vmatpush.msra.mxu0 %v3236
        %v3238 = vand.u32 %v2800, 4294901760
        %3239 = vmatpush.msra.mxu0 %v3238
        %v3240 = vand.u32 %v2645, 4294901760
        %3241 = vmatpush.msra.mxu0 %v3240
        %v3242 = vand.u32 %v3120, 4294901760
        %v3243 = vsub.f32 %v3120, %v3242
        %v3244 = vand.u32 %v3243, 4294901760
        %3245 = vmatmul.f32.gmra.mxu0 %v3244
        %v3246 = vpop.f32.mrf.mxu0
        %v3247 = vadd.f32 %v3220, %v3246
        %3248 = vdwg.mxu0
        %3249 = vmatpush.msra.mxu0 0.0
        %3250 = vmatpush.msra.mxu0 0.0
        %3251 = vmatpush.msra.mxu0 0.0
        %3252 = vmatpush.msra.mxu0 0.0
        %3253 = vmatpush.msra.mxu0 0.0
        %3254 = vmatpush.msra.mxu0 0.0
        %3255 = vmatpush.msra.mxu0 0.0
        %3256 = vmatpush.msra.mxu0 0.0
        %3257 = vmatpush.msra.mxu0 0.0
        %3258 = vmatpush.msra.mxu0 0.0
        %3259 = vmatpush.msra.mxu0 0.0
        %3260 = vmatpush.msra.mxu0 0.0
        %v3261 = vand.u32 %v3110, 4294901760
        %v3262 = vsub.f32 %v3110, %v3261
        %v3263 = vand.u32 %v3262, 4294901760
        %3264 = vmatpush.msra.mxu0 %v3263
        %v3265 = vand.u32 %v2955, 4294901760
        %v3266 = vsub.f32 %v2955, %v3265
        %v3267 = vand.u32 %v3266, 4294901760
        %3268 = vmatpush.msra.mxu0 %v3267
        %v3269 = vand.u32 %v2800, 4294901760
        %v3270 = vsub.f32 %v2800, %v3269
        %v3271 = vand.u32 %v3270, 4294901760
        %3272 = vmatpush.msra.mxu0 %v3271
        %v3273 = vand.u32 %v2645, 4294901760
        %v3274 = vsub.f32 %v2645, %v3273
        %v3275 = vand.u32 %v3274, 4294901760
        %3276 = vmatpush.msra.mxu0 %v3275
        %v3277 = vand.u32 %v3120, 4294901760
        %3278 = vmatmul.f32.gmra.mxu0 %v3277
        %v3279 = vpop.f32.mrf.mxu0
        %v3280 = vadd.f32 %v3247, %v3279
        %3281 = vdwg.mxu0
        %3282 = vmatpush.msra.mxu0 0.0
        %3283 = vmatpush.msra.mxu0 0.0
        %3284 = vmatpush.msra.mxu0 0.0
        %3285 = vmatpush.msra.mxu0 0.0
        %3286 = vmatpush.msra.mxu0 0.0
        %3287 = vmatpush.msra.mxu0 0.0
        %3288 = vmatpush.msra.mxu0 0.0
        %3289 = vmatpush.msra.mxu0 0.0
        %3290 = vmatpush.msra.mxu0 0.0
        %3291 = vmatpush.msra.mxu0 0.0
        %3292 = vmatpush.msra.mxu0 0.0
        %3293 = vmatpush.msra.mxu0 0.0
        %v3294 = vand.u32 %v3110, 4294901760
        %3295 = vmatpush.msra.mxu0 %v3294
        %v3296 = vand.u32 %v2955, 4294901760
        %3297 = vmatpush.msra.mxu0 %v3296
        %v3298 = vand.u32 %v2800, 4294901760
        %3299 = vmatpush.msra.mxu0 %v3298
        %v3300 = vand.u32 %v2645, 4294901760
        %3301 = vmatpush.msra.mxu0 %v3300
        %v3302 = vand.u32 %v3120, 4294901760
        %3303 = vmatmul.f32.gmra.mxu0 %v3302
        %v3304 = vpop.f32.mrf.mxu0
        %v3305 = vadd.f32 %v3280, %v3304
        %3306 = vdwg.mxu0
        %3307 = vst [vmem:[%s324] sm:$0x1] %v3305
        %s3308 = sand.u32 %s227, 1
        %s3309 = scalar_lea.sflag [#allocation4], %s3308
        %s3310 = sand.u32 %s227, 1
        %s3311 = scalar_lea.vmem [#allocation3], %s3310
        // Predicated region
        $region57: #{tpu_custom_call.1} parent=55 // pred_check
          %p3312 = pneg %p237
        $region58: #{tpu_custom_call.1} parent=55 // pred_check_branch
          %3314 = sbr.rel (%p3312) target = $region60
        $region59: #{tpu_custom_call.1} parent=55 // pred_region
          %3316 = vsyncadd %s3309, 0
          %s3317 = scalar_lea.hbm %s9, %s25
          %s3319 = sshll.u32 %s3311, 4
          %s3320 = int_to_ptr.vmem [resolvable:$true] %s3319
          %s3321 = sshll.u32 %s3317, 4
          %s3322 = int_to_ptr.hbm [resolvable:$true] %s3321
          %3324 = dma.vmem_to_hbm [thread:$0]  %s3320, 16, %s3322, %s3309
        $region60: #{tpu_custom_call.1} parent=55 // pred_fallthru
          _
      $region56: #{tpu_custom_call.1} parent=5 // pred_fallthru
        _
      %p3325 = scmp.le.s32.totalorder 2, %s20
      // Predicated region
      $region61: #{tpu_custom_call.1} parent=5 // pred_check
        %p3326 = pneg %p3325
      $region62: #{tpu_custom_call.1} parent=5 // pred_check_branch
        %3328 = sbr.rel (%p3326) target = $region64
      $region63: #{tpu_custom_call.1} parent=5 // pred_region
        %s3329 = ssub.s32 %s20, 2
        // Predicated region
        $region65: #{tpu_custom_call.1} parent=63 // pred_check
          %p3330 = pneg %p243
        $region66: #{tpu_custom_call.1} parent=63 // pred_check_branch
          %3332 = sbr.rel (%p3330) target = $region68
        $region67: #{tpu_custom_call.1} parent=63 // pred_region
          %s3333 = sand.u32 %s228, 1
          %s3334 = scalar_lea.sflag [#allocation4], %s3333
          %s3335 = sand.u32 %s228, 1
          %s3336 = scalar_lea.vmem [#allocation3], %s3335
          %3338 = dma.done %s3334, 16
        $region68: #{tpu_custom_call.1} parent=63 // pred_fallthru
          _
      $region64: #{tpu_custom_call.1} parent=5 // pred_fallthru
        _
    $region6: #{tpu_custom_call.1} parent=1 // loop_footer
      %s24 = sadd.s32 1, %s20
    $region7: #{tpu_custom_call.1} parent=1 // loop_footer_branch
      %19 = sbr.rel target = $region3
    $region8: #{tpu_custom_call.1} parent=1 // loop_exit
      _
    %3339 = vsyncpa [#allocation4], 1
    %s3340 = scalar_lea.sflag [#allocation4], 1
    %3341 = vsyncpa %s3340, 1

</llo_original>
